<compile_context>
chip_gen: v6e
topology: v6e:2x2x1
jax: 0.10.0
libtpu: 0.0.40
codegen_flags: <defaults>
</compile_context>

<pallas_src>
import functools

import jax
import jax.numpy as jnp
from jax.experimental import pallas as pl
from jax.experimental.pallas import tpu as pltpu

EPS = 1e-5


def _mixer_kernel(x_ref, rc_ref, w3_ref, w7_ref, w1_ref, sc_ref, bi_ref,
                  o_ref, *, h, w):
    """Fused MixerDecoder forward for one batch element.

    x_ref : (1, C, H*W)  input image (channels on sublanes, HW on lanes)
    rc_ref: (2, 1, H*W)  int32 row / col index of every flattened position
    w3_ref: (9, C, C)    3x3 conv weights, one (Cout, Cin) matrix per tap
    w7_ref: (49, C, 1)   7x7 depthwise weights, one (C, 1) column per tap
    w1_ref: (C, C)       1x1 conv weights
    sc_ref: (3, C, 1)    folded (conv-bias + BN) per-channel scales, per stage
    bi_ref: (3, C, 1)    folded (conv-bias + BN) per-channel biases, per stage
    o_ref : (1, C, H*W)  output
    """
    hw = h * w
    c = x_ref.shape[1]

    x = x_ref[0].astype(jnp.float32)      # (C, HW)
    row = rc_ref[0]                       # (1, HW) int32
    col = rc_ref[1]                       # (1, HW) int32

    def shifted(v, dh, dw):
        # shifted[ci, r*w + q] = v[ci, (r+dh)*w + (q+dw)]  (0 outside the image)
        s = dh * w + dw
        r = v if s == 0 else pltpu.roll(v, shift=(-s) % hw, axis=1)
        valid = ((row + dh >= 0) & (row + dh < h) &
                 (col + dw >= 0) & (col + dw < w))
        return jnp.where(valid, r, 0.0)

    # ---- stage 1: LocalMixer = dense 3x3 conv + BN + ReLU (MXU) -------------
    acc = jnp.zeros((c, hw), jnp.float32)
    tap = 0
    for dh in (-1, 0, 1):
        for dw in (-1, 0, 1):
            acc = acc + jnp.dot(w3_ref[tap], shifted(x, dh, dw),
                                preferred_element_type=jnp.float32)
            tap += 1
    y1 = jnp.maximum(acc * sc_ref[0] + bi_ref[0], 0.0)

    # ---- stage 2: GlobalMixer = 7x7 depthwise conv + BN + ReLU + residual ---
    acc = jnp.zeros((c, hw), jnp.float32)
    tap = 0
    for dh in range(-3, 4):
        for dw in range(-3, 4):
            acc = acc + w7_ref[tap] * shifted(y1, dh, dw)
            tap += 1
    y2 = jnp.maximum(acc * sc_ref[1] + bi_ref[1], 0.0) + y1

    # ---- stage 3: 1x1 conv + BN + ReLU (MXU), then outer residual -----------
    y3 = jnp.dot(w1_ref[...], y2, preferred_element_type=jnp.float32)
    y3 = jnp.maximum(y3 * sc_ref[2] + bi_ref[2], 0.0)

    o_ref[0] = (y3 + x).astype(o_ref.dtype)


def _fold_bn(conv_bias, bn_gamma, bn_beta, bn_mean, bn_var):
    """Fold conv bias + inference-mode BatchNorm into per-channel scale/bias."""
    scale = bn_gamma / jnp.sqrt(bn_var + EPS)
    bias = (conv_bias - bn_mean) * scale + bn_beta
    return scale.astype(jnp.float32), bias.astype(jnp.float32)


@jax.jit
def mixer_decoder_forward(x, params):
    """x: (B, C, H, W) NCHW.  params: dict of conv/BN parameters.  Returns NCHW."""
    b, c, h, w = x.shape
    hw = h * w

    # ---- tiny host-side parameter repacking / folding (O(C) work) ----------
    # 3x3 conv -> one (Cout, Cin) matrix per spatial tap (row-major taps)
    w3 = jnp.transpose(params["w3"].reshape(c, c, 9), (2, 0, 1)).astype(jnp.float32)
    # 7x7 depthwise conv -> one (C, 1) column per spatial tap
    w7 = jnp.transpose(params["w7"].reshape(c, 49), (1, 0))[:, :, None].astype(jnp.float32)
    # 1x1 conv -> (Cout, Cin)
    w1 = params["w1"].reshape(c, c).astype(jnp.float32)

    s1, b1 = _fold_bn(params["b3"], params["bn1_g"], params["bn1_b"],
                      params["bn1_m"], params["bn1_v"])
    s2, b2 = _fold_bn(params["b7"], params["bn2_g"], params["bn2_b"],
                      params["bn2_m"], params["bn2_v"])
    s3, b3 = _fold_bn(params["b1"], params["bn3_g"], params["bn3_b"],
                      params["bn3_m"], params["bn3_v"])
    scales = jnp.stack([s1, s2, s3]).reshape(3, c, 1)
    biases = jnp.stack([b1, b2, b3]).reshape(3, c, 1)

    # row / col index of every flattened HW position (for boundary masks)
    pos = jnp.arange(hw, dtype=jnp.int32)
    rowcol = jnp.stack([pos // w, pos % w]).reshape(2, 1, hw)

    # Free reshape: lane axis = H*W (lane-dense); no transpose, no pad copy.
    x3 = x.reshape(b, c, hw)

    kernel = functools.partial(_mixer_kernel, h=h, w=w)
    const3 = lambda i: (0, 0, 0)
    out = pl.pallas_call(
        kernel,
        out_shape=jax.ShapeDtypeStruct((b, c, hw), x.dtype),
        grid_spec=pltpu.PrefetchScalarGridSpec(
            num_scalar_prefetch=0,
            grid=(b,),
            in_specs=[
                pl.BlockSpec((1, c, hw), lambda i: (i, 0, 0)),   # x
                pl.BlockSpec((2, 1, hw), const3),                # row/col iota
                pl.BlockSpec((9, c, c), const3),                 # 3x3 weights
                pl.BlockSpec((49, c, 1), const3),                # 7x7 dw weights
                pl.BlockSpec((c, c), lambda i: (0, 0)),          # 1x1 weights
                pl.BlockSpec((3, c, 1), const3),                 # folded scales
                pl.BlockSpec((3, c, 1), const3),                 # folded biases
            ],
            out_specs=pl.BlockSpec((1, c, hw), lambda i: (i, 0, 0)),
        ),
        compiler_params=pltpu.CompilerParams(
            dimension_semantics=("parallel",),
            vmem_limit_bytes=32 * 1024 * 1024,
        ),
    )(x3, rowcol, w3, w7, w1, scales, biases)

    return out.reshape(b, c, h, w)


def _reference_forward(x, params):
    """Plain-JAX reference with identical (inference-mode BN) semantics."""
    hp = jax.lax.Precision.HIGHEST

    def conv(t, wgt, bias, pad, groups=1):
        y = jax.lax.conv_general_dilated(
            t, wgt, window_strides=(1, 1),
            padding=[(pad, pad), (pad, pad)],
            dimension_numbers=("NCHW", "OIHW", "NCHW"),
            feature_group_count=groups, precision=hp)
        return y + bias[None, :, None, None]

    def bn(t, g, be, m, v):
        inv = g / jnp.sqrt(v + EPS)
        return (t - m[None, :, None, None]) * inv[None, :, None, None] \
            + be[None, :, None, None]

    relu = lambda t: jnp.maximum(t, 0.0)
    c = x.shape[1]

    y1 = relu(bn(conv(x, params["w3"], params["b3"], 1),
                 params["bn1_g"], params["bn1_b"], params["bn1_m"], params["bn1_v"]))
    y2 = relu(bn(conv(y1, params["w7"], params["b7"], 3, groups=c),
                 params["bn2_g"], params["bn2_b"], params["bn2_m"], params["bn2_v"])) + y1
    y3 = relu(bn(conv(y2, params["w1"], params["b1"], 0),
                 params["bn3_g"], params["bn3_b"], params["bn3_m"], params["bn3_v"]))
    return y3 + x


if __name__ == "__main__":
    key = jax.random.PRNGKey(0)
    B, C, H, W = 2, 4, 16, 16
    keys = jax.random.split(key, 20)

    def nrm(k, shape, scale=0.2):
        return scale * jax.random.normal(k, shape, dtype=jnp.float32)

    def var(k):
        return 0.8 + 0.4 * jax.random.uniform(k, (C,), dtype=jnp.float32)

    params = {
        "w3": nrm(keys[0], (C, C, 3, 3)),
        "b3": nrm(keys[1], (C,), 0.1),
        "w7": nrm(keys[2], (C, 1, 7, 7)),
        "b7": nrm(keys[3], (C,), 0.1),
        "w1": nrm(keys[4], (C, C, 1, 1), 0.4),
        "b1": nrm(keys[5], (C,), 0.1),
        "bn1_g": 1.0 + nrm(keys[6], (C,), 0.1),
        "bn1_b": nrm(keys[7], (C,), 0.1),
        "bn1_m": nrm(keys[8], (C,), 0.1),
        "bn1_v": var(keys[9]),
        "bn2_g": 1.0 + nrm(keys[10], (C,), 0.1),
        "bn2_b": nrm(keys[11], (C,), 0.1),
        "bn2_m": nrm(keys[12], (C,), 0.1),
        "bn2_v": var(keys[13]),
        "bn3_g": 1.0 + nrm(keys[14], (C,), 0.1),
        "bn3_b": nrm(keys[15], (C,), 0.1),
        "bn3_m": nrm(keys[16], (C,), 0.1),
        "bn3_v": var(keys[17]),
    }
    x = jax.random.normal(keys[18], (B, C, H, W), dtype=jnp.float32)

    out = mixer_decoder_forward(x, params)
    out = jax.block_until_ready(out)

    ref = _reference_forward(x, params)
    assert out.shape == (B, C, H, W)
    err = float(jnp.max(jnp.abs(out - ref)))
    assert err < 5e-3, f"max abs err {err}"

    print("KERNEL_OK")
</pallas_src>

<mosaic_0001>
module attributes {stable_mosaic.version = 11 : i64} {
  func.func @_mixer_kernel(%arg0: i32, %arg1: memref<1x4x256xf32, #tpu.memory_space<vmem>>, %arg2: memref<2x1x256xi32, #tpu.memory_space<vmem>>, %arg3: memref<9x4x4xf32, #tpu.memory_space<vmem>>, %arg4: memref<49x4x1xf32, #tpu.memory_space<vmem>>, %arg5: memref<4x4xf32, #tpu.memory_space<vmem>>, %arg6: memref<3x4x1xf32, #tpu.memory_space<vmem>>, %arg7: memref<3x4x1xf32, #tpu.memory_space<vmem>>, %arg8: memref<1x4x256xf32, #tpu.memory_space<vmem>>) attributes {dimension_semantics = [#tpu.dimension_semantics<parallel>], iteration_bounds = array<i64: 2>, scalar_prefetch = 0 : i64, scratch_operands = 0 : i64, tpu.core_type = #tpu.core_type<tc>, window_params = [{transform_indices = @transform_0, window_bounds = array<i64: 1, 4, 256>}, {pipeline_mode = #tpu.pipeline_mode<synchronous>, transform_indices = @transform_1, window_bounds = array<i64: 2, 1, 256>}, {pipeline_mode = #tpu.pipeline_mode<synchronous>, transform_indices = @transform_2, window_bounds = array<i64: 9, 4, 4>}, {pipeline_mode = #tpu.pipeline_mode<synchronous>, transform_indices = @transform_3, window_bounds = array<i64: 49, 4, 1>}, {pipeline_mode = #tpu.pipeline_mode<synchronous>, transform_indices = @transform_4, window_bounds = array<i64: 4, 4>}, {pipeline_mode = #tpu.pipeline_mode<synchronous>, transform_indices = @transform_5, window_bounds = array<i64: 3, 4, 1>}, {pipeline_mode = #tpu.pipeline_mode<synchronous>, transform_indices = @transform_6, window_bounds = array<i64: 3, 4, 1>}, {transform_indices = @transform_7, window_bounds = array<i64: 1, 4, 256>}]} {
    %c0 = arith.constant 0 : index
    %c0_0 = arith.constant 0 : index
    %c0_1 = arith.constant 0 : index
    %0 = vector.load %arg1[%c0, %c0_0, %c0_1] : memref<1x4x256xf32, #tpu.memory_space<vmem>>, vector<1x4x256xf32>
    %1 = vector.shape_cast %0 : vector<1x4x256xf32> to vector<4x256xf32>
    %c0_2 = arith.constant 0 : index
    %c0_3 = arith.constant 0 : index
    %c0_4 = arith.constant 0 : index
    %2 = vector.load %arg2[%c0_2, %c0_3, %c0_4] : memref<2x1x256xi32, #tpu.memory_space<vmem>>, vector<1x1x256xi32>
    %3 = vector.shape_cast %2 : vector<1x1x256xi32> to vector<1x256xi32>
    %c1 = arith.constant 1 : index
    %c0_5 = arith.constant 0 : index
    %c0_6 = arith.constant 0 : index
    %4 = vector.load %arg2[%c1, %c0_5, %c0_6] : memref<2x1x256xi32, #tpu.memory_space<vmem>>, vector<1x1x256xi32>
    %5 = vector.shape_cast %4 : vector<1x1x256xi32> to vector<1x256xi32>
    %cst = arith.constant 0.000000e+00 : f32
    %6 = vector.broadcast %cst : f32 to vector<4x256xf32>
    %c0_7 = arith.constant 0 : index
    %c0_8 = arith.constant 0 : index
    %c0_9 = arith.constant 0 : index
    %7 = vector.load %arg3[%c0_7, %c0_8, %c0_9] : memref<9x4x4xf32, #tpu.memory_space<vmem>>, vector<1x4x4xf32>
    %8 = vector.shape_cast %7 : vector<1x4x4xf32> to vector<4x4xf32>
    %c17_i32 = arith.constant 17 : i32
    %9 = tpu.dynamic_rotate %1 by %c17_i32 dim 1 : vector<4x256xf32>, i32 -> vector<4x256xf32>
    %c-1_i32 = arith.constant -1 : i32
    %10 = vector.broadcast %c-1_i32 : i32 to vector<1x256xi32>
    %11 = arith.addi %3, %10 : vector<1x256xi32>
    %c0_i32 = arith.constant 0 : i32
    %12 = vector.broadcast %c0_i32 : i32 to vector<1x256xi32>
    %13 = arith.cmpi sge, %11, %12 : vector<1x256xi32>
    %c-1_i32_10 = arith.constant -1 : i32
    %14 = vector.broadcast %c-1_i32_10 : i32 to vector<1x256xi32>
    %15 = arith.addi %3, %14 : vector<1x256xi32>
    %c16_i32 = arith.constant 16 : i32
    %16 = vector.broadcast %c16_i32 : i32 to vector<1x256xi32>
    %17 = arith.cmpi slt, %15, %16 : vector<1x256xi32>
    %18 = arith.andi %13, %17 : vector<1x256xi1>
    %c-1_i32_11 = arith.constant -1 : i32
    %19 = vector.broadcast %c-1_i32_11 : i32 to vector<1x256xi32>
    %20 = arith.addi %5, %19 : vector<1x256xi32>
    %c0_i32_12 = arith.constant 0 : i32
    %21 = vector.broadcast %c0_i32_12 : i32 to vector<1x256xi32>
    %22 = arith.cmpi sge, %20, %21 : vector<1x256xi32>
    %23 = arith.andi %18, %22 : vector<1x256xi1>
    %c-1_i32_13 = arith.constant -1 : i32
    %24 = vector.broadcast %c-1_i32_13 : i32 to vector<1x256xi32>
    %25 = arith.addi %5, %24 : vector<1x256xi32>
    %c16_i32_14 = arith.constant 16 : i32
    %26 = vector.broadcast %c16_i32_14 : i32 to vector<1x256xi32>
    %27 = arith.cmpi slt, %25, %26 : vector<1x256xi32>
    %28 = arith.andi %23, %27 : vector<1x256xi1>
    %cst_15 = arith.constant 0.000000e+00 : f32
    %29 = vector.shape_cast %28 : vector<1x256xi1> to vector<1x256xi1>
    %30 = vector.broadcast %29 : vector<1x256xi1> to vector<4x256xi1>
    %31 = vector.broadcast %cst_15 : f32 to vector<4x256xf32>
    %32 = arith.select %30, %9, %31 : vector<4x256xi1>, vector<4x256xf32>
    %cst_16 = arith.constant dense<0.000000e+00> : vector<4x256xf32>
    %33 = tpu.matmul %8, %32, %cst_16 {dimension_numbers = #tpu.dot_dimension_numbers<[1], [0], [0], [1], [0, 0, 1, 1], [], []>} : vector<4x4xf32>, vector<4x256xf32>, vector<4x256xf32> -> vector<4x256xf32>
    %34 = arith.addf %6, %33 : vector<4x256xf32>
    %c1_17 = arith.constant 1 : index
    %c0_18 = arith.constant 0 : index
    %c0_19 = arith.constant 0 : index
    %35 = vector.load %arg3[%c1_17, %c0_18, %c0_19] : memref<9x4x4xf32, #tpu.memory_space<vmem>>, vector<1x4x4xf32>
    %36 = vector.shape_cast %35 : vector<1x4x4xf32> to vector<4x4xf32>
    %c16_i32_20 = arith.constant 16 : i32
    %37 = tpu.dynamic_rotate %1 by %c16_i32_20 dim 1 : vector<4x256xf32>, i32 -> vector<4x256xf32>
    %c-1_i32_21 = arith.constant -1 : i32
    %38 = vector.broadcast %c-1_i32_21 : i32 to vector<1x256xi32>
    %39 = arith.addi %3, %38 : vector<1x256xi32>
    %c0_i32_22 = arith.constant 0 : i32
    %40 = vector.broadcast %c0_i32_22 : i32 to vector<1x256xi32>
    %41 = arith.cmpi sge, %39, %40 : vector<1x256xi32>
    %c-1_i32_23 = arith.constant -1 : i32
    %42 = vector.broadcast %c-1_i32_23 : i32 to vector<1x256xi32>
    %43 = arith.addi %3, %42 : vector<1x256xi32>
    %c16_i32_24 = arith.constant 16 : i32
    %44 = vector.broadcast %c16_i32_24 : i32 to vector<1x256xi32>
    %45 = arith.cmpi slt, %43, %44 : vector<1x256xi32>
    %46 = arith.andi %41, %45 : vector<1x256xi1>
    %c0_i32_25 = arith.constant 0 : i32
    %47 = vector.broadcast %c0_i32_25 : i32 to vector<1x256xi32>
    %48 = arith.addi %5, %47 : vector<1x256xi32>
    %c0_i32_26 = arith.constant 0 : i32
    %49 = vector.broadcast %c0_i32_26 : i32 to vector<1x256xi32>
    %50 = arith.cmpi sge, %48, %49 : vector<1x256xi32>
    %51 = arith.andi %46, %50 : vector<1x256xi1>
    %c0_i32_27 = arith.constant 0 : i32
    %52 = vector.broadcast %c0_i32_27 : i32 to vector<1x256xi32>
    %53 = arith.addi %5, %52 : vector<1x256xi32>
    %c16_i32_28 = arith.constant 16 : i32
    %54 = vector.broadcast %c16_i32_28 : i32 to vector<1x256xi32>
    %55 = arith.cmpi slt, %53, %54 : vector<1x256xi32>
    %56 = arith.andi %51, %55 : vector<1x256xi1>
    %cst_29 = arith.constant 0.000000e+00 : f32
    %57 = vector.shape_cast %56 : vector<1x256xi1> to vector<1x256xi1>
    %58 = vector.broadcast %57 : vector<1x256xi1> to vector<4x256xi1>
    %59 = vector.broadcast %cst_29 : f32 to vector<4x256xf32>
    %60 = arith.select %58, %37, %59 : vector<4x256xi1>, vector<4x256xf32>
    %cst_30 = arith.constant dense<0.000000e+00> : vector<4x256xf32>
    %61 = tpu.matmul %36, %60, %cst_30 {dimension_numbers = #tpu.dot_dimension_numbers<[1], [0], [0], [1], [0, 0, 1, 1], [], []>} : vector<4x4xf32>, vector<4x256xf32>, vector<4x256xf32> -> vector<4x256xf32>
    %62 = arith.addf %34, %61 : vector<4x256xf32>
    %c2 = arith.constant 2 : index
    %c0_31 = arith.constant 0 : index
    %c0_32 = arith.constant 0 : index
    %63 = vector.load %arg3[%c2, %c0_31, %c0_32] : memref<9x4x4xf32, #tpu.memory_space<vmem>>, vector<1x4x4xf32>
    %64 = vector.shape_cast %63 : vector<1x4x4xf32> to vector<4x4xf32>
    %c15_i32 = arith.constant 15 : i32
    %65 = tpu.dynamic_rotate %1 by %c15_i32 dim 1 : vector<4x256xf32>, i32 -> vector<4x256xf32>
    %c-1_i32_33 = arith.constant -1 : i32
    %66 = vector.broadcast %c-1_i32_33 : i32 to vector<1x256xi32>
    %67 = arith.addi %3, %66 : vector<1x256xi32>
    %c0_i32_34 = arith.constant 0 : i32
    %68 = vector.broadcast %c0_i32_34 : i32 to vector<1x256xi32>
    %69 = arith.cmpi sge, %67, %68 : vector<1x256xi32>
    %c-1_i32_35 = arith.constant -1 : i32
    %70 = vector.broadcast %c-1_i32_35 : i32 to vector<1x256xi32>
    %71 = arith.addi %3, %70 : vector<1x256xi32>
    %c16_i32_36 = arith.constant 16 : i32
    %72 = vector.broadcast %c16_i32_36 : i32 to vector<1x256xi32>
    %73 = arith.cmpi slt, %71, %72 : vector<1x256xi32>
    %74 = arith.andi %69, %73 : vector<1x256xi1>
    %c1_i32 = arith.constant 1 : i32
    %75 = vector.broadcast %c1_i32 : i32 to vector<1x256xi32>
    %76 = arith.addi %5, %75 : vector<1x256xi32>
    %c0_i32_37 = arith.constant 0 : i32
    %77 = vector.broadcast %c0_i32_37 : i32 to vector<1x256xi32>
    %78 = arith.cmpi sge, %76, %77 : vector<1x256xi32>
    %79 = arith.andi %74, %78 : vector<1x256xi1>
    %c1_i32_38 = arith.constant 1 : i32
    %80 = vector.broadcast %c1_i32_38 : i32 to vector<1x256xi32>
    %81 = arith.addi %5, %80 : vector<1x256xi32>
    %c16_i32_39 = arith.constant 16 : i32
    %82 = vector.broadcast %c16_i32_39 : i32 to vector<1x256xi32>
    %83 = arith.cmpi slt, %81, %82 : vector<1x256xi32>
    %84 = arith.andi %79, %83 : vector<1x256xi1>
    %cst_40 = arith.constant 0.000000e+00 : f32
    %85 = vector.shape_cast %84 : vector<1x256xi1> to vector<1x256xi1>
    %86 = vector.broadcast %85 : vector<1x256xi1> to vector<4x256xi1>
    %87 = vector.broadcast %cst_40 : f32 to vector<4x256xf32>
    %88 = arith.select %86, %65, %87 : vector<4x256xi1>, vector<4x256xf32>
    %cst_41 = arith.constant dense<0.000000e+00> : vector<4x256xf32>
    %89 = tpu.matmul %64, %88, %cst_41 {dimension_numbers = #tpu.dot_dimension_numbers<[1], [0], [0], [1], [0, 0, 1, 1], [], []>} : vector<4x4xf32>, vector<4x256xf32>, vector<4x256xf32> -> vector<4x256xf32>
    %90 = arith.addf %62, %89 : vector<4x256xf32>
    %c3 = arith.constant 3 : index
    %c0_42 = arith.constant 0 : index
    %c0_43 = arith.constant 0 : index
    %91 = vector.load %arg3[%c3, %c0_42, %c0_43] : memref<9x4x4xf32, #tpu.memory_space<vmem>>, vector<1x4x4xf32>
    %92 = vector.shape_cast %91 : vector<1x4x4xf32> to vector<4x4xf32>
    %c1_i32_44 = arith.constant 1 : i32
    %93 = tpu.dynamic_rotate %1 by %c1_i32_44 dim 1 : vector<4x256xf32>, i32 -> vector<4x256xf32>
    %c0_i32_45 = arith.constant 0 : i32
    %94 = vector.broadcast %c0_i32_45 : i32 to vector<1x256xi32>
    %95 = arith.addi %3, %94 : vector<1x256xi32>
    %c0_i32_46 = arith.constant 0 : i32
    %96 = vector.broadcast %c0_i32_46 : i32 to vector<1x256xi32>
    %97 = arith.cmpi sge, %95, %96 : vector<1x256xi32>
    %c0_i32_47 = arith.constant 0 : i32
    %98 = vector.broadcast %c0_i32_47 : i32 to vector<1x256xi32>
    %99 = arith.addi %3, %98 : vector<1x256xi32>
    %c16_i32_48 = arith.constant 16 : i32
    %100 = vector.broadcast %c16_i32_48 : i32 to vector<1x256xi32>
    %101 = arith.cmpi slt, %99, %100 : vector<1x256xi32>
    %102 = arith.andi %97, %101 : vector<1x256xi1>
    %c-1_i32_49 = arith.constant -1 : i32
    %103 = vector.broadcast %c-1_i32_49 : i32 to vector<1x256xi32>
    %104 = arith.addi %5, %103 : vector<1x256xi32>
    %c0_i32_50 = arith.constant 0 : i32
    %105 = vector.broadcast %c0_i32_50 : i32 to vector<1x256xi32>
    %106 = arith.cmpi sge, %104, %105 : vector<1x256xi32>
    %107 = arith.andi %102, %106 : vector<1x256xi1>
    %c-1_i32_51 = arith.constant -1 : i32
    %108 = vector.broadcast %c-1_i32_51 : i32 to vector<1x256xi32>
    %109 = arith.addi %5, %108 : vector<1x256xi32>
    %c16_i32_52 = arith.constant 16 : i32
    %110 = vector.broadcast %c16_i32_52 : i32 to vector<1x256xi32>
    %111 = arith.cmpi slt, %109, %110 : vector<1x256xi32>
    %112 = arith.andi %107, %111 : vector<1x256xi1>
    %cst_53 = arith.constant 0.000000e+00 : f32
    %113 = vector.shape_cast %112 : vector<1x256xi1> to vector<1x256xi1>
    %114 = vector.broadcast %113 : vector<1x256xi1> to vector<4x256xi1>
    %115 = vector.broadcast %cst_53 : f32 to vector<4x256xf32>
    %116 = arith.select %114, %93, %115 : vector<4x256xi1>, vector<4x256xf32>
    %cst_54 = arith.constant dense<0.000000e+00> : vector<4x256xf32>
    %117 = tpu.matmul %92, %116, %cst_54 {dimension_numbers = #tpu.dot_dimension_numbers<[1], [0], [0], [1], [0, 0, 1, 1], [], []>} : vector<4x4xf32>, vector<4x256xf32>, vector<4x256xf32> -> vector<4x256xf32>
    %118 = arith.addf %90, %117 : vector<4x256xf32>
    %c4 = arith.constant 4 : index
    %c0_55 = arith.constant 0 : index
    %c0_56 = arith.constant 0 : index
    %119 = vector.load %arg3[%c4, %c0_55, %c0_56] : memref<9x4x4xf32, #tpu.memory_space<vmem>>, vector<1x4x4xf32>
    %120 = vector.shape_cast %119 : vector<1x4x4xf32> to vector<4x4xf32>
    %c0_i32_57 = arith.constant 0 : i32
    %121 = vector.broadcast %c0_i32_57 : i32 to vector<1x256xi32>
    %122 = arith.addi %3, %121 : vector<1x256xi32>
    %c0_i32_58 = arith.constant 0 : i32
    %123 = vector.broadcast %c0_i32_58 : i32 to vector<1x256xi32>
    %124 = arith.cmpi sge, %122, %123 : vector<1x256xi32>
    %c0_i32_59 = arith.constant 0 : i32
    %125 = vector.broadcast %c0_i32_59 : i32 to vector<1x256xi32>
    %126 = arith.addi %3, %125 : vector<1x256xi32>
    %c16_i32_60 = arith.constant 16 : i32
    %127 = vector.broadcast %c16_i32_60 : i32 to vector<1x256xi32>
    %128 = arith.cmpi slt, %126, %127 : vector<1x256xi32>
    %129 = arith.andi %124, %128 : vector<1x256xi1>
    %c0_i32_61 = arith.constant 0 : i32
    %130 = vector.broadcast %c0_i32_61 : i32 to vector<1x256xi32>
    %131 = arith.addi %5, %130 : vector<1x256xi32>
    %c0_i32_62 = arith.constant 0 : i32
    %132 = vector.broadcast %c0_i32_62 : i32 to vector<1x256xi32>
    %133 = arith.cmpi sge, %131, %132 : vector<1x256xi32>
    %134 = arith.andi %129, %133 : vector<1x256xi1>
    %c0_i32_63 = arith.constant 0 : i32
    %135 = vector.broadcast %c0_i32_63 : i32 to vector<1x256xi32>
    %136 = arith.addi %5, %135 : vector<1x256xi32>
    %c16_i32_64 = arith.constant 16 : i32
    %137 = vector.broadcast %c16_i32_64 : i32 to vector<1x256xi32>
    %138 = arith.cmpi slt, %136, %137 : vector<1x256xi32>
    %139 = arith.andi %134, %138 : vector<1x256xi1>
    %cst_65 = arith.constant 0.000000e+00 : f32
    %140 = vector.shape_cast %139 : vector<1x256xi1> to vector<1x256xi1>
    %141 = vector.broadcast %140 : vector<1x256xi1> to vector<4x256xi1>
    %142 = vector.broadcast %cst_65 : f32 to vector<4x256xf32>
    %143 = arith.select %141, %1, %142 : vector<4x256xi1>, vector<4x256xf32>
    %cst_66 = arith.constant dense<0.000000e+00> : vector<4x256xf32>
    %144 = tpu.matmul %120, %143, %cst_66 {dimension_numbers = #tpu.dot_dimension_numbers<[1], [0], [0], [1], [0, 0, 1, 1], [], []>} : vector<4x4xf32>, vector<4x256xf32>, vector<4x256xf32> -> vector<4x256xf32>
    %145 = arith.addf %118, %144 : vector<4x256xf32>
    %c5 = arith.constant 5 : index
    %c0_67 = arith.constant 0 : index
    %c0_68 = arith.constant 0 : index
    %146 = vector.load %arg3[%c5, %c0_67, %c0_68] : memref<9x4x4xf32, #tpu.memory_space<vmem>>, vector<1x4x4xf32>
    %147 = vector.shape_cast %146 : vector<1x4x4xf32> to vector<4x4xf32>
    %c255_i32 = arith.constant 255 : i32
    %148 = tpu.dynamic_rotate %1 by %c255_i32 dim 1 : vector<4x256xf32>, i32 -> vector<4x256xf32>
    %c0_i32_69 = arith.constant 0 : i32
    %149 = vector.broadcast %c0_i32_69 : i32 to vector<1x256xi32>
    %150 = arith.addi %3, %149 : vector<1x256xi32>
    %c0_i32_70 = arith.constant 0 : i32
    %151 = vector.broadcast %c0_i32_70 : i32 to vector<1x256xi32>
    %152 = arith.cmpi sge, %150, %151 : vector<1x256xi32>
    %c0_i32_71 = arith.constant 0 : i32
    %153 = vector.broadcast %c0_i32_71 : i32 to vector<1x256xi32>
    %154 = arith.addi %3, %153 : vector<1x256xi32>
    %c16_i32_72 = arith.constant 16 : i32
    %155 = vector.broadcast %c16_i32_72 : i32 to vector<1x256xi32>
    %156 = arith.cmpi slt, %154, %155 : vector<1x256xi32>
    %157 = arith.andi %152, %156 : vector<1x256xi1>
    %c1_i32_73 = arith.constant 1 : i32
    %158 = vector.broadcast %c1_i32_73 : i32 to vector<1x256xi32>
    %159 = arith.addi %5, %158 : vector<1x256xi32>
    %c0_i32_74 = arith.constant 0 : i32
    %160 = vector.broadcast %c0_i32_74 : i32 to vector<1x256xi32>
    %161 = arith.cmpi sge, %159, %160 : vector<1x256xi32>
    %162 = arith.andi %157, %161 : vector<1x256xi1>
    %c1_i32_75 = arith.constant 1 : i32
    %163 = vector.broadcast %c1_i32_75 : i32 to vector<1x256xi32>
    %164 = arith.addi %5, %163 : vector<1x256xi32>
    %c16_i32_76 = arith.constant 16 : i32
    %165 = vector.broadcast %c16_i32_76 : i32 to vector<1x256xi32>
    %166 = arith.cmpi slt, %164, %165 : vector<1x256xi32>
    %167 = arith.andi %162, %166 : vector<1x256xi1>
    %cst_77 = arith.constant 0.000000e+00 : f32
    %168 = vector.shape_cast %167 : vector<1x256xi1> to vector<1x256xi1>
    %169 = vector.broadcast %168 : vector<1x256xi1> to vector<4x256xi1>
    %170 = vector.broadcast %cst_77 : f32 to vector<4x256xf32>
    %171 = arith.select %169, %148, %170 : vector<4x256xi1>, vector<4x256xf32>
    %cst_78 = arith.constant dense<0.000000e+00> : vector<4x256xf32>
    %172 = tpu.matmul %147, %171, %cst_78 {dimension_numbers = #tpu.dot_dimension_numbers<[1], [0], [0], [1], [0, 0, 1, 1], [], []>} : vector<4x4xf32>, vector<4x256xf32>, vector<4x256xf32> -> vector<4x256xf32>
    %173 = arith.addf %145, %172 : vector<4x256xf32>
    %c6 = arith.constant 6 : index
    %c0_79 = arith.constant 0 : index
    %c0_80 = arith.constant 0 : index
    %174 = vector.load %arg3[%c6, %c0_79, %c0_80] : memref<9x4x4xf32, #tpu.memory_space<vmem>>, vector<1x4x4xf32>
    %175 = vector.shape_cast %174 : vector<1x4x4xf32> to vector<4x4xf32>
    %c241_i32 = arith.constant 241 : i32
    %176 = tpu.dynamic_rotate %1 by %c241_i32 dim 1 : vector<4x256xf32>, i32 -> vector<4x256xf32>
    %c1_i32_81 = arith.constant 1 : i32
    %177 = vector.broadcast %c1_i32_81 : i32 to vector<1x256xi32>
    %178 = arith.addi %3, %177 : vector<1x256xi32>
    %c0_i32_82 = arith.constant 0 : i32
    %179 = vector.broadcast %c0_i32_82 : i32 to vector<1x256xi32>
    %180 = arith.cmpi sge, %178, %179 : vector<1x256xi32>
    %c1_i32_83 = arith.constant 1 : i32
    %181 = vector.broadcast %c1_i32_83 : i32 to vector<1x256xi32>
    %182 = arith.addi %3, %181 : vector<1x256xi32>
    %c16_i32_84 = arith.constant 16 : i32
    %183 = vector.broadcast %c16_i32_84 : i32 to vector<1x256xi32>
    %184 = arith.cmpi slt, %182, %183 : vector<1x256xi32>
    %185 = arith.andi %180, %184 : vector<1x256xi1>
    %c-1_i32_85 = arith.constant -1 : i32
    %186 = vector.broadcast %c-1_i32_85 : i32 to vector<1x256xi32>
    %187 = arith.addi %5, %186 : vector<1x256xi32>
    %c0_i32_86 = arith.constant 0 : i32
    %188 = vector.broadcast %c0_i32_86 : i32 to vector<1x256xi32>
    %189 = arith.cmpi sge, %187, %188 : vector<1x256xi32>
    %190 = arith.andi %185, %189 : vector<1x256xi1>
    %c-1_i32_87 = arith.constant -1 : i32
    %191 = vector.broadcast %c-1_i32_87 : i32 to vector<1x256xi32>
    %192 = arith.addi %5, %191 : vector<1x256xi32>
    %c16_i32_88 = arith.constant 16 : i32
    %193 = vector.broadcast %c16_i32_88 : i32 to vector<1x256xi32>
    %194 = arith.cmpi slt, %192, %193 : vector<1x256xi32>
    %195 = arith.andi %190, %194 : vector<1x256xi1>
    %cst_89 = arith.constant 0.000000e+00 : f32
    %196 = vector.shape_cast %195 : vector<1x256xi1> to vector<1x256xi1>
    %197 = vector.broadcast %196 : vector<1x256xi1> to vector<4x256xi1>
    %198 = vector.broadcast %cst_89 : f32 to vector<4x256xf32>
    %199 = arith.select %197, %176, %198 : vector<4x256xi1>, vector<4x256xf32>
    %cst_90 = arith.constant dense<0.000000e+00> : vector<4x256xf32>
    %200 = tpu.matmul %175, %199, %cst_90 {dimension_numbers = #tpu.dot_dimension_numbers<[1], [0], [0], [1], [0, 0, 1, 1], [], []>} : vector<4x4xf32>, vector<4x256xf32>, vector<4x256xf32> -> vector<4x256xf32>
    %201 = arith.addf %173, %200 : vector<4x256xf32>
    %c7 = arith.constant 7 : index
    %c0_91 = arith.constant 0 : index
    %c0_92 = arith.constant 0 : index
    %202 = vector.load %arg3[%c7, %c0_91, %c0_92] : memref<9x4x4xf32, #tpu.memory_space<vmem>>, vector<1x4x4xf32>
    %203 = vector.shape_cast %202 : vector<1x4x4xf32> to vector<4x4xf32>
    %c240_i32 = arith.constant 240 : i32
    %204 = tpu.dynamic_rotate %1 by %c240_i32 dim 1 : vector<4x256xf32>, i32 -> vector<4x256xf32>
    %c1_i32_93 = arith.constant 1 : i32
    %205 = vector.broadcast %c1_i32_93 : i32 to vector<1x256xi32>
    %206 = arith.addi %3, %205 : vector<1x256xi32>
    %c0_i32_94 = arith.constant 0 : i32
    %207 = vector.broadcast %c0_i32_94 : i32 to vector<1x256xi32>
    %208 = arith.cmpi sge, %206, %207 : vector<1x256xi32>
    %c1_i32_95 = arith.constant 1 : i32
    %209 = vector.broadcast %c1_i32_95 : i32 to vector<1x256xi32>
    %210 = arith.addi %3, %209 : vector<1x256xi32>
    %c16_i32_96 = arith.constant 16 : i32
    %211 = vector.broadcast %c16_i32_96 : i32 to vector<1x256xi32>
    %212 = arith.cmpi slt, %210, %211 : vector<1x256xi32>
    %213 = arith.andi %208, %212 : vector<1x256xi1>
    %c0_i32_97 = arith.constant 0 : i32
    %214 = vector.broadcast %c0_i32_97 : i32 to vector<1x256xi32>
    %215 = arith.addi %5, %214 : vector<1x256xi32>
    %c0_i32_98 = arith.constant 0 : i32
    %216 = vector.broadcast %c0_i32_98 : i32 to vector<1x256xi32>
    %217 = arith.cmpi sge, %215, %216 : vector<1x256xi32>
    %218 = arith.andi %213, %217 : vector<1x256xi1>
    %c0_i32_99 = arith.constant 0 : i32
    %219 = vector.broadcast %c0_i32_99 : i32 to vector<1x256xi32>
    %220 = arith.addi %5, %219 : vector<1x256xi32>
    %c16_i32_100 = arith.constant 16 : i32
    %221 = vector.broadcast %c16_i32_100 : i32 to vector<1x256xi32>
    %222 = arith.cmpi slt, %220, %221 : vector<1x256xi32>
    %223 = arith.andi %218, %222 : vector<1x256xi1>
    %cst_101 = arith.constant 0.000000e+00 : f32
    %224 = vector.shape_cast %223 : vector<1x256xi1> to vector<1x256xi1>
    %225 = vector.broadcast %224 : vector<1x256xi1> to vector<4x256xi1>
    %226 = vector.broadcast %cst_101 : f32 to vector<4x256xf32>
    %227 = arith.select %225, %204, %226 : vector<4x256xi1>, vector<4x256xf32>
    %cst_102 = arith.constant dense<0.000000e+00> : vector<4x256xf32>
    %228 = tpu.matmul %203, %227, %cst_102 {dimension_numbers = #tpu.dot_dimension_numbers<[1], [0], [0], [1], [0, 0, 1, 1], [], []>} : vector<4x4xf32>, vector<4x256xf32>, vector<4x256xf32> -> vector<4x256xf32>
    %229 = arith.addf %201, %228 : vector<4x256xf32>
    %c8 = arith.constant 8 : index
    %c0_103 = arith.constant 0 : index
    %c0_104 = arith.constant 0 : index
    %230 = vector.load %arg3[%c8, %c0_103, %c0_104] : memref<9x4x4xf32, #tpu.memory_space<vmem>>, vector<1x4x4xf32>
    %231 = vector.shape_cast %230 : vector<1x4x4xf32> to vector<4x4xf32>
    %c239_i32 = arith.constant 239 : i32
    %232 = tpu.dynamic_rotate %1 by %c239_i32 dim 1 : vector<4x256xf32>, i32 -> vector<4x256xf32>
    %c1_i32_105 = arith.constant 1 : i32
    %233 = vector.broadcast %c1_i32_105 : i32 to vector<1x256xi32>
    %234 = arith.addi %3, %233 : vector<1x256xi32>
    %c0_i32_106 = arith.constant 0 : i32
    %235 = vector.broadcast %c0_i32_106 : i32 to vector<1x256xi32>
    %236 = arith.cmpi sge, %234, %235 : vector<1x256xi32>
    %c1_i32_107 = arith.constant 1 : i32
    %237 = vector.broadcast %c1_i32_107 : i32 to vector<1x256xi32>
    %238 = arith.addi %3, %237 : vector<1x256xi32>
    %c16_i32_108 = arith.constant 16 : i32
    %239 = vector.broadcast %c16_i32_108 : i32 to vector<1x256xi32>
    %240 = arith.cmpi slt, %238, %239 : vector<1x256xi32>
    %241 = arith.andi %236, %240 : vector<1x256xi1>
    %c1_i32_109 = arith.constant 1 : i32
    %242 = vector.broadcast %c1_i32_109 : i32 to vector<1x256xi32>
    %243 = arith.addi %5, %242 : vector<1x256xi32>
    %c0_i32_110 = arith.constant 0 : i32
    %244 = vector.broadcast %c0_i32_110 : i32 to vector<1x256xi32>
    %245 = arith.cmpi sge, %243, %244 : vector<1x256xi32>
    %246 = arith.andi %241, %245 : vector<1x256xi1>
    %c1_i32_111 = arith.constant 1 : i32
    %247 = vector.broadcast %c1_i32_111 : i32 to vector<1x256xi32>
    %248 = arith.addi %5, %247 : vector<1x256xi32>
    %c16_i32_112 = arith.constant 16 : i32
    %249 = vector.broadcast %c16_i32_112 : i32 to vector<1x256xi32>
    %250 = arith.cmpi slt, %248, %249 : vector<1x256xi32>
    %251 = arith.andi %246, %250 : vector<1x256xi1>
    %cst_113 = arith.constant 0.000000e+00 : f32
    %252 = vector.shape_cast %251 : vector<1x256xi1> to vector<1x256xi1>
    %253 = vector.broadcast %252 : vector<1x256xi1> to vector<4x256xi1>
    %254 = vector.broadcast %cst_113 : f32 to vector<4x256xf32>
    %255 = arith.select %253, %232, %254 : vector<4x256xi1>, vector<4x256xf32>
    %cst_114 = arith.constant dense<0.000000e+00> : vector<4x256xf32>
    %256 = tpu.matmul %231, %255, %cst_114 {dimension_numbers = #tpu.dot_dimension_numbers<[1], [0], [0], [1], [0, 0, 1, 1], [], []>} : vector<4x4xf32>, vector<4x256xf32>, vector<4x256xf32> -> vector<4x256xf32>
    %257 = arith.addf %229, %256 : vector<4x256xf32>
    %c0_115 = arith.constant 0 : index
    %c0_116 = arith.constant 0 : index
    %c0_117 = arith.constant 0 : index
    %258 = vector.load %arg6[%c0_115, %c0_116, %c0_117] : memref<3x4x1xf32, #tpu.memory_space<vmem>>, vector<1x4x1xf32>
    %259 = vector.shape_cast %258 : vector<1x4x1xf32> to vector<4x1xf32>
    %260 = vector.broadcast %259 : vector<4x1xf32> to vector<4x256xf32>
    %261 = arith.mulf %257, %260 : vector<4x256xf32>
    %c0_118 = arith.constant 0 : index
    %c0_119 = arith.constant 0 : index
    %c0_120 = arith.constant 0 : index
    %262 = vector.load %arg7[%c0_118, %c0_119, %c0_120] : memref<3x4x1xf32, #tpu.memory_space<vmem>>, vector<1x4x1xf32>
    %263 = vector.shape_cast %262 : vector<1x4x1xf32> to vector<4x1xf32>
    %264 = vector.broadcast %263 : vector<4x1xf32> to vector<4x256xf32>
    %265 = arith.addf %261, %264 : vector<4x256xf32>
    %cst_121 = arith.constant 0.000000e+00 : f32
    %266 = vector.broadcast %cst_121 : f32 to vector<4x256xf32>
    %267 = arith.maximumf %265, %266 : vector<4x256xf32>
    %cst_122 = arith.constant 0.000000e+00 : f32
    %268 = vector.broadcast %cst_122 : f32 to vector<4x256xf32>
    %c0_123 = arith.constant 0 : index
    %c0_124 = arith.constant 0 : index
    %c0_125 = arith.constant 0 : index
    %269 = vector.load %arg4[%c0_123, %c0_124, %c0_125] : memref<49x4x1xf32, #tpu.memory_space<vmem>>, vector<1x4x1xf32>
    %270 = vector.shape_cast %269 : vector<1x4x1xf32> to vector<4x1xf32>
    %c51_i32 = arith.constant 51 : i32
    %271 = tpu.dynamic_rotate %267 by %c51_i32 dim 1 : vector<4x256xf32>, i32 -> vector<4x256xf32>
    %c-3_i32 = arith.constant -3 : i32
    %272 = vector.broadcast %c-3_i32 : i32 to vector<1x256xi32>
    %273 = arith.addi %3, %272 : vector<1x256xi32>
    %c0_i32_126 = arith.constant 0 : i32
    %274 = vector.broadcast %c0_i32_126 : i32 to vector<1x256xi32>
    %275 = arith.cmpi sge, %273, %274 : vector<1x256xi32>
    %c-3_i32_127 = arith.constant -3 : i32
    %276 = vector.broadcast %c-3_i32_127 : i32 to vector<1x256xi32>
    %277 = arith.addi %3, %276 : vector<1x256xi32>
    %c16_i32_128 = arith.constant 16 : i32
    %278 = vector.broadcast %c16_i32_128 : i32 to vector<1x256xi32>
    %279 = arith.cmpi slt, %277, %278 : vector<1x256xi32>
    %280 = arith.andi %275, %279 : vector<1x256xi1>
    %c-3_i32_129 = arith.constant -3 : i32
    %281 = vector.broadcast %c-3_i32_129 : i32 to vector<1x256xi32>
    %282 = arith.addi %5, %281 : vector<1x256xi32>
    %c0_i32_130 = arith.constant 0 : i32
    %283 = vector.broadcast %c0_i32_130 : i32 to vector<1x256xi32>
    %284 = arith.cmpi sge, %282, %283 : vector<1x256xi32>
    %285 = arith.andi %280, %284 : vector<1x256xi1>
    %c-3_i32_131 = arith.constant -3 : i32
    %286 = vector.broadcast %c-3_i32_131 : i32 to vector<1x256xi32>
    %287 = arith.addi %5, %286 : vector<1x256xi32>
    %c16_i32_132 = arith.constant 16 : i32
    %288 = vector.broadcast %c16_i32_132 : i32 to vector<1x256xi32>
    %289 = arith.cmpi slt, %287, %288 : vector<1x256xi32>
    %290 = arith.andi %285, %289 : vector<1x256xi1>
    %cst_133 = arith.constant 0.000000e+00 : f32
    %291 = vector.shape_cast %290 : vector<1x256xi1> to vector<1x256xi1>
    %292 = vector.broadcast %291 : vector<1x256xi1> to vector<4x256xi1>
    %293 = vector.broadcast %cst_133 : f32 to vector<4x256xf32>
    %294 = arith.select %292, %271, %293 : vector<4x256xi1>, vector<4x256xf32>
    %295 = vector.broadcast %270 : vector<4x1xf32> to vector<4x256xf32>
    %296 = arith.mulf %295, %294 : vector<4x256xf32>
    %297 = arith.addf %268, %296 : vector<4x256xf32>
    %c1_134 = arith.constant 1 : index
    %c0_135 = arith.constant 0 : index
    %c0_136 = arith.constant 0 : index
    %298 = vector.load %arg4[%c1_134, %c0_135, %c0_136] : memref<49x4x1xf32, #tpu.memory_space<vmem>>, vector<1x4x1xf32>
    %299 = vector.shape_cast %298 : vector<1x4x1xf32> to vector<4x1xf32>
    %c50_i32 = arith.constant 50 : i32
    %300 = tpu.dynamic_rotate %267 by %c50_i32 dim 1 : vector<4x256xf32>, i32 -> vector<4x256xf32>
    %c-3_i32_137 = arith.constant -3 : i32
    %301 = vector.broadcast %c-3_i32_137 : i32 to vector<1x256xi32>
    %302 = arith.addi %3, %301 : vector<1x256xi32>
    %c0_i32_138 = arith.constant 0 : i32
    %303 = vector.broadcast %c0_i32_138 : i32 to vector<1x256xi32>
    %304 = arith.cmpi sge, %302, %303 : vector<1x256xi32>
    %c-3_i32_139 = arith.constant -3 : i32
    %305 = vector.broadcast %c-3_i32_139 : i32 to vector<1x256xi32>
    %306 = arith.addi %3, %305 : vector<1x256xi32>
    %c16_i32_140 = arith.constant 16 : i32
    %307 = vector.broadcast %c16_i32_140 : i32 to vector<1x256xi32>
    %308 = arith.cmpi slt, %306, %307 : vector<1x256xi32>
    %309 = arith.andi %304, %308 : vector<1x256xi1>
    %c-2_i32 = arith.constant -2 : i32
    %310 = vector.broadcast %c-2_i32 : i32 to vector<1x256xi32>
    %311 = arith.addi %5, %310 : vector<1x256xi32>
    %c0_i32_141 = arith.constant 0 : i32
    %312 = vector.broadcast %c0_i32_141 : i32 to vector<1x256xi32>
    %313 = arith.cmpi sge, %311, %312 : vector<1x256xi32>
    %314 = arith.andi %309, %313 : vector<1x256xi1>
    %c-2_i32_142 = arith.constant -2 : i32
    %315 = vector.broadcast %c-2_i32_142 : i32 to vector<1x256xi32>
    %316 = arith.addi %5, %315 : vector<1x256xi32>
    %c16_i32_143 = arith.constant 16 : i32
    %317 = vector.broadcast %c16_i32_143 : i32 to vector<1x256xi32>
    %318 = arith.cmpi slt, %316, %317 : vector<1x256xi32>
    %319 = arith.andi %314, %318 : vector<1x256xi1>
    %cst_144 = arith.constant 0.000000e+00 : f32
    %320 = vector.shape_cast %319 : vector<1x256xi1> to vector<1x256xi1>
    %321 = vector.broadcast %320 : vector<1x256xi1> to vector<4x256xi1>
    %322 = vector.broadcast %cst_144 : f32 to vector<4x256xf32>
    %323 = arith.select %321, %300, %322 : vector<4x256xi1>, vector<4x256xf32>
    %324 = vector.broadcast %299 : vector<4x1xf32> to vector<4x256xf32>
    %325 = arith.mulf %324, %323 : vector<4x256xf32>
    %326 = arith.addf %297, %325 : vector<4x256xf32>
    %c2_145 = arith.constant 2 : index
    %c0_146 = arith.constant 0 : index
    %c0_147 = arith.constant 0 : index
    %327 = vector.load %arg4[%c2_145, %c0_146, %c0_147] : memref<49x4x1xf32, #tpu.memory_space<vmem>>, vector<1x4x1xf32>
    %328 = vector.shape_cast %327 : vector<1x4x1xf32> to vector<4x1xf32>
    %c49_i32 = arith.constant 49 : i32
    %329 = tpu.dynamic_rotate %267 by %c49_i32 dim 1 : vector<4x256xf32>, i32 -> vector<4x256xf32>
    %c-3_i32_148 = arith.constant -3 : i32
    %330 = vector.broadcast %c-3_i32_148 : i32 to vector<1x256xi32>
    %331 = arith.addi %3, %330 : vector<1x256xi32>
    %c0_i32_149 = arith.constant 0 : i32
    %332 = vector.broadcast %c0_i32_149 : i32 to vector<1x256xi32>
    %333 = arith.cmpi sge, %331, %332 : vector<1x256xi32>
    %c-3_i32_150 = arith.constant -3 : i32
    %334 = vector.broadcast %c-3_i32_150 : i32 to vector<1x256xi32>
    %335 = arith.addi %3, %334 : vector<1x256xi32>
    %c16_i32_151 = arith.constant 16 : i32
    %336 = vector.broadcast %c16_i32_151 : i32 to vector<1x256xi32>
    %337 = arith.cmpi slt, %335, %336 : vector<1x256xi32>
    %338 = arith.andi %333, %337 : vector<1x256xi1>
    %c-1_i32_152 = arith.constant -1 : i32
    %339 = vector.broadcast %c-1_i32_152 : i32 to vector<1x256xi32>
    %340 = arith.addi %5, %339 : vector<1x256xi32>
    %c0_i32_153 = arith.constant 0 : i32
    %341 = vector.broadcast %c0_i32_153 : i32 to vector<1x256xi32>
    %342 = arith.cmpi sge, %340, %341 : vector<1x256xi32>
    %343 = arith.andi %338, %342 : vector<1x256xi1>
    %c-1_i32_154 = arith.constant -1 : i32
    %344 = vector.broadcast %c-1_i32_154 : i32 to vector<1x256xi32>
    %345 = arith.addi %5, %344 : vector<1x256xi32>
    %c16_i32_155 = arith.constant 16 : i32
    %346 = vector.broadcast %c16_i32_155 : i32 to vector<1x256xi32>
    %347 = arith.cmpi slt, %345, %346 : vector<1x256xi32>
    %348 = arith.andi %343, %347 : vector<1x256xi1>
    %cst_156 = arith.constant 0.000000e+00 : f32
    %349 = vector.shape_cast %348 : vector<1x256xi1> to vector<1x256xi1>
    %350 = vector.broadcast %349 : vector<1x256xi1> to vector<4x256xi1>
    %351 = vector.broadcast %cst_156 : f32 to vector<4x256xf32>
    %352 = arith.select %350, %329, %351 : vector<4x256xi1>, vector<4x256xf32>
    %353 = vector.broadcast %328 : vector<4x1xf32> to vector<4x256xf32>
    %354 = arith.mulf %353, %352 : vector<4x256xf32>
    %355 = arith.addf %326, %354 : vector<4x256xf32>
    %c3_157 = arith.constant 3 : index
    %c0_158 = arith.constant 0 : index
    %c0_159 = arith.constant 0 : index
    %356 = vector.load %arg4[%c3_157, %c0_158, %c0_159] : memref<49x4x1xf32, #tpu.memory_space<vmem>>, vector<1x4x1xf32>
    %357 = vector.shape_cast %356 : vector<1x4x1xf32> to vector<4x1xf32>
    %c48_i32 = arith.constant 48 : i32
    %358 = tpu.dynamic_rotate %267 by %c48_i32 dim 1 : vector<4x256xf32>, i32 -> vector<4x256xf32>
    %c-3_i32_160 = arith.constant -3 : i32
    %359 = vector.broadcast %c-3_i32_160 : i32 to vector<1x256xi32>
    %360 = arith.addi %3, %359 : vector<1x256xi32>
    %c0_i32_161 = arith.constant 0 : i32
    %361 = vector.broadcast %c0_i32_161 : i32 to vector<1x256xi32>
    %362 = arith.cmpi sge, %360, %361 : vector<1x256xi32>
    %c-3_i32_162 = arith.constant -3 : i32
    %363 = vector.broadcast %c-3_i32_162 : i32 to vector<1x256xi32>
    %364 = arith.addi %3, %363 : vector<1x256xi32>
    %c16_i32_163 = arith.constant 16 : i32
    %365 = vector.broadcast %c16_i32_163 : i32 to vector<1x256xi32>
    %366 = arith.cmpi slt, %364, %365 : vector<1x256xi32>
    %367 = arith.andi %362, %366 : vector<1x256xi1>
    %c0_i32_164 = arith.constant 0 : i32
    %368 = vector.broadcast %c0_i32_164 : i32 to vector<1x256xi32>
    %369 = arith.addi %5, %368 : vector<1x256xi32>
    %c0_i32_165 = arith.constant 0 : i32
    %370 = vector.broadcast %c0_i32_165 : i32 to vector<1x256xi32>
    %371 = arith.cmpi sge, %369, %370 : vector<1x256xi32>
    %372 = arith.andi %367, %371 : vector<1x256xi1>
    %c0_i32_166 = arith.constant 0 : i32
    %373 = vector.broadcast %c0_i32_166 : i32 to vector<1x256xi32>
    %374 = arith.addi %5, %373 : vector<1x256xi32>
    %c16_i32_167 = arith.constant 16 : i32
    %375 = vector.broadcast %c16_i32_167 : i32 to vector<1x256xi32>
    %376 = arith.cmpi slt, %374, %375 : vector<1x256xi32>
    %377 = arith.andi %372, %376 : vector<1x256xi1>
    %cst_168 = arith.constant 0.000000e+00 : f32
    %378 = vector.shape_cast %377 : vector<1x256xi1> to vector<1x256xi1>
    %379 = vector.broadcast %378 : vector<1x256xi1> to vector<4x256xi1>
    %380 = vector.broadcast %cst_168 : f32 to vector<4x256xf32>
    %381 = arith.select %379, %358, %380 : vector<4x256xi1>, vector<4x256xf32>
    %382 = vector.broadcast %357 : vector<4x1xf32> to vector<4x256xf32>
    %383 = arith.mulf %382, %381 : vector<4x256xf32>
    %384 = arith.addf %355, %383 : vector<4x256xf32>
    %c4_169 = arith.constant 4 : index
    %c0_170 = arith.constant 0 : index
    %c0_171 = arith.constant 0 : index
    %385 = vector.load %arg4[%c4_169, %c0_170, %c0_171] : memref<49x4x1xf32, #tpu.memory_space<vmem>>, vector<1x4x1xf32>
    %386 = vector.shape_cast %385 : vector<1x4x1xf32> to vector<4x1xf32>
    %c47_i32 = arith.constant 47 : i32
    %387 = tpu.dynamic_rotate %267 by %c47_i32 dim 1 : vector<4x256xf32>, i32 -> vector<4x256xf32>
    %c-3_i32_172 = arith.constant -3 : i32
    %388 = vector.broadcast %c-3_i32_172 : i32 to vector<1x256xi32>
    %389 = arith.addi %3, %388 : vector<1x256xi32>
    %c0_i32_173 = arith.constant 0 : i32
    %390 = vector.broadcast %c0_i32_173 : i32 to vector<1x256xi32>
    %391 = arith.cmpi sge, %389, %390 : vector<1x256xi32>
    %c-3_i32_174 = arith.constant -3 : i32
    %392 = vector.broadcast %c-3_i32_174 : i32 to vector<1x256xi32>
    %393 = arith.addi %3, %392 : vector<1x256xi32>
    %c16_i32_175 = arith.constant 16 : i32
    %394 = vector.broadcast %c16_i32_175 : i32 to vector<1x256xi32>
    %395 = arith.cmpi slt, %393, %394 : vector<1x256xi32>
    %396 = arith.andi %391, %395 : vector<1x256xi1>
    %c1_i32_176 = arith.constant 1 : i32
    %397 = vector.broadcast %c1_i32_176 : i32 to vector<1x256xi32>
    %398 = arith.addi %5, %397 : vector<1x256xi32>
    %c0_i32_177 = arith.constant 0 : i32
    %399 = vector.broadcast %c0_i32_177 : i32 to vector<1x256xi32>
    %400 = arith.cmpi sge, %398, %399 : vector<1x256xi32>
    %401 = arith.andi %396, %400 : vector<1x256xi1>
    %c1_i32_178 = arith.constant 1 : i32
    %402 = vector.broadcast %c1_i32_178 : i32 to vector<1x256xi32>
    %403 = arith.addi %5, %402 : vector<1x256xi32>
    %c16_i32_179 = arith.constant 16 : i32
    %404 = vector.broadcast %c16_i32_179 : i32 to vector<1x256xi32>
    %405 = arith.cmpi slt, %403, %404 : vector<1x256xi32>
    %406 = arith.andi %401, %405 : vector<1x256xi1>
    %cst_180 = arith.constant 0.000000e+00 : f32
    %407 = vector.shape_cast %406 : vector<1x256xi1> to vector<1x256xi1>
    %408 = vector.broadcast %407 : vector<1x256xi1> to vector<4x256xi1>
    %409 = vector.broadcast %cst_180 : f32 to vector<4x256xf32>
    %410 = arith.select %408, %387, %409 : vector<4x256xi1>, vector<4x256xf32>
    %411 = vector.broadcast %386 : vector<4x1xf32> to vector<4x256xf32>
    %412 = arith.mulf %411, %410 : vector<4x256xf32>
    %413 = arith.addf %384, %412 : vector<4x256xf32>
    %c5_181 = arith.constant 5 : index
    %c0_182 = arith.constant 0 : index
    %c0_183 = arith.constant 0 : index
    %414 = vector.load %arg4[%c5_181, %c0_182, %c0_183] : memref<49x4x1xf32, #tpu.memory_space<vmem>>, vector<1x4x1xf32>
    %415 = vector.shape_cast %414 : vector<1x4x1xf32> to vector<4x1xf32>
    %c46_i32 = arith.constant 46 : i32
    %416 = tpu.dynamic_rotate %267 by %c46_i32 dim 1 : vector<4x256xf32>, i32 -> vector<4x256xf32>
    %c-3_i32_184 = arith.constant -3 : i32
    %417 = vector.broadcast %c-3_i32_184 : i32 to vector<1x256xi32>
    %418 = arith.addi %3, %417 : vector<1x256xi32>
    %c0_i32_185 = arith.constant 0 : i32
    %419 = vector.broadcast %c0_i32_185 : i32 to vector<1x256xi32>
    %420 = arith.cmpi sge, %418, %419 : vector<1x256xi32>
    %c-3_i32_186 = arith.constant -3 : i32
    %421 = vector.broadcast %c-3_i32_186 : i32 to vector<1x256xi32>
    %422 = arith.addi %3, %421 : vector<1x256xi32>
    %c16_i32_187 = arith.constant 16 : i32
    %423 = vector.broadcast %c16_i32_187 : i32 to vector<1x256xi32>
    %424 = arith.cmpi slt, %422, %423 : vector<1x256xi32>
    %425 = arith.andi %420, %424 : vector<1x256xi1>
    %c2_i32 = arith.constant 2 : i32
    %426 = vector.broadcast %c2_i32 : i32 to vector<1x256xi32>
    %427 = arith.addi %5, %426 : vector<1x256xi32>
    %c0_i32_188 = arith.constant 0 : i32
    %428 = vector.broadcast %c0_i32_188 : i32 to vector<1x256xi32>
    %429 = arith.cmpi sge, %427, %428 : vector<1x256xi32>
    %430 = arith.andi %425, %429 : vector<1x256xi1>
    %c2_i32_189 = arith.constant 2 : i32
    %431 = vector.broadcast %c2_i32_189 : i32 to vector<1x256xi32>
    %432 = arith.addi %5, %431 : vector<1x256xi32>
    %c16_i32_190 = arith.constant 16 : i32
    %433 = vector.broadcast %c16_i32_190 : i32 to vector<1x256xi32>
    %434 = arith.cmpi slt, %432, %433 : vector<1x256xi32>
    %435 = arith.andi %430, %434 : vector<1x256xi1>
    %cst_191 = arith.constant 0.000000e+00 : f32
    %436 = vector.shape_cast %435 : vector<1x256xi1> to vector<1x256xi1>
    %437 = vector.broadcast %436 : vector<1x256xi1> to vector<4x256xi1>
    %438 = vector.broadcast %cst_191 : f32 to vector<4x256xf32>
    %439 = arith.select %437, %416, %438 : vector<4x256xi1>, vector<4x256xf32>
    %440 = vector.broadcast %415 : vector<4x1xf32> to vector<4x256xf32>
    %441 = arith.mulf %440, %439 : vector<4x256xf32>
    %442 = arith.addf %413, %441 : vector<4x256xf32>
    %c6_192 = arith.constant 6 : index
    %c0_193 = arith.constant 0 : index
    %c0_194 = arith.constant 0 : index
    %443 = vector.load %arg4[%c6_192, %c0_193, %c0_194] : memref<49x4x1xf32, #tpu.memory_space<vmem>>, vector<1x4x1xf32>
    %444 = vector.shape_cast %443 : vector<1x4x1xf32> to vector<4x1xf32>
    %c45_i32 = arith.constant 45 : i32
    %445 = tpu.dynamic_rotate %267 by %c45_i32 dim 1 : vector<4x256xf32>, i32 -> vector<4x256xf32>
    %c-3_i32_195 = arith.constant -3 : i32
    %446 = vector.broadcast %c-3_i32_195 : i32 to vector<1x256xi32>
    %447 = arith.addi %3, %446 : vector<1x256xi32>
    %c0_i32_196 = arith.constant 0 : i32
    %448 = vector.broadcast %c0_i32_196 : i32 to vector<1x256xi32>
    %449 = arith.cmpi sge, %447, %448 : vector<1x256xi32>
    %c-3_i32_197 = arith.constant -3 : i32
    %450 = vector.broadcast %c-3_i32_197 : i32 to vector<1x256xi32>
    %451 = arith.addi %3, %450 : vector<1x256xi32>
    %c16_i32_198 = arith.constant 16 : i32
    %452 = vector.broadcast %c16_i32_198 : i32 to vector<1x256xi32>
    %453 = arith.cmpi slt, %451, %452 : vector<1x256xi32>
    %454 = arith.andi %449, %453 : vector<1x256xi1>
    %c3_i32 = arith.constant 3 : i32
    %455 = vector.broadcast %c3_i32 : i32 to vector<1x256xi32>
    %456 = arith.addi %5, %455 : vector<1x256xi32>
    %c0_i32_199 = arith.constant 0 : i32
    %457 = vector.broadcast %c0_i32_199 : i32 to vector<1x256xi32>
    %458 = arith.cmpi sge, %456, %457 : vector<1x256xi32>
    %459 = arith.andi %454, %458 : vector<1x256xi1>
    %c3_i32_200 = arith.constant 3 : i32
    %460 = vector.broadcast %c3_i32_200 : i32 to vector<1x256xi32>
    %461 = arith.addi %5, %460 : vector<1x256xi32>
    %c16_i32_201 = arith.constant 16 : i32
    %462 = vector.broadcast %c16_i32_201 : i32 to vector<1x256xi32>
    %463 = arith.cmpi slt, %461, %462 : vector<1x256xi32>
    %464 = arith.andi %459, %463 : vector<1x256xi1>
    %cst_202 = arith.constant 0.000000e+00 : f32
    %465 = vector.shape_cast %464 : vector<1x256xi1> to vector<1x256xi1>
    %466 = vector.broadcast %465 : vector<1x256xi1> to vector<4x256xi1>
    %467 = vector.broadcast %cst_202 : f32 to vector<4x256xf32>
    %468 = arith.select %466, %445, %467 : vector<4x256xi1>, vector<4x256xf32>
    %469 = vector.broadcast %444 : vector<4x1xf32> to vector<4x256xf32>
    %470 = arith.mulf %469, %468 : vector<4x256xf32>
    %471 = arith.addf %442, %470 : vector<4x256xf32>
    %c7_203 = arith.constant 7 : index
    %c0_204 = arith.constant 0 : index
    %c0_205 = arith.constant 0 : index
    %472 = vector.load %arg4[%c7_203, %c0_204, %c0_205] : memref<49x4x1xf32, #tpu.memory_space<vmem>>, vector<1x4x1xf32>
    %473 = vector.shape_cast %472 : vector<1x4x1xf32> to vector<4x1xf32>
    %c35_i32 = arith.constant 35 : i32
    %474 = tpu.dynamic_rotate %267 by %c35_i32 dim 1 : vector<4x256xf32>, i32 -> vector<4x256xf32>
    %c-2_i32_206 = arith.constant -2 : i32
    %475 = vector.broadcast %c-2_i32_206 : i32 to vector<1x256xi32>
    %476 = arith.addi %3, %475 : vector<1x256xi32>
    %c0_i32_207 = arith.constant 0 : i32
    %477 = vector.broadcast %c0_i32_207 : i32 to vector<1x256xi32>
    %478 = arith.cmpi sge, %476, %477 : vector<1x256xi32>
    %c-2_i32_208 = arith.constant -2 : i32
    %479 = vector.broadcast %c-2_i32_208 : i32 to vector<1x256xi32>
    %480 = arith.addi %3, %479 : vector<1x256xi32>
    %c16_i32_209 = arith.constant 16 : i32
    %481 = vector.broadcast %c16_i32_209 : i32 to vector<1x256xi32>
    %482 = arith.cmpi slt, %480, %481 : vector<1x256xi32>
    %483 = arith.andi %478, %482 : vector<1x256xi1>
    %c-3_i32_210 = arith.constant -3 : i32
    %484 = vector.broadcast %c-3_i32_210 : i32 to vector<1x256xi32>
    %485 = arith.addi %5, %484 : vector<1x256xi32>
    %c0_i32_211 = arith.constant 0 : i32
    %486 = vector.broadcast %c0_i32_211 : i32 to vector<1x256xi32>
    %487 = arith.cmpi sge, %485, %486 : vector<1x256xi32>
    %488 = arith.andi %483, %487 : vector<1x256xi1>
    %c-3_i32_212 = arith.constant -3 : i32
    %489 = vector.broadcast %c-3_i32_212 : i32 to vector<1x256xi32>
    %490 = arith.addi %5, %489 : vector<1x256xi32>
    %c16_i32_213 = arith.constant 16 : i32
    %491 = vector.broadcast %c16_i32_213 : i32 to vector<1x256xi32>
    %492 = arith.cmpi slt, %490, %491 : vector<1x256xi32>
    %493 = arith.andi %488, %492 : vector<1x256xi1>
    %cst_214 = arith.constant 0.000000e+00 : f32
    %494 = vector.shape_cast %493 : vector<1x256xi1> to vector<1x256xi1>
    %495 = vector.broadcast %494 : vector<1x256xi1> to vector<4x256xi1>
    %496 = vector.broadcast %cst_214 : f32 to vector<4x256xf32>
    %497 = arith.select %495, %474, %496 : vector<4x256xi1>, vector<4x256xf32>
    %498 = vector.broadcast %473 : vector<4x1xf32> to vector<4x256xf32>
    %499 = arith.mulf %498, %497 : vector<4x256xf32>
    %500 = arith.addf %471, %499 : vector<4x256xf32>
    %c8_215 = arith.constant 8 : index
    %c0_216 = arith.constant 0 : index
    %c0_217 = arith.constant 0 : index
    %501 = vector.load %arg4[%c8_215, %c0_216, %c0_217] : memref<49x4x1xf32, #tpu.memory_space<vmem>>, vector<1x4x1xf32>
    %502 = vector.shape_cast %501 : vector<1x4x1xf32> to vector<4x1xf32>
    %c34_i32 = arith.constant 34 : i32
    %503 = tpu.dynamic_rotate %267 by %c34_i32 dim 1 : vector<4x256xf32>, i32 -> vector<4x256xf32>
    %c-2_i32_218 = arith.constant -2 : i32
    %504 = vector.broadcast %c-2_i32_218 : i32 to vector<1x256xi32>
    %505 = arith.addi %3, %504 : vector<1x256xi32>
    %c0_i32_219 = arith.constant 0 : i32
    %506 = vector.broadcast %c0_i32_219 : i32 to vector<1x256xi32>
    %507 = arith.cmpi sge, %505, %506 : vector<1x256xi32>
    %c-2_i32_220 = arith.constant -2 : i32
    %508 = vector.broadcast %c-2_i32_220 : i32 to vector<1x256xi32>
    %509 = arith.addi %3, %508 : vector<1x256xi32>
    %c16_i32_221 = arith.constant 16 : i32
    %510 = vector.broadcast %c16_i32_221 : i32 to vector<1x256xi32>
    %511 = arith.cmpi slt, %509, %510 : vector<1x256xi32>
    %512 = arith.andi %507, %511 : vector<1x256xi1>
    %c-2_i32_222 = arith.constant -2 : i32
    %513 = vector.broadcast %c-2_i32_222 : i32 to vector<1x256xi32>
    %514 = arith.addi %5, %513 : vector<1x256xi32>
    %c0_i32_223 = arith.constant 0 : i32
    %515 = vector.broadcast %c0_i32_223 : i32 to vector<1x256xi32>
    %516 = arith.cmpi sge, %514, %515 : vector<1x256xi32>
    %517 = arith.andi %512, %516 : vector<1x256xi1>
    %c-2_i32_224 = arith.constant -2 : i32
    %518 = vector.broadcast %c-2_i32_224 : i32 to vector<1x256xi32>
    %519 = arith.addi %5, %518 : vector<1x256xi32>
    %c16_i32_225 = arith.constant 16 : i32
    %520 = vector.broadcast %c16_i32_225 : i32 to vector<1x256xi32>
    %521 = arith.cmpi slt, %519, %520 : vector<1x256xi32>
    %522 = arith.andi %517, %521 : vector<1x256xi1>
    %cst_226 = arith.constant 0.000000e+00 : f32
    %523 = vector.shape_cast %522 : vector<1x256xi1> to vector<1x256xi1>
    %524 = vector.broadcast %523 : vector<1x256xi1> to vector<4x256xi1>
    %525 = vector.broadcast %cst_226 : f32 to vector<4x256xf32>
    %526 = arith.select %524, %503, %525 : vector<4x256xi1>, vector<4x256xf32>
    %527 = vector.broadcast %502 : vector<4x1xf32> to vector<4x256xf32>
    %528 = arith.mulf %527, %526 : vector<4x256xf32>
    %529 = arith.addf %500, %528 : vector<4x256xf32>
    %c9 = arith.constant 9 : index
    %c0_227 = arith.constant 0 : index
    %c0_228 = arith.constant 0 : index
    %530 = vector.load %arg4[%c9, %c0_227, %c0_228] : memref<49x4x1xf32, #tpu.memory_space<vmem>>, vector<1x4x1xf32>
    %531 = vector.shape_cast %530 : vector<1x4x1xf32> to vector<4x1xf32>
    %c33_i32 = arith.constant 33 : i32
    %532 = tpu.dynamic_rotate %267 by %c33_i32 dim 1 : vector<4x256xf32>, i32 -> vector<4x256xf32>
    %c-2_i32_229 = arith.constant -2 : i32
    %533 = vector.broadcast %c-2_i32_229 : i32 to vector<1x256xi32>
    %534 = arith.addi %3, %533 : vector<1x256xi32>
    %c0_i32_230 = arith.constant 0 : i32
    %535 = vector.broadcast %c0_i32_230 : i32 to vector<1x256xi32>
    %536 = arith.cmpi sge, %534, %535 : vector<1x256xi32>
    %c-2_i32_231 = arith.constant -2 : i32
    %537 = vector.broadcast %c-2_i32_231 : i32 to vector<1x256xi32>
    %538 = arith.addi %3, %537 : vector<1x256xi32>
    %c16_i32_232 = arith.constant 16 : i32
    %539 = vector.broadcast %c16_i32_232 : i32 to vector<1x256xi32>
    %540 = arith.cmpi slt, %538, %539 : vector<1x256xi32>
    %541 = arith.andi %536, %540 : vector<1x256xi1>
    %c-1_i32_233 = arith.constant -1 : i32
    %542 = vector.broadcast %c-1_i32_233 : i32 to vector<1x256xi32>
    %543 = arith.addi %5, %542 : vector<1x256xi32>
    %c0_i32_234 = arith.constant 0 : i32
    %544 = vector.broadcast %c0_i32_234 : i32 to vector<1x256xi32>
    %545 = arith.cmpi sge, %543, %544 : vector<1x256xi32>
    %546 = arith.andi %541, %545 : vector<1x256xi1>
    %c-1_i32_235 = arith.constant -1 : i32
    %547 = vector.broadcast %c-1_i32_235 : i32 to vector<1x256xi32>
    %548 = arith.addi %5, %547 : vector<1x256xi32>
    %c16_i32_236 = arith.constant 16 : i32
    %549 = vector.broadcast %c16_i32_236 : i32 to vector<1x256xi32>
    %550 = arith.cmpi slt, %548, %549 : vector<1x256xi32>
    %551 = arith.andi %546, %550 : vector<1x256xi1>
    %cst_237 = arith.constant 0.000000e+00 : f32
    %552 = vector.shape_cast %551 : vector<1x256xi1> to vector<1x256xi1>
    %553 = vector.broadcast %552 : vector<1x256xi1> to vector<4x256xi1>
    %554 = vector.broadcast %cst_237 : f32 to vector<4x256xf32>
    %555 = arith.select %553, %532, %554 : vector<4x256xi1>, vector<4x256xf32>
    %556 = vector.broadcast %531 : vector<4x1xf32> to vector<4x256xf32>
    %557 = arith.mulf %556, %555 : vector<4x256xf32>
    %558 = arith.addf %529, %557 : vector<4x256xf32>
    %c10 = arith.constant 10 : index
    %c0_238 = arith.constant 0 : index
    %c0_239 = arith.constant 0 : index
    %559 = vector.load %arg4[%c10, %c0_238, %c0_239] : memref<49x4x1xf32, #tpu.memory_space<vmem>>, vector<1x4x1xf32>
    %560 = vector.shape_cast %559 : vector<1x4x1xf32> to vector<4x1xf32>
    %c32_i32 = arith.constant 32 : i32
    %561 = tpu.dynamic_rotate %267 by %c32_i32 dim 1 : vector<4x256xf32>, i32 -> vector<4x256xf32>
    %c-2_i32_240 = arith.constant -2 : i32
    %562 = vector.broadcast %c-2_i32_240 : i32 to vector<1x256xi32>
    %563 = arith.addi %3, %562 : vector<1x256xi32>
    %c0_i32_241 = arith.constant 0 : i32
    %564 = vector.broadcast %c0_i32_241 : i32 to vector<1x256xi32>
    %565 = arith.cmpi sge, %563, %564 : vector<1x256xi32>
    %c-2_i32_242 = arith.constant -2 : i32
    %566 = vector.broadcast %c-2_i32_242 : i32 to vector<1x256xi32>
    %567 = arith.addi %3, %566 : vector<1x256xi32>
    %c16_i32_243 = arith.constant 16 : i32
    %568 = vector.broadcast %c16_i32_243 : i32 to vector<1x256xi32>
    %569 = arith.cmpi slt, %567, %568 : vector<1x256xi32>
    %570 = arith.andi %565, %569 : vector<1x256xi1>
    %c0_i32_244 = arith.constant 0 : i32
    %571 = vector.broadcast %c0_i32_244 : i32 to vector<1x256xi32>
    %572 = arith.addi %5, %571 : vector<1x256xi32>
    %c0_i32_245 = arith.constant 0 : i32
    %573 = vector.broadcast %c0_i32_245 : i32 to vector<1x256xi32>
    %574 = arith.cmpi sge, %572, %573 : vector<1x256xi32>
    %575 = arith.andi %570, %574 : vector<1x256xi1>
    %c0_i32_246 = arith.constant 0 : i32
    %576 = vector.broadcast %c0_i32_246 : i32 to vector<1x256xi32>
    %577 = arith.addi %5, %576 : vector<1x256xi32>
    %c16_i32_247 = arith.constant 16 : i32
    %578 = vector.broadcast %c16_i32_247 : i32 to vector<1x256xi32>
    %579 = arith.cmpi slt, %577, %578 : vector<1x256xi32>
    %580 = arith.andi %575, %579 : vector<1x256xi1>
    %cst_248 = arith.constant 0.000000e+00 : f32
    %581 = vector.shape_cast %580 : vector<1x256xi1> to vector<1x256xi1>
    %582 = vector.broadcast %581 : vector<1x256xi1> to vector<4x256xi1>
    %583 = vector.broadcast %cst_248 : f32 to vector<4x256xf32>
    %584 = arith.select %582, %561, %583 : vector<4x256xi1>, vector<4x256xf32>
    %585 = vector.broadcast %560 : vector<4x1xf32> to vector<4x256xf32>
    %586 = arith.mulf %585, %584 : vector<4x256xf32>
    %587 = arith.addf %558, %586 : vector<4x256xf32>
    %c11 = arith.constant 11 : index
    %c0_249 = arith.constant 0 : index
    %c0_250 = arith.constant 0 : index
    %588 = vector.load %arg4[%c11, %c0_249, %c0_250] : memref<49x4x1xf32, #tpu.memory_space<vmem>>, vector<1x4x1xf32>
    %589 = vector.shape_cast %588 : vector<1x4x1xf32> to vector<4x1xf32>
    %c31_i32 = arith.constant 31 : i32
    %590 = tpu.dynamic_rotate %267 by %c31_i32 dim 1 : vector<4x256xf32>, i32 -> vector<4x256xf32>
    %c-2_i32_251 = arith.constant -2 : i32
    %591 = vector.broadcast %c-2_i32_251 : i32 to vector<1x256xi32>
    %592 = arith.addi %3, %591 : vector<1x256xi32>
    %c0_i32_252 = arith.constant 0 : i32
    %593 = vector.broadcast %c0_i32_252 : i32 to vector<1x256xi32>
    %594 = arith.cmpi sge, %592, %593 : vector<1x256xi32>
    %c-2_i32_253 = arith.constant -2 : i32
    %595 = vector.broadcast %c-2_i32_253 : i32 to vector<1x256xi32>
    %596 = arith.addi %3, %595 : vector<1x256xi32>
    %c16_i32_254 = arith.constant 16 : i32
    %597 = vector.broadcast %c16_i32_254 : i32 to vector<1x256xi32>
    %598 = arith.cmpi slt, %596, %597 : vector<1x256xi32>
    %599 = arith.andi %594, %598 : vector<1x256xi1>
    %c1_i32_255 = arith.constant 1 : i32
    %600 = vector.broadcast %c1_i32_255 : i32 to vector<1x256xi32>
    %601 = arith.addi %5, %600 : vector<1x256xi32>
    %c0_i32_256 = arith.constant 0 : i32
    %602 = vector.broadcast %c0_i32_256 : i32 to vector<1x256xi32>
    %603 = arith.cmpi sge, %601, %602 : vector<1x256xi32>
    %604 = arith.andi %599, %603 : vector<1x256xi1>
    %c1_i32_257 = arith.constant 1 : i32
    %605 = vector.broadcast %c1_i32_257 : i32 to vector<1x256xi32>
    %606 = arith.addi %5, %605 : vector<1x256xi32>
    %c16_i32_258 = arith.constant 16 : i32
    %607 = vector.broadcast %c16_i32_258 : i32 to vector<1x256xi32>
    %608 = arith.cmpi slt, %606, %607 : vector<1x256xi32>
    %609 = arith.andi %604, %608 : vector<1x256xi1>
    %cst_259 = arith.constant 0.000000e+00 : f32
    %610 = vector.shape_cast %609 : vector<1x256xi1> to vector<1x256xi1>
    %611 = vector.broadcast %610 : vector<1x256xi1> to vector<4x256xi1>
    %612 = vector.broadcast %cst_259 : f32 to vector<4x256xf32>
    %613 = arith.select %611, %590, %612 : vector<4x256xi1>, vector<4x256xf32>
    %614 = vector.broadcast %589 : vector<4x1xf32> to vector<4x256xf32>
    %615 = arith.mulf %614, %613 : vector<4x256xf32>
    %616 = arith.addf %587, %615 : vector<4x256xf32>
    %c12 = arith.constant 12 : index
    %c0_260 = arith.constant 0 : index
    %c0_261 = arith.constant 0 : index
    %617 = vector.load %arg4[%c12, %c0_260, %c0_261] : memref<49x4x1xf32, #tpu.memory_space<vmem>>, vector<1x4x1xf32>
    %618 = vector.shape_cast %617 : vector<1x4x1xf32> to vector<4x1xf32>
    %c30_i32 = arith.constant 30 : i32
    %619 = tpu.dynamic_rotate %267 by %c30_i32 dim 1 : vector<4x256xf32>, i32 -> vector<4x256xf32>
    %c-2_i32_262 = arith.constant -2 : i32
    %620 = vector.broadcast %c-2_i32_262 : i32 to vector<1x256xi32>
    %621 = arith.addi %3, %620 : vector<1x256xi32>
    %c0_i32_263 = arith.constant 0 : i32
    %622 = vector.broadcast %c0_i32_263 : i32 to vector<1x256xi32>
    %623 = arith.cmpi sge, %621, %622 : vector<1x256xi32>
    %c-2_i32_264 = arith.constant -2 : i32
    %624 = vector.broadcast %c-2_i32_264 : i32 to vector<1x256xi32>
    %625 = arith.addi %3, %624 : vector<1x256xi32>
    %c16_i32_265 = arith.constant 16 : i32
    %626 = vector.broadcast %c16_i32_265 : i32 to vector<1x256xi32>
    %627 = arith.cmpi slt, %625, %626 : vector<1x256xi32>
    %628 = arith.andi %623, %627 : vector<1x256xi1>
    %c2_i32_266 = arith.constant 2 : i32
    %629 = vector.broadcast %c2_i32_266 : i32 to vector<1x256xi32>
    %630 = arith.addi %5, %629 : vector<1x256xi32>
    %c0_i32_267 = arith.constant 0 : i32
    %631 = vector.broadcast %c0_i32_267 : i32 to vector<1x256xi32>
    %632 = arith.cmpi sge, %630, %631 : vector<1x256xi32>
    %633 = arith.andi %628, %632 : vector<1x256xi1>
    %c2_i32_268 = arith.constant 2 : i32
    %634 = vector.broadcast %c2_i32_268 : i32 to vector<1x256xi32>
    %635 = arith.addi %5, %634 : vector<1x256xi32>
    %c16_i32_269 = arith.constant 16 : i32
    %636 = vector.broadcast %c16_i32_269 : i32 to vector<1x256xi32>
    %637 = arith.cmpi slt, %635, %636 : vector<1x256xi32>
    %638 = arith.andi %633, %637 : vector<1x256xi1>
    %cst_270 = arith.constant 0.000000e+00 : f32
    %639 = vector.shape_cast %638 : vector<1x256xi1> to vector<1x256xi1>
    %640 = vector.broadcast %639 : vector<1x256xi1> to vector<4x256xi1>
    %641 = vector.broadcast %cst_270 : f32 to vector<4x256xf32>
    %642 = arith.select %640, %619, %641 : vector<4x256xi1>, vector<4x256xf32>
    %643 = vector.broadcast %618 : vector<4x1xf32> to vector<4x256xf32>
    %644 = arith.mulf %643, %642 : vector<4x256xf32>
    %645 = arith.addf %616, %644 : vector<4x256xf32>
    %c13 = arith.constant 13 : index
    %c0_271 = arith.constant 0 : index
    %c0_272 = arith.constant 0 : index
    %646 = vector.load %arg4[%c13, %c0_271, %c0_272] : memref<49x4x1xf32, #tpu.memory_space<vmem>>, vector<1x4x1xf32>
    %647 = vector.shape_cast %646 : vector<1x4x1xf32> to vector<4x1xf32>
    %c29_i32 = arith.constant 29 : i32
    %648 = tpu.dynamic_rotate %267 by %c29_i32 dim 1 : vector<4x256xf32>, i32 -> vector<4x256xf32>
    %c-2_i32_273 = arith.constant -2 : i32
    %649 = vector.broadcast %c-2_i32_273 : i32 to vector<1x256xi32>
    %650 = arith.addi %3, %649 : vector<1x256xi32>
    %c0_i32_274 = arith.constant 0 : i32
    %651 = vector.broadcast %c0_i32_274 : i32 to vector<1x256xi32>
    %652 = arith.cmpi sge, %650, %651 : vector<1x256xi32>
    %c-2_i32_275 = arith.constant -2 : i32
    %653 = vector.broadcast %c-2_i32_275 : i32 to vector<1x256xi32>
    %654 = arith.addi %3, %653 : vector<1x256xi32>
    %c16_i32_276 = arith.constant 16 : i32
    %655 = vector.broadcast %c16_i32_276 : i32 to vector<1x256xi32>
    %656 = arith.cmpi slt, %654, %655 : vector<1x256xi32>
    %657 = arith.andi %652, %656 : vector<1x256xi1>
    %c3_i32_277 = arith.constant 3 : i32
    %658 = vector.broadcast %c3_i32_277 : i32 to vector<1x256xi32>
    %659 = arith.addi %5, %658 : vector<1x256xi32>
    %c0_i32_278 = arith.constant 0 : i32
    %660 = vector.broadcast %c0_i32_278 : i32 to vector<1x256xi32>
    %661 = arith.cmpi sge, %659, %660 : vector<1x256xi32>
    %662 = arith.andi %657, %661 : vector<1x256xi1>
    %c3_i32_279 = arith.constant 3 : i32
    %663 = vector.broadcast %c3_i32_279 : i32 to vector<1x256xi32>
    %664 = arith.addi %5, %663 : vector<1x256xi32>
    %c16_i32_280 = arith.constant 16 : i32
    %665 = vector.broadcast %c16_i32_280 : i32 to vector<1x256xi32>
    %666 = arith.cmpi slt, %664, %665 : vector<1x256xi32>
    %667 = arith.andi %662, %666 : vector<1x256xi1>
    %cst_281 = arith.constant 0.000000e+00 : f32
    %668 = vector.shape_cast %667 : vector<1x256xi1> to vector<1x256xi1>
    %669 = vector.broadcast %668 : vector<1x256xi1> to vector<4x256xi1>
    %670 = vector.broadcast %cst_281 : f32 to vector<4x256xf32>
    %671 = arith.select %669, %648, %670 : vector<4x256xi1>, vector<4x256xf32>
    %672 = vector.broadcast %647 : vector<4x1xf32> to vector<4x256xf32>
    %673 = arith.mulf %672, %671 : vector<4x256xf32>
    %674 = arith.addf %645, %673 : vector<4x256xf32>
    %c14 = arith.constant 14 : index
    %c0_282 = arith.constant 0 : index
    %c0_283 = arith.constant 0 : index
    %675 = vector.load %arg4[%c14, %c0_282, %c0_283] : memref<49x4x1xf32, #tpu.memory_space<vmem>>, vector<1x4x1xf32>
    %676 = vector.shape_cast %675 : vector<1x4x1xf32> to vector<4x1xf32>
    %c19_i32 = arith.constant 19 : i32
    %677 = tpu.dynamic_rotate %267 by %c19_i32 dim 1 : vector<4x256xf32>, i32 -> vector<4x256xf32>
    %c-1_i32_284 = arith.constant -1 : i32
    %678 = vector.broadcast %c-1_i32_284 : i32 to vector<1x256xi32>
    %679 = arith.addi %3, %678 : vector<1x256xi32>
    %c0_i32_285 = arith.constant 0 : i32
    %680 = vector.broadcast %c0_i32_285 : i32 to vector<1x256xi32>
    %681 = arith.cmpi sge, %679, %680 : vector<1x256xi32>
    %c-1_i32_286 = arith.constant -1 : i32
    %682 = vector.broadcast %c-1_i32_286 : i32 to vector<1x256xi32>
    %683 = arith.addi %3, %682 : vector<1x256xi32>
    %c16_i32_287 = arith.constant 16 : i32
    %684 = vector.broadcast %c16_i32_287 : i32 to vector<1x256xi32>
    %685 = arith.cmpi slt, %683, %684 : vector<1x256xi32>
    %686 = arith.andi %681, %685 : vector<1x256xi1>
    %c-3_i32_288 = arith.constant -3 : i32
    %687 = vector.broadcast %c-3_i32_288 : i32 to vector<1x256xi32>
    %688 = arith.addi %5, %687 : vector<1x256xi32>
    %c0_i32_289 = arith.constant 0 : i32
    %689 = vector.broadcast %c0_i32_289 : i32 to vector<1x256xi32>
    %690 = arith.cmpi sge, %688, %689 : vector<1x256xi32>
    %691 = arith.andi %686, %690 : vector<1x256xi1>
    %c-3_i32_290 = arith.constant -3 : i32
    %692 = vector.broadcast %c-3_i32_290 : i32 to vector<1x256xi32>
    %693 = arith.addi %5, %692 : vector<1x256xi32>
    %c16_i32_291 = arith.constant 16 : i32
    %694 = vector.broadcast %c16_i32_291 : i32 to vector<1x256xi32>
    %695 = arith.cmpi slt, %693, %694 : vector<1x256xi32>
    %696 = arith.andi %691, %695 : vector<1x256xi1>
    %cst_292 = arith.constant 0.000000e+00 : f32
    %697 = vector.shape_cast %696 : vector<1x256xi1> to vector<1x256xi1>
    %698 = vector.broadcast %697 : vector<1x256xi1> to vector<4x256xi1>
    %699 = vector.broadcast %cst_292 : f32 to vector<4x256xf32>
    %700 = arith.select %698, %677, %699 : vector<4x256xi1>, vector<4x256xf32>
    %701 = vector.broadcast %676 : vector<4x1xf32> to vector<4x256xf32>
    %702 = arith.mulf %701, %700 : vector<4x256xf32>
    %703 = arith.addf %674, %702 : vector<4x256xf32>
    %c15 = arith.constant 15 : index
    %c0_293 = arith.constant 0 : index
    %c0_294 = arith.constant 0 : index
    %704 = vector.load %arg4[%c15, %c0_293, %c0_294] : memref<49x4x1xf32, #tpu.memory_space<vmem>>, vector<1x4x1xf32>
    %705 = vector.shape_cast %704 : vector<1x4x1xf32> to vector<4x1xf32>
    %c18_i32 = arith.constant 18 : i32
    %706 = tpu.dynamic_rotate %267 by %c18_i32 dim 1 : vector<4x256xf32>, i32 -> vector<4x256xf32>
    %c-1_i32_295 = arith.constant -1 : i32
    %707 = vector.broadcast %c-1_i32_295 : i32 to vector<1x256xi32>
    %708 = arith.addi %3, %707 : vector<1x256xi32>
    %c0_i32_296 = arith.constant 0 : i32
    %709 = vector.broadcast %c0_i32_296 : i32 to vector<1x256xi32>
    %710 = arith.cmpi sge, %708, %709 : vector<1x256xi32>
    %c-1_i32_297 = arith.constant -1 : i32
    %711 = vector.broadcast %c-1_i32_297 : i32 to vector<1x256xi32>
    %712 = arith.addi %3, %711 : vector<1x256xi32>
    %c16_i32_298 = arith.constant 16 : i32
    %713 = vector.broadcast %c16_i32_298 : i32 to vector<1x256xi32>
    %714 = arith.cmpi slt, %712, %713 : vector<1x256xi32>
    %715 = arith.andi %710, %714 : vector<1x256xi1>
    %c-2_i32_299 = arith.constant -2 : i32
    %716 = vector.broadcast %c-2_i32_299 : i32 to vector<1x256xi32>
    %717 = arith.addi %5, %716 : vector<1x256xi32>
    %c0_i32_300 = arith.constant 0 : i32
    %718 = vector.broadcast %c0_i32_300 : i32 to vector<1x256xi32>
    %719 = arith.cmpi sge, %717, %718 : vector<1x256xi32>
    %720 = arith.andi %715, %719 : vector<1x256xi1>
    %c-2_i32_301 = arith.constant -2 : i32
    %721 = vector.broadcast %c-2_i32_301 : i32 to vector<1x256xi32>
    %722 = arith.addi %5, %721 : vector<1x256xi32>
    %c16_i32_302 = arith.constant 16 : i32
    %723 = vector.broadcast %c16_i32_302 : i32 to vector<1x256xi32>
    %724 = arith.cmpi slt, %722, %723 : vector<1x256xi32>
    %725 = arith.andi %720, %724 : vector<1x256xi1>
    %cst_303 = arith.constant 0.000000e+00 : f32
    %726 = vector.shape_cast %725 : vector<1x256xi1> to vector<1x256xi1>
    %727 = vector.broadcast %726 : vector<1x256xi1> to vector<4x256xi1>
    %728 = vector.broadcast %cst_303 : f32 to vector<4x256xf32>
    %729 = arith.select %727, %706, %728 : vector<4x256xi1>, vector<4x256xf32>
    %730 = vector.broadcast %705 : vector<4x1xf32> to vector<4x256xf32>
    %731 = arith.mulf %730, %729 : vector<4x256xf32>
    %732 = arith.addf %703, %731 : vector<4x256xf32>
    %c16 = arith.constant 16 : index
    %c0_304 = arith.constant 0 : index
    %c0_305 = arith.constant 0 : index
    %733 = vector.load %arg4[%c16, %c0_304, %c0_305] : memref<49x4x1xf32, #tpu.memory_space<vmem>>, vector<1x4x1xf32>
    %734 = vector.shape_cast %733 : vector<1x4x1xf32> to vector<4x1xf32>
    %c17_i32_306 = arith.constant 17 : i32
    %735 = tpu.dynamic_rotate %267 by %c17_i32_306 dim 1 : vector<4x256xf32>, i32 -> vector<4x256xf32>
    %c-1_i32_307 = arith.constant -1 : i32
    %736 = vector.broadcast %c-1_i32_307 : i32 to vector<1x256xi32>
    %737 = arith.addi %3, %736 : vector<1x256xi32>
    %c0_i32_308 = arith.constant 0 : i32
    %738 = vector.broadcast %c0_i32_308 : i32 to vector<1x256xi32>
    %739 = arith.cmpi sge, %737, %738 : vector<1x256xi32>
    %c-1_i32_309 = arith.constant -1 : i32
    %740 = vector.broadcast %c-1_i32_309 : i32 to vector<1x256xi32>
    %741 = arith.addi %3, %740 : vector<1x256xi32>
    %c16_i32_310 = arith.constant 16 : i32
    %742 = vector.broadcast %c16_i32_310 : i32 to vector<1x256xi32>
    %743 = arith.cmpi slt, %741, %742 : vector<1x256xi32>
    %744 = arith.andi %739, %743 : vector<1x256xi1>
    %c-1_i32_311 = arith.constant -1 : i32
    %745 = vector.broadcast %c-1_i32_311 : i32 to vector<1x256xi32>
    %746 = arith.addi %5, %745 : vector<1x256xi32>
    %c0_i32_312 = arith.constant 0 : i32
    %747 = vector.broadcast %c0_i32_312 : i32 to vector<1x256xi32>
    %748 = arith.cmpi sge, %746, %747 : vector<1x256xi32>
    %749 = arith.andi %744, %748 : vector<1x256xi1>
    %c-1_i32_313 = arith.constant -1 : i32
    %750 = vector.broadcast %c-1_i32_313 : i32 to vector<1x256xi32>
    %751 = arith.addi %5, %750 : vector<1x256xi32>
    %c16_i32_314 = arith.constant 16 : i32
    %752 = vector.broadcast %c16_i32_314 : i32 to vector<1x256xi32>
    %753 = arith.cmpi slt, %751, %752 : vector<1x256xi32>
    %754 = arith.andi %749, %753 : vector<1x256xi1>
    %cst_315 = arith.constant 0.000000e+00 : f32
    %755 = vector.shape_cast %754 : vector<1x256xi1> to vector<1x256xi1>
    %756 = vector.broadcast %755 : vector<1x256xi1> to vector<4x256xi1>
    %757 = vector.broadcast %cst_315 : f32 to vector<4x256xf32>
    %758 = arith.select %756, %735, %757 : vector<4x256xi1>, vector<4x256xf32>
    %759 = vector.broadcast %734 : vector<4x1xf32> to vector<4x256xf32>
    %760 = arith.mulf %759, %758 : vector<4x256xf32>
    %761 = arith.addf %732, %760 : vector<4x256xf32>
    %c17 = arith.constant 17 : index
    %c0_316 = arith.constant 0 : index
    %c0_317 = arith.constant 0 : index
    %762 = vector.load %arg4[%c17, %c0_316, %c0_317] : memref<49x4x1xf32, #tpu.memory_space<vmem>>, vector<1x4x1xf32>
    %763 = vector.shape_cast %762 : vector<1x4x1xf32> to vector<4x1xf32>
    %c16_i32_318 = arith.constant 16 : i32
    %764 = tpu.dynamic_rotate %267 by %c16_i32_318 dim 1 : vector<4x256xf32>, i32 -> vector<4x256xf32>
    %c-1_i32_319 = arith.constant -1 : i32
    %765 = vector.broadcast %c-1_i32_319 : i32 to vector<1x256xi32>
    %766 = arith.addi %3, %765 : vector<1x256xi32>
    %c0_i32_320 = arith.constant 0 : i32
    %767 = vector.broadcast %c0_i32_320 : i32 to vector<1x256xi32>
    %768 = arith.cmpi sge, %766, %767 : vector<1x256xi32>
    %c-1_i32_321 = arith.constant -1 : i32
    %769 = vector.broadcast %c-1_i32_321 : i32 to vector<1x256xi32>
    %770 = arith.addi %3, %769 : vector<1x256xi32>
    %c16_i32_322 = arith.constant 16 : i32
    %771 = vector.broadcast %c16_i32_322 : i32 to vector<1x256xi32>
    %772 = arith.cmpi slt, %770, %771 : vector<1x256xi32>
    %773 = arith.andi %768, %772 : vector<1x256xi1>
    %c0_i32_323 = arith.constant 0 : i32
    %774 = vector.broadcast %c0_i32_323 : i32 to vector<1x256xi32>
    %775 = arith.addi %5, %774 : vector<1x256xi32>
    %c0_i32_324 = arith.constant 0 : i32
    %776 = vector.broadcast %c0_i32_324 : i32 to vector<1x256xi32>
    %777 = arith.cmpi sge, %775, %776 : vector<1x256xi32>
    %778 = arith.andi %773, %777 : vector<1x256xi1>
    %c0_i32_325 = arith.constant 0 : i32
    %779 = vector.broadcast %c0_i32_325 : i32 to vector<1x256xi32>
    %780 = arith.addi %5, %779 : vector<1x256xi32>
    %c16_i32_326 = arith.constant 16 : i32
    %781 = vector.broadcast %c16_i32_326 : i32 to vector<1x256xi32>
    %782 = arith.cmpi slt, %780, %781 : vector<1x256xi32>
    %783 = arith.andi %778, %782 : vector<1x256xi1>
    %cst_327 = arith.constant 0.000000e+00 : f32
    %784 = vector.shape_cast %783 : vector<1x256xi1> to vector<1x256xi1>
    %785 = vector.broadcast %784 : vector<1x256xi1> to vector<4x256xi1>
    %786 = vector.broadcast %cst_327 : f32 to vector<4x256xf32>
    %787 = arith.select %785, %764, %786 : vector<4x256xi1>, vector<4x256xf32>
    %788 = vector.broadcast %763 : vector<4x1xf32> to vector<4x256xf32>
    %789 = arith.mulf %788, %787 : vector<4x256xf32>
    %790 = arith.addf %761, %789 : vector<4x256xf32>
    %c18 = arith.constant 18 : index
    %c0_328 = arith.constant 0 : index
    %c0_329 = arith.constant 0 : index
    %791 = vector.load %arg4[%c18, %c0_328, %c0_329] : memref<49x4x1xf32, #tpu.memory_space<vmem>>, vector<1x4x1xf32>
    %792 = vector.shape_cast %791 : vector<1x4x1xf32> to vector<4x1xf32>
    %c15_i32_330 = arith.constant 15 : i32
    %793 = tpu.dynamic_rotate %267 by %c15_i32_330 dim 1 : vector<4x256xf32>, i32 -> vector<4x256xf32>
    %c-1_i32_331 = arith.constant -1 : i32
    %794 = vector.broadcast %c-1_i32_331 : i32 to vector<1x256xi32>
    %795 = arith.addi %3, %794 : vector<1x256xi32>
    %c0_i32_332 = arith.constant 0 : i32
    %796 = vector.broadcast %c0_i32_332 : i32 to vector<1x256xi32>
    %797 = arith.cmpi sge, %795, %796 : vector<1x256xi32>
    %c-1_i32_333 = arith.constant -1 : i32
    %798 = vector.broadcast %c-1_i32_333 : i32 to vector<1x256xi32>
    %799 = arith.addi %3, %798 : vector<1x256xi32>
    %c16_i32_334 = arith.constant 16 : i32
    %800 = vector.broadcast %c16_i32_334 : i32 to vector<1x256xi32>
    %801 = arith.cmpi slt, %799, %800 : vector<1x256xi32>
    %802 = arith.andi %797, %801 : vector<1x256xi1>
    %c1_i32_335 = arith.constant 1 : i32
    %803 = vector.broadcast %c1_i32_335 : i32 to vector<1x256xi32>
    %804 = arith.addi %5, %803 : vector<1x256xi32>
    %c0_i32_336 = arith.constant 0 : i32
    %805 = vector.broadcast %c0_i32_336 : i32 to vector<1x256xi32>
    %806 = arith.cmpi sge, %804, %805 : vector<1x256xi32>
    %807 = arith.andi %802, %806 : vector<1x256xi1>
    %c1_i32_337 = arith.constant 1 : i32
    %808 = vector.broadcast %c1_i32_337 : i32 to vector<1x256xi32>
    %809 = arith.addi %5, %808 : vector<1x256xi32>
    %c16_i32_338 = arith.constant 16 : i32
    %810 = vector.broadcast %c16_i32_338 : i32 to vector<1x256xi32>
    %811 = arith.cmpi slt, %809, %810 : vector<1x256xi32>
    %812 = arith.andi %807, %811 : vector<1x256xi1>
    %cst_339 = arith.constant 0.000000e+00 : f32
    %813 = vector.shape_cast %812 : vector<1x256xi1> to vector<1x256xi1>
    %814 = vector.broadcast %813 : vector<1x256xi1> to vector<4x256xi1>
    %815 = vector.broadcast %cst_339 : f32 to vector<4x256xf32>
    %816 = arith.select %814, %793, %815 : vector<4x256xi1>, vector<4x256xf32>
    %817 = vector.broadcast %792 : vector<4x1xf32> to vector<4x256xf32>
    %818 = arith.mulf %817, %816 : vector<4x256xf32>
    %819 = arith.addf %790, %818 : vector<4x256xf32>
    %c19 = arith.constant 19 : index
    %c0_340 = arith.constant 0 : index
    %c0_341 = arith.constant 0 : index
    %820 = vector.load %arg4[%c19, %c0_340, %c0_341] : memref<49x4x1xf32, #tpu.memory_space<vmem>>, vector<1x4x1xf32>
    %821 = vector.shape_cast %820 : vector<1x4x1xf32> to vector<4x1xf32>
    %c14_i32 = arith.constant 14 : i32
    %822 = tpu.dynamic_rotate %267 by %c14_i32 dim 1 : vector<4x256xf32>, i32 -> vector<4x256xf32>
    %c-1_i32_342 = arith.constant -1 : i32
    %823 = vector.broadcast %c-1_i32_342 : i32 to vector<1x256xi32>
    %824 = arith.addi %3, %823 : vector<1x256xi32>
    %c0_i32_343 = arith.constant 0 : i32
    %825 = vector.broadcast %c0_i32_343 : i32 to vector<1x256xi32>
    %826 = arith.cmpi sge, %824, %825 : vector<1x256xi32>
    %c-1_i32_344 = arith.constant -1 : i32
    %827 = vector.broadcast %c-1_i32_344 : i32 to vector<1x256xi32>
    %828 = arith.addi %3, %827 : vector<1x256xi32>
    %c16_i32_345 = arith.constant 16 : i32
    %829 = vector.broadcast %c16_i32_345 : i32 to vector<1x256xi32>
    %830 = arith.cmpi slt, %828, %829 : vector<1x256xi32>
    %831 = arith.andi %826, %830 : vector<1x256xi1>
    %c2_i32_346 = arith.constant 2 : i32
    %832 = vector.broadcast %c2_i32_346 : i32 to vector<1x256xi32>
    %833 = arith.addi %5, %832 : vector<1x256xi32>
    %c0_i32_347 = arith.constant 0 : i32
    %834 = vector.broadcast %c0_i32_347 : i32 to vector<1x256xi32>
    %835 = arith.cmpi sge, %833, %834 : vector<1x256xi32>
    %836 = arith.andi %831, %835 : vector<1x256xi1>
    %c2_i32_348 = arith.constant 2 : i32
    %837 = vector.broadcast %c2_i32_348 : i32 to vector<1x256xi32>
    %838 = arith.addi %5, %837 : vector<1x256xi32>
    %c16_i32_349 = arith.constant 16 : i32
    %839 = vector.broadcast %c16_i32_349 : i32 to vector<1x256xi32>
    %840 = arith.cmpi slt, %838, %839 : vector<1x256xi32>
    %841 = arith.andi %836, %840 : vector<1x256xi1>
    %cst_350 = arith.constant 0.000000e+00 : f32
    %842 = vector.shape_cast %841 : vector<1x256xi1> to vector<1x256xi1>
    %843 = vector.broadcast %842 : vector<1x256xi1> to vector<4x256xi1>
    %844 = vector.broadcast %cst_350 : f32 to vector<4x256xf32>
    %845 = arith.select %843, %822, %844 : vector<4x256xi1>, vector<4x256xf32>
    %846 = vector.broadcast %821 : vector<4x1xf32> to vector<4x256xf32>
    %847 = arith.mulf %846, %845 : vector<4x256xf32>
    %848 = arith.addf %819, %847 : vector<4x256xf32>
    %c20 = arith.constant 20 : index
    %c0_351 = arith.constant 0 : index
    %c0_352 = arith.constant 0 : index
    %849 = vector.load %arg4[%c20, %c0_351, %c0_352] : memref<49x4x1xf32, #tpu.memory_space<vmem>>, vector<1x4x1xf32>
    %850 = vector.shape_cast %849 : vector<1x4x1xf32> to vector<4x1xf32>
    %c13_i32 = arith.constant 13 : i32
    %851 = tpu.dynamic_rotate %267 by %c13_i32 dim 1 : vector<4x256xf32>, i32 -> vector<4x256xf32>
    %c-1_i32_353 = arith.constant -1 : i32
    %852 = vector.broadcast %c-1_i32_353 : i32 to vector<1x256xi32>
    %853 = arith.addi %3, %852 : vector<1x256xi32>
    %c0_i32_354 = arith.constant 0 : i32
    %854 = vector.broadcast %c0_i32_354 : i32 to vector<1x256xi32>
    %855 = arith.cmpi sge, %853, %854 : vector<1x256xi32>
    %c-1_i32_355 = arith.constant -1 : i32
    %856 = vector.broadcast %c-1_i32_355 : i32 to vector<1x256xi32>
    %857 = arith.addi %3, %856 : vector<1x256xi32>
    %c16_i32_356 = arith.constant 16 : i32
    %858 = vector.broadcast %c16_i32_356 : i32 to vector<1x256xi32>
    %859 = arith.cmpi slt, %857, %858 : vector<1x256xi32>
    %860 = arith.andi %855, %859 : vector<1x256xi1>
    %c3_i32_357 = arith.constant 3 : i32
    %861 = vector.broadcast %c3_i32_357 : i32 to vector<1x256xi32>
    %862 = arith.addi %5, %861 : vector<1x256xi32>
    %c0_i32_358 = arith.constant 0 : i32
    %863 = vector.broadcast %c0_i32_358 : i32 to vector<1x256xi32>
    %864 = arith.cmpi sge, %862, %863 : vector<1x256xi32>
    %865 = arith.andi %860, %864 : vector<1x256xi1>
    %c3_i32_359 = arith.constant 3 : i32
    %866 = vector.broadcast %c3_i32_359 : i32 to vector<1x256xi32>
    %867 = arith.addi %5, %866 : vector<1x256xi32>
    %c16_i32_360 = arith.constant 16 : i32
    %868 = vector.broadcast %c16_i32_360 : i32 to vector<1x256xi32>
    %869 = arith.cmpi slt, %867, %868 : vector<1x256xi32>
    %870 = arith.andi %865, %869 : vector<1x256xi1>
    %cst_361 = arith.constant 0.000000e+00 : f32
    %871 = vector.shape_cast %870 : vector<1x256xi1> to vector<1x256xi1>
    %872 = vector.broadcast %871 : vector<1x256xi1> to vector<4x256xi1>
    %873 = vector.broadcast %cst_361 : f32 to vector<4x256xf32>
    %874 = arith.select %872, %851, %873 : vector<4x256xi1>, vector<4x256xf32>
    %875 = vector.broadcast %850 : vector<4x1xf32> to vector<4x256xf32>
    %876 = arith.mulf %875, %874 : vector<4x256xf32>
    %877 = arith.addf %848, %876 : vector<4x256xf32>
    %c21 = arith.constant 21 : index
    %c0_362 = arith.constant 0 : index
    %c0_363 = arith.constant 0 : index
    %878 = vector.load %arg4[%c21, %c0_362, %c0_363] : memref<49x4x1xf32, #tpu.memory_space<vmem>>, vector<1x4x1xf32>
    %879 = vector.shape_cast %878 : vector<1x4x1xf32> to vector<4x1xf32>
    %c3_i32_364 = arith.constant 3 : i32
    %880 = tpu.dynamic_rotate %267 by %c3_i32_364 dim 1 : vector<4x256xf32>, i32 -> vector<4x256xf32>
    %c0_i32_365 = arith.constant 0 : i32
    %881 = vector.broadcast %c0_i32_365 : i32 to vector<1x256xi32>
    %882 = arith.addi %3, %881 : vector<1x256xi32>
    %c0_i32_366 = arith.constant 0 : i32
    %883 = vector.broadcast %c0_i32_366 : i32 to vector<1x256xi32>
    %884 = arith.cmpi sge, %882, %883 : vector<1x256xi32>
    %c0_i32_367 = arith.constant 0 : i32
    %885 = vector.broadcast %c0_i32_367 : i32 to vector<1x256xi32>
    %886 = arith.addi %3, %885 : vector<1x256xi32>
    %c16_i32_368 = arith.constant 16 : i32
    %887 = vector.broadcast %c16_i32_368 : i32 to vector<1x256xi32>
    %888 = arith.cmpi slt, %886, %887 : vector<1x256xi32>
    %889 = arith.andi %884, %888 : vector<1x256xi1>
    %c-3_i32_369 = arith.constant -3 : i32
    %890 = vector.broadcast %c-3_i32_369 : i32 to vector<1x256xi32>
    %891 = arith.addi %5, %890 : vector<1x256xi32>
    %c0_i32_370 = arith.constant 0 : i32
    %892 = vector.broadcast %c0_i32_370 : i32 to vector<1x256xi32>
    %893 = arith.cmpi sge, %891, %892 : vector<1x256xi32>
    %894 = arith.andi %889, %893 : vector<1x256xi1>
    %c-3_i32_371 = arith.constant -3 : i32
    %895 = vector.broadcast %c-3_i32_371 : i32 to vector<1x256xi32>
    %896 = arith.addi %5, %895 : vector<1x256xi32>
    %c16_i32_372 = arith.constant 16 : i32
    %897 = vector.broadcast %c16_i32_372 : i32 to vector<1x256xi32>
    %898 = arith.cmpi slt, %896, %897 : vector<1x256xi32>
    %899 = arith.andi %894, %898 : vector<1x256xi1>
    %cst_373 = arith.constant 0.000000e+00 : f32
    %900 = vector.shape_cast %899 : vector<1x256xi1> to vector<1x256xi1>
    %901 = vector.broadcast %900 : vector<1x256xi1> to vector<4x256xi1>
    %902 = vector.broadcast %cst_373 : f32 to vector<4x256xf32>
    %903 = arith.select %901, %880, %902 : vector<4x256xi1>, vector<4x256xf32>
    %904 = vector.broadcast %879 : vector<4x1xf32> to vector<4x256xf32>
    %905 = arith.mulf %904, %903 : vector<4x256xf32>
    %906 = arith.addf %877, %905 : vector<4x256xf32>
    %c22 = arith.constant 22 : index
    %c0_374 = arith.constant 0 : index
    %c0_375 = arith.constant 0 : index
    %907 = vector.load %arg4[%c22, %c0_374, %c0_375] : memref<49x4x1xf32, #tpu.memory_space<vmem>>, vector<1x4x1xf32>
    %908 = vector.shape_cast %907 : vector<1x4x1xf32> to vector<4x1xf32>
    %c2_i32_376 = arith.constant 2 : i32
    %909 = tpu.dynamic_rotate %267 by %c2_i32_376 dim 1 : vector<4x256xf32>, i32 -> vector<4x256xf32>
    %c0_i32_377 = arith.constant 0 : i32
    %910 = vector.broadcast %c0_i32_377 : i32 to vector<1x256xi32>
    %911 = arith.addi %3, %910 : vector<1x256xi32>
    %c0_i32_378 = arith.constant 0 : i32
    %912 = vector.broadcast %c0_i32_378 : i32 to vector<1x256xi32>
    %913 = arith.cmpi sge, %911, %912 : vector<1x256xi32>
    %c0_i32_379 = arith.constant 0 : i32
    %914 = vector.broadcast %c0_i32_379 : i32 to vector<1x256xi32>
    %915 = arith.addi %3, %914 : vector<1x256xi32>
    %c16_i32_380 = arith.constant 16 : i32
    %916 = vector.broadcast %c16_i32_380 : i32 to vector<1x256xi32>
    %917 = arith.cmpi slt, %915, %916 : vector<1x256xi32>
    %918 = arith.andi %913, %917 : vector<1x256xi1>
    %c-2_i32_381 = arith.constant -2 : i32
    %919 = vector.broadcast %c-2_i32_381 : i32 to vector<1x256xi32>
    %920 = arith.addi %5, %919 : vector<1x256xi32>
    %c0_i32_382 = arith.constant 0 : i32
    %921 = vector.broadcast %c0_i32_382 : i32 to vector<1x256xi32>
    %922 = arith.cmpi sge, %920, %921 : vector<1x256xi32>
    %923 = arith.andi %918, %922 : vector<1x256xi1>
    %c-2_i32_383 = arith.constant -2 : i32
    %924 = vector.broadcast %c-2_i32_383 : i32 to vector<1x256xi32>
    %925 = arith.addi %5, %924 : vector<1x256xi32>
    %c16_i32_384 = arith.constant 16 : i32
    %926 = vector.broadcast %c16_i32_384 : i32 to vector<1x256xi32>
    %927 = arith.cmpi slt, %925, %926 : vector<1x256xi32>
    %928 = arith.andi %923, %927 : vector<1x256xi1>
    %cst_385 = arith.constant 0.000000e+00 : f32
    %929 = vector.shape_cast %928 : vector<1x256xi1> to vector<1x256xi1>
    %930 = vector.broadcast %929 : vector<1x256xi1> to vector<4x256xi1>
    %931 = vector.broadcast %cst_385 : f32 to vector<4x256xf32>
    %932 = arith.select %930, %909, %931 : vector<4x256xi1>, vector<4x256xf32>
    %933 = vector.broadcast %908 : vector<4x1xf32> to vector<4x256xf32>
    %934 = arith.mulf %933, %932 : vector<4x256xf32>
    %935 = arith.addf %906, %934 : vector<4x256xf32>
    %c23 = arith.constant 23 : index
    %c0_386 = arith.constant 0 : index
    %c0_387 = arith.constant 0 : index
    %936 = vector.load %arg4[%c23, %c0_386, %c0_387] : memref<49x4x1xf32, #tpu.memory_space<vmem>>, vector<1x4x1xf32>
    %937 = vector.shape_cast %936 : vector<1x4x1xf32> to vector<4x1xf32>
    %c1_i32_388 = arith.constant 1 : i32
    %938 = tpu.dynamic_rotate %267 by %c1_i32_388 dim 1 : vector<4x256xf32>, i32 -> vector<4x256xf32>
    %c0_i32_389 = arith.constant 0 : i32
    %939 = vector.broadcast %c0_i32_389 : i32 to vector<1x256xi32>
    %940 = arith.addi %3, %939 : vector<1x256xi32>
    %c0_i32_390 = arith.constant 0 : i32
    %941 = vector.broadcast %c0_i32_390 : i32 to vector<1x256xi32>
    %942 = arith.cmpi sge, %940, %941 : vector<1x256xi32>
    %c0_i32_391 = arith.constant 0 : i32
    %943 = vector.broadcast %c0_i32_391 : i32 to vector<1x256xi32>
    %944 = arith.addi %3, %943 : vector<1x256xi32>
    %c16_i32_392 = arith.constant 16 : i32
    %945 = vector.broadcast %c16_i32_392 : i32 to vector<1x256xi32>
    %946 = arith.cmpi slt, %944, %945 : vector<1x256xi32>
    %947 = arith.andi %942, %946 : vector<1x256xi1>
    %c-1_i32_393 = arith.constant -1 : i32
    %948 = vector.broadcast %c-1_i32_393 : i32 to vector<1x256xi32>
    %949 = arith.addi %5, %948 : vector<1x256xi32>
    %c0_i32_394 = arith.constant 0 : i32
    %950 = vector.broadcast %c0_i32_394 : i32 to vector<1x256xi32>
    %951 = arith.cmpi sge, %949, %950 : vector<1x256xi32>
    %952 = arith.andi %947, %951 : vector<1x256xi1>
    %c-1_i32_395 = arith.constant -1 : i32
    %953 = vector.broadcast %c-1_i32_395 : i32 to vector<1x256xi32>
    %954 = arith.addi %5, %953 : vector<1x256xi32>
    %c16_i32_396 = arith.constant 16 : i32
    %955 = vector.broadcast %c16_i32_396 : i32 to vector<1x256xi32>
    %956 = arith.cmpi slt, %954, %955 : vector<1x256xi32>
    %957 = arith.andi %952, %956 : vector<1x256xi1>
    %cst_397 = arith.constant 0.000000e+00 : f32
    %958 = vector.shape_cast %957 : vector<1x256xi1> to vector<1x256xi1>
    %959 = vector.broadcast %958 : vector<1x256xi1> to vector<4x256xi1>
    %960 = vector.broadcast %cst_397 : f32 to vector<4x256xf32>
    %961 = arith.select %959, %938, %960 : vector<4x256xi1>, vector<4x256xf32>
    %962 = vector.broadcast %937 : vector<4x1xf32> to vector<4x256xf32>
    %963 = arith.mulf %962, %961 : vector<4x256xf32>
    %964 = arith.addf %935, %963 : vector<4x256xf32>
    %c24 = arith.constant 24 : index
    %c0_398 = arith.constant 0 : index
    %c0_399 = arith.constant 0 : index
    %965 = vector.load %arg4[%c24, %c0_398, %c0_399] : memref<49x4x1xf32, #tpu.memory_space<vmem>>, vector<1x4x1xf32>
    %966 = vector.shape_cast %965 : vector<1x4x1xf32> to vector<4x1xf32>
    %c0_i32_400 = arith.constant 0 : i32
    %967 = vector.broadcast %c0_i32_400 : i32 to vector<1x256xi32>
    %968 = arith.addi %3, %967 : vector<1x256xi32>
    %c0_i32_401 = arith.constant 0 : i32
    %969 = vector.broadcast %c0_i32_401 : i32 to vector<1x256xi32>
    %970 = arith.cmpi sge, %968, %969 : vector<1x256xi32>
    %c0_i32_402 = arith.constant 0 : i32
    %971 = vector.broadcast %c0_i32_402 : i32 to vector<1x256xi32>
    %972 = arith.addi %3, %971 : vector<1x256xi32>
    %c16_i32_403 = arith.constant 16 : i32
    %973 = vector.broadcast %c16_i32_403 : i32 to vector<1x256xi32>
    %974 = arith.cmpi slt, %972, %973 : vector<1x256xi32>
    %975 = arith.andi %970, %974 : vector<1x256xi1>
    %c0_i32_404 = arith.constant 0 : i32
    %976 = vector.broadcast %c0_i32_404 : i32 to vector<1x256xi32>
    %977 = arith.addi %5, %976 : vector<1x256xi32>
    %c0_i32_405 = arith.constant 0 : i32
    %978 = vector.broadcast %c0_i32_405 : i32 to vector<1x256xi32>
    %979 = arith.cmpi sge, %977, %978 : vector<1x256xi32>
    %980 = arith.andi %975, %979 : vector<1x256xi1>
    %c0_i32_406 = arith.constant 0 : i32
    %981 = vector.broadcast %c0_i32_406 : i32 to vector<1x256xi32>
    %982 = arith.addi %5, %981 : vector<1x256xi32>
    %c16_i32_407 = arith.constant 16 : i32
    %983 = vector.broadcast %c16_i32_407 : i32 to vector<1x256xi32>
    %984 = arith.cmpi slt, %982, %983 : vector<1x256xi32>
    %985 = arith.andi %980, %984 : vector<1x256xi1>
    %cst_408 = arith.constant 0.000000e+00 : f32
    %986 = vector.shape_cast %985 : vector<1x256xi1> to vector<1x256xi1>
    %987 = vector.broadcast %986 : vector<1x256xi1> to vector<4x256xi1>
    %988 = vector.broadcast %cst_408 : f32 to vector<4x256xf32>
    %989 = arith.select %987, %267, %988 : vector<4x256xi1>, vector<4x256xf32>
    %990 = vector.broadcast %966 : vector<4x1xf32> to vector<4x256xf32>
    %991 = arith.mulf %990, %989 : vector<4x256xf32>
    %992 = arith.addf %964, %991 : vector<4x256xf32>
    %c25 = arith.constant 25 : index
    %c0_409 = arith.constant 0 : index
    %c0_410 = arith.constant 0 : index
    %993 = vector.load %arg4[%c25, %c0_409, %c0_410] : memref<49x4x1xf32, #tpu.memory_space<vmem>>, vector<1x4x1xf32>
    %994 = vector.shape_cast %993 : vector<1x4x1xf32> to vector<4x1xf32>
    %c255_i32_411 = arith.constant 255 : i32
    %995 = tpu.dynamic_rotate %267 by %c255_i32_411 dim 1 : vector<4x256xf32>, i32 -> vector<4x256xf32>
    %c0_i32_412 = arith.constant 0 : i32
    %996 = vector.broadcast %c0_i32_412 : i32 to vector<1x256xi32>
    %997 = arith.addi %3, %996 : vector<1x256xi32>
    %c0_i32_413 = arith.constant 0 : i32
    %998 = vector.broadcast %c0_i32_413 : i32 to vector<1x256xi32>
    %999 = arith.cmpi sge, %997, %998 : vector<1x256xi32>
    %c0_i32_414 = arith.constant 0 : i32
    %1000 = vector.broadcast %c0_i32_414 : i32 to vector<1x256xi32>
    %1001 = arith.addi %3, %1000 : vector<1x256xi32>
    %c16_i32_415 = arith.constant 16 : i32
    %1002 = vector.broadcast %c16_i32_415 : i32 to vector<1x256xi32>
    %1003 = arith.cmpi slt, %1001, %1002 : vector<1x256xi32>
    %1004 = arith.andi %999, %1003 : vector<1x256xi1>
    %c1_i32_416 = arith.constant 1 : i32
    %1005 = vector.broadcast %c1_i32_416 : i32 to vector<1x256xi32>
    %1006 = arith.addi %5, %1005 : vector<1x256xi32>
    %c0_i32_417 = arith.constant 0 : i32
    %1007 = vector.broadcast %c0_i32_417 : i32 to vector<1x256xi32>
    %1008 = arith.cmpi sge, %1006, %1007 : vector<1x256xi32>
    %1009 = arith.andi %1004, %1008 : vector<1x256xi1>
    %c1_i32_418 = arith.constant 1 : i32
    %1010 = vector.broadcast %c1_i32_418 : i32 to vector<1x256xi32>
    %1011 = arith.addi %5, %1010 : vector<1x256xi32>
    %c16_i32_419 = arith.constant 16 : i32
    %1012 = vector.broadcast %c16_i32_419 : i32 to vector<1x256xi32>
    %1013 = arith.cmpi slt, %1011, %1012 : vector<1x256xi32>
    %1014 = arith.andi %1009, %1013 : vector<1x256xi1>
    %cst_420 = arith.constant 0.000000e+00 : f32
    %1015 = vector.shape_cast %1014 : vector<1x256xi1> to vector<1x256xi1>
    %1016 = vector.broadcast %1015 : vector<1x256xi1> to vector<4x256xi1>
    %1017 = vector.broadcast %cst_420 : f32 to vector<4x256xf32>
    %1018 = arith.select %1016, %995, %1017 : vector<4x256xi1>, vector<4x256xf32>
    %1019 = vector.broadcast %994 : vector<4x1xf32> to vector<4x256xf32>
    %1020 = arith.mulf %1019, %1018 : vector<4x256xf32>
    %1021 = arith.addf %992, %1020 : vector<4x256xf32>
    %c26 = arith.constant 26 : index
    %c0_421 = arith.constant 0 : index
    %c0_422 = arith.constant 0 : index
    %1022 = vector.load %arg4[%c26, %c0_421, %c0_422] : memref<49x4x1xf32, #tpu.memory_space<vmem>>, vector<1x4x1xf32>
    %1023 = vector.shape_cast %1022 : vector<1x4x1xf32> to vector<4x1xf32>
    %c254_i32 = arith.constant 254 : i32
    %1024 = tpu.dynamic_rotate %267 by %c254_i32 dim 1 : vector<4x256xf32>, i32 -> vector<4x256xf32>
    %c0_i32_423 = arith.constant 0 : i32
    %1025 = vector.broadcast %c0_i32_423 : i32 to vector<1x256xi32>
    %1026 = arith.addi %3, %1025 : vector<1x256xi32>
    %c0_i32_424 = arith.constant 0 : i32
    %1027 = vector.broadcast %c0_i32_424 : i32 to vector<1x256xi32>
    %1028 = arith.cmpi sge, %1026, %1027 : vector<1x256xi32>
    %c0_i32_425 = arith.constant 0 : i32
    %1029 = vector.broadcast %c0_i32_425 : i32 to vector<1x256xi32>
    %1030 = arith.addi %3, %1029 : vector<1x256xi32>
    %c16_i32_426 = arith.constant 16 : i32
    %1031 = vector.broadcast %c16_i32_426 : i32 to vector<1x256xi32>
    %1032 = arith.cmpi slt, %1030, %1031 : vector<1x256xi32>
    %1033 = arith.andi %1028, %1032 : vector<1x256xi1>
    %c2_i32_427 = arith.constant 2 : i32
    %1034 = vector.broadcast %c2_i32_427 : i32 to vector<1x256xi32>
    %1035 = arith.addi %5, %1034 : vector<1x256xi32>
    %c0_i32_428 = arith.constant 0 : i32
    %1036 = vector.broadcast %c0_i32_428 : i32 to vector<1x256xi32>
    %1037 = arith.cmpi sge, %1035, %1036 : vector<1x256xi32>
    %1038 = arith.andi %1033, %1037 : vector<1x256xi1>
    %c2_i32_429 = arith.constant 2 : i32
    %1039 = vector.broadcast %c2_i32_429 : i32 to vector<1x256xi32>
    %1040 = arith.addi %5, %1039 : vector<1x256xi32>
    %c16_i32_430 = arith.constant 16 : i32
    %1041 = vector.broadcast %c16_i32_430 : i32 to vector<1x256xi32>
    %1042 = arith.cmpi slt, %1040, %1041 : vector<1x256xi32>
    %1043 = arith.andi %1038, %1042 : vector<1x256xi1>
    %cst_431 = arith.constant 0.000000e+00 : f32
    %1044 = vector.shape_cast %1043 : vector<1x256xi1> to vector<1x256xi1>
    %1045 = vector.broadcast %1044 : vector<1x256xi1> to vector<4x256xi1>
    %1046 = vector.broadcast %cst_431 : f32 to vector<4x256xf32>
    %1047 = arith.select %1045, %1024, %1046 : vector<4x256xi1>, vector<4x256xf32>
    %1048 = vector.broadcast %1023 : vector<4x1xf32> to vector<4x256xf32>
    %1049 = arith.mulf %1048, %1047 : vector<4x256xf32>
    %1050 = arith.addf %1021, %1049 : vector<4x256xf32>
    %c27 = arith.constant 27 : index
    %c0_432 = arith.constant 0 : index
    %c0_433 = arith.constant 0 : index
    %1051 = vector.load %arg4[%c27, %c0_432, %c0_433] : memref<49x4x1xf32, #tpu.memory_space<vmem>>, vector<1x4x1xf32>
    %1052 = vector.shape_cast %1051 : vector<1x4x1xf32> to vector<4x1xf32>
    %c253_i32 = arith.constant 253 : i32
    %1053 = tpu.dynamic_rotate %267 by %c253_i32 dim 1 : vector<4x256xf32>, i32 -> vector<4x256xf32>
    %c0_i32_434 = arith.constant 0 : i32
    %1054 = vector.broadcast %c0_i32_434 : i32 to vector<1x256xi32>
    %1055 = arith.addi %3, %1054 : vector<1x256xi32>
    %c0_i32_435 = arith.constant 0 : i32
    %1056 = vector.broadcast %c0_i32_435 : i32 to vector<1x256xi32>
    %1057 = arith.cmpi sge, %1055, %1056 : vector<1x256xi32>
    %c0_i32_436 = arith.constant 0 : i32
    %1058 = vector.broadcast %c0_i32_436 : i32 to vector<1x256xi32>
    %1059 = arith.addi %3, %1058 : vector<1x256xi32>
    %c16_i32_437 = arith.constant 16 : i32
    %1060 = vector.broadcast %c16_i32_437 : i32 to vector<1x256xi32>
    %1061 = arith.cmpi slt, %1059, %1060 : vector<1x256xi32>
    %1062 = arith.andi %1057, %1061 : vector<1x256xi1>
    %c3_i32_438 = arith.constant 3 : i32
    %1063 = vector.broadcast %c3_i32_438 : i32 to vector<1x256xi32>
    %1064 = arith.addi %5, %1063 : vector<1x256xi32>
    %c0_i32_439 = arith.constant 0 : i32
    %1065 = vector.broadcast %c0_i32_439 : i32 to vector<1x256xi32>
    %1066 = arith.cmpi sge, %1064, %1065 : vector<1x256xi32>
    %1067 = arith.andi %1062, %1066 : vector<1x256xi1>
    %c3_i32_440 = arith.constant 3 : i32
    %1068 = vector.broadcast %c3_i32_440 : i32 to vector<1x256xi32>
    %1069 = arith.addi %5, %1068 : vector<1x256xi32>
    %c16_i32_441 = arith.constant 16 : i32
    %1070 = vector.broadcast %c16_i32_441 : i32 to vector<1x256xi32>
    %1071 = arith.cmpi slt, %1069, %1070 : vector<1x256xi32>
    %1072 = arith.andi %1067, %1071 : vector<1x256xi1>
    %cst_442 = arith.constant 0.000000e+00 : f32
    %1073 = vector.shape_cast %1072 : vector<1x256xi1> to vector<1x256xi1>
    %1074 = vector.broadcast %1073 : vector<1x256xi1> to vector<4x256xi1>
    %1075 = vector.broadcast %cst_442 : f32 to vector<4x256xf32>
    %1076 = arith.select %1074, %1053, %1075 : vector<4x256xi1>, vector<4x256xf32>
    %1077 = vector.broadcast %1052 : vector<4x1xf32> to vector<4x256xf32>
    %1078 = arith.mulf %1077, %1076 : vector<4x256xf32>
    %1079 = arith.addf %1050, %1078 : vector<4x256xf32>
    %c28 = arith.constant 28 : index
    %c0_443 = arith.constant 0 : index
    %c0_444 = arith.constant 0 : index
    %1080 = vector.load %arg4[%c28, %c0_443, %c0_444] : memref<49x4x1xf32, #tpu.memory_space<vmem>>, vector<1x4x1xf32>
    %1081 = vector.shape_cast %1080 : vector<1x4x1xf32> to vector<4x1xf32>
    %c243_i32 = arith.constant 243 : i32
    %1082 = tpu.dynamic_rotate %267 by %c243_i32 dim 1 : vector<4x256xf32>, i32 -> vector<4x256xf32>
    %c1_i32_445 = arith.constant 1 : i32
    %1083 = vector.broadcast %c1_i32_445 : i32 to vector<1x256xi32>
    %1084 = arith.addi %3, %1083 : vector<1x256xi32>
    %c0_i32_446 = arith.constant 0 : i32
    %1085 = vector.broadcast %c0_i32_446 : i32 to vector<1x256xi32>
    %1086 = arith.cmpi sge, %1084, %1085 : vector<1x256xi32>
    %c1_i32_447 = arith.constant 1 : i32
    %1087 = vector.broadcast %c1_i32_447 : i32 to vector<1x256xi32>
    %1088 = arith.addi %3, %1087 : vector<1x256xi32>
    %c16_i32_448 = arith.constant 16 : i32
    %1089 = vector.broadcast %c16_i32_448 : i32 to vector<1x256xi32>
    %1090 = arith.cmpi slt, %1088, %1089 : vector<1x256xi32>
    %1091 = arith.andi %1086, %1090 : vector<1x256xi1>
    %c-3_i32_449 = arith.constant -3 : i32
    %1092 = vector.broadcast %c-3_i32_449 : i32 to vector<1x256xi32>
    %1093 = arith.addi %5, %1092 : vector<1x256xi32>
    %c0_i32_450 = arith.constant 0 : i32
    %1094 = vector.broadcast %c0_i32_450 : i32 to vector<1x256xi32>
    %1095 = arith.cmpi sge, %1093, %1094 : vector<1x256xi32>
    %1096 = arith.andi %1091, %1095 : vector<1x256xi1>
    %c-3_i32_451 = arith.constant -3 : i32
    %1097 = vector.broadcast %c-3_i32_451 : i32 to vector<1x256xi32>
    %1098 = arith.addi %5, %1097 : vector<1x256xi32>
    %c16_i32_452 = arith.constant 16 : i32
    %1099 = vector.broadcast %c16_i32_452 : i32 to vector<1x256xi32>
    %1100 = arith.cmpi slt, %1098, %1099 : vector<1x256xi32>
    %1101 = arith.andi %1096, %1100 : vector<1x256xi1>
    %cst_453 = arith.constant 0.000000e+00 : f32
    %1102 = vector.shape_cast %1101 : vector<1x256xi1> to vector<1x256xi1>
    %1103 = vector.broadcast %1102 : vector<1x256xi1> to vector<4x256xi1>
    %1104 = vector.broadcast %cst_453 : f32 to vector<4x256xf32>
    %1105 = arith.select %1103, %1082, %1104 : vector<4x256xi1>, vector<4x256xf32>
    %1106 = vector.broadcast %1081 : vector<4x1xf32> to vector<4x256xf32>
    %1107 = arith.mulf %1106, %1105 : vector<4x256xf32>
    %1108 = arith.addf %1079, %1107 : vector<4x256xf32>
    %c29 = arith.constant 29 : index
    %c0_454 = arith.constant 0 : index
    %c0_455 = arith.constant 0 : index
    %1109 = vector.load %arg4[%c29, %c0_454, %c0_455] : memref<49x4x1xf32, #tpu.memory_space<vmem>>, vector<1x4x1xf32>
    %1110 = vector.shape_cast %1109 : vector<1x4x1xf32> to vector<4x1xf32>
    %c242_i32 = arith.constant 242 : i32
    %1111 = tpu.dynamic_rotate %267 by %c242_i32 dim 1 : vector<4x256xf32>, i32 -> vector<4x256xf32>
    %c1_i32_456 = arith.constant 1 : i32
    %1112 = vector.broadcast %c1_i32_456 : i32 to vector<1x256xi32>
    %1113 = arith.addi %3, %1112 : vector<1x256xi32>
    %c0_i32_457 = arith.constant 0 : i32
    %1114 = vector.broadcast %c0_i32_457 : i32 to vector<1x256xi32>
    %1115 = arith.cmpi sge, %1113, %1114 : vector<1x256xi32>
    %c1_i32_458 = arith.constant 1 : i32
    %1116 = vector.broadcast %c1_i32_458 : i32 to vector<1x256xi32>
    %1117 = arith.addi %3, %1116 : vector<1x256xi32>
    %c16_i32_459 = arith.constant 16 : i32
    %1118 = vector.broadcast %c16_i32_459 : i32 to vector<1x256xi32>
    %1119 = arith.cmpi slt, %1117, %1118 : vector<1x256xi32>
    %1120 = arith.andi %1115, %1119 : vector<1x256xi1>
    %c-2_i32_460 = arith.constant -2 : i32
    %1121 = vector.broadcast %c-2_i32_460 : i32 to vector<1x256xi32>
    %1122 = arith.addi %5, %1121 : vector<1x256xi32>
    %c0_i32_461 = arith.constant 0 : i32
    %1123 = vector.broadcast %c0_i32_461 : i32 to vector<1x256xi32>
    %1124 = arith.cmpi sge, %1122, %1123 : vector<1x256xi32>
    %1125 = arith.andi %1120, %1124 : vector<1x256xi1>
    %c-2_i32_462 = arith.constant -2 : i32
    %1126 = vector.broadcast %c-2_i32_462 : i32 to vector<1x256xi32>
    %1127 = arith.addi %5, %1126 : vector<1x256xi32>
    %c16_i32_463 = arith.constant 16 : i32
    %1128 = vector.broadcast %c16_i32_463 : i32 to vector<1x256xi32>
    %1129 = arith.cmpi slt, %1127, %1128 : vector<1x256xi32>
    %1130 = arith.andi %1125, %1129 : vector<1x256xi1>
    %cst_464 = arith.constant 0.000000e+00 : f32
    %1131 = vector.shape_cast %1130 : vector<1x256xi1> to vector<1x256xi1>
    %1132 = vector.broadcast %1131 : vector<1x256xi1> to vector<4x256xi1>
    %1133 = vector.broadcast %cst_464 : f32 to vector<4x256xf32>
    %1134 = arith.select %1132, %1111, %1133 : vector<4x256xi1>, vector<4x256xf32>
    %1135 = vector.broadcast %1110 : vector<4x1xf32> to vector<4x256xf32>
    %1136 = arith.mulf %1135, %1134 : vector<4x256xf32>
    %1137 = arith.addf %1108, %1136 : vector<4x256xf32>
    %c30 = arith.constant 30 : index
    %c0_465 = arith.constant 0 : index
    %c0_466 = arith.constant 0 : index
    %1138 = vector.load %arg4[%c30, %c0_465, %c0_466] : memref<49x4x1xf32, #tpu.memory_space<vmem>>, vector<1x4x1xf32>
    %1139 = vector.shape_cast %1138 : vector<1x4x1xf32> to vector<4x1xf32>
    %c241_i32_467 = arith.constant 241 : i32
    %1140 = tpu.dynamic_rotate %267 by %c241_i32_467 dim 1 : vector<4x256xf32>, i32 -> vector<4x256xf32>
    %c1_i32_468 = arith.constant 1 : i32
    %1141 = vector.broadcast %c1_i32_468 : i32 to vector<1x256xi32>
    %1142 = arith.addi %3, %1141 : vector<1x256xi32>
    %c0_i32_469 = arith.constant 0 : i32
    %1143 = vector.broadcast %c0_i32_469 : i32 to vector<1x256xi32>
    %1144 = arith.cmpi sge, %1142, %1143 : vector<1x256xi32>
    %c1_i32_470 = arith.constant 1 : i32
    %1145 = vector.broadcast %c1_i32_470 : i32 to vector<1x256xi32>
    %1146 = arith.addi %3, %1145 : vector<1x256xi32>
    %c16_i32_471 = arith.constant 16 : i32
    %1147 = vector.broadcast %c16_i32_471 : i32 to vector<1x256xi32>
    %1148 = arith.cmpi slt, %1146, %1147 : vector<1x256xi32>
    %1149 = arith.andi %1144, %1148 : vector<1x256xi1>
    %c-1_i32_472 = arith.constant -1 : i32
    %1150 = vector.broadcast %c-1_i32_472 : i32 to vector<1x256xi32>
    %1151 = arith.addi %5, %1150 : vector<1x256xi32>
    %c0_i32_473 = arith.constant 0 : i32
    %1152 = vector.broadcast %c0_i32_473 : i32 to vector<1x256xi32>
    %1153 = arith.cmpi sge, %1151, %1152 : vector<1x256xi32>
    %1154 = arith.andi %1149, %1153 : vector<1x256xi1>
    %c-1_i32_474 = arith.constant -1 : i32
    %1155 = vector.broadcast %c-1_i32_474 : i32 to vector<1x256xi32>
    %1156 = arith.addi %5, %1155 : vector<1x256xi32>
    %c16_i32_475 = arith.constant 16 : i32
    %1157 = vector.broadcast %c16_i32_475 : i32 to vector<1x256xi32>
    %1158 = arith.cmpi slt, %1156, %1157 : vector<1x256xi32>
    %1159 = arith.andi %1154, %1158 : vector<1x256xi1>
    %cst_476 = arith.constant 0.000000e+00 : f32
    %1160 = vector.shape_cast %1159 : vector<1x256xi1> to vector<1x256xi1>
    %1161 = vector.broadcast %1160 : vector<1x256xi1> to vector<4x256xi1>
    %1162 = vector.broadcast %cst_476 : f32 to vector<4x256xf32>
    %1163 = arith.select %1161, %1140, %1162 : vector<4x256xi1>, vector<4x256xf32>
    %1164 = vector.broadcast %1139 : vector<4x1xf32> to vector<4x256xf32>
    %1165 = arith.mulf %1164, %1163 : vector<4x256xf32>
    %1166 = arith.addf %1137, %1165 : vector<4x256xf32>
    %c31 = arith.constant 31 : index
    %c0_477 = arith.constant 0 : index
    %c0_478 = arith.constant 0 : index
    %1167 = vector.load %arg4[%c31, %c0_477, %c0_478] : memref<49x4x1xf32, #tpu.memory_space<vmem>>, vector<1x4x1xf32>
    %1168 = vector.shape_cast %1167 : vector<1x4x1xf32> to vector<4x1xf32>
    %c240_i32_479 = arith.constant 240 : i32
    %1169 = tpu.dynamic_rotate %267 by %c240_i32_479 dim 1 : vector<4x256xf32>, i32 -> vector<4x256xf32>
    %c1_i32_480 = arith.constant 1 : i32
    %1170 = vector.broadcast %c1_i32_480 : i32 to vector<1x256xi32>
    %1171 = arith.addi %3, %1170 : vector<1x256xi32>
    %c0_i32_481 = arith.constant 0 : i32
    %1172 = vector.broadcast %c0_i32_481 : i32 to vector<1x256xi32>
    %1173 = arith.cmpi sge, %1171, %1172 : vector<1x256xi32>
    %c1_i32_482 = arith.constant 1 : i32
    %1174 = vector.broadcast %c1_i32_482 : i32 to vector<1x256xi32>
    %1175 = arith.addi %3, %1174 : vector<1x256xi32>
    %c16_i32_483 = arith.constant 16 : i32
    %1176 = vector.broadcast %c16_i32_483 : i32 to vector<1x256xi32>
    %1177 = arith.cmpi slt, %1175, %1176 : vector<1x256xi32>
    %1178 = arith.andi %1173, %1177 : vector<1x256xi1>
    %c0_i32_484 = arith.constant 0 : i32
    %1179 = vector.broadcast %c0_i32_484 : i32 to vector<1x256xi32>
    %1180 = arith.addi %5, %1179 : vector<1x256xi32>
    %c0_i32_485 = arith.constant 0 : i32
    %1181 = vector.broadcast %c0_i32_485 : i32 to vector<1x256xi32>
    %1182 = arith.cmpi sge, %1180, %1181 : vector<1x256xi32>
    %1183 = arith.andi %1178, %1182 : vector<1x256xi1>
    %c0_i32_486 = arith.constant 0 : i32
    %1184 = vector.broadcast %c0_i32_486 : i32 to vector<1x256xi32>
    %1185 = arith.addi %5, %1184 : vector<1x256xi32>
    %c16_i32_487 = arith.constant 16 : i32
    %1186 = vector.broadcast %c16_i32_487 : i32 to vector<1x256xi32>
    %1187 = arith.cmpi slt, %1185, %1186 : vector<1x256xi32>
    %1188 = arith.andi %1183, %1187 : vector<1x256xi1>
    %cst_488 = arith.constant 0.000000e+00 : f32
    %1189 = vector.shape_cast %1188 : vector<1x256xi1> to vector<1x256xi1>
    %1190 = vector.broadcast %1189 : vector<1x256xi1> to vector<4x256xi1>
    %1191 = vector.broadcast %cst_488 : f32 to vector<4x256xf32>
    %1192 = arith.select %1190, %1169, %1191 : vector<4x256xi1>, vector<4x256xf32>
    %1193 = vector.broadcast %1168 : vector<4x1xf32> to vector<4x256xf32>
    %1194 = arith.mulf %1193, %1192 : vector<4x256xf32>
    %1195 = arith.addf %1166, %1194 : vector<4x256xf32>
    %c32 = arith.constant 32 : index
    %c0_489 = arith.constant 0 : index
    %c0_490 = arith.constant 0 : index
    %1196 = vector.load %arg4[%c32, %c0_489, %c0_490] : memref<49x4x1xf32, #tpu.memory_space<vmem>>, vector<1x4x1xf32>
    %1197 = vector.shape_cast %1196 : vector<1x4x1xf32> to vector<4x1xf32>
    %c239_i32_491 = arith.constant 239 : i32
    %1198 = tpu.dynamic_rotate %267 by %c239_i32_491 dim 1 : vector<4x256xf32>, i32 -> vector<4x256xf32>
    %c1_i32_492 = arith.constant 1 : i32
    %1199 = vector.broadcast %c1_i32_492 : i32 to vector<1x256xi32>
    %1200 = arith.addi %3, %1199 : vector<1x256xi32>
    %c0_i32_493 = arith.constant 0 : i32
    %1201 = vector.broadcast %c0_i32_493 : i32 to vector<1x256xi32>
    %1202 = arith.cmpi sge, %1200, %1201 : vector<1x256xi32>
    %c1_i32_494 = arith.constant 1 : i32
    %1203 = vector.broadcast %c1_i32_494 : i32 to vector<1x256xi32>
    %1204 = arith.addi %3, %1203 : vector<1x256xi32>
    %c16_i32_495 = arith.constant 16 : i32
    %1205 = vector.broadcast %c16_i32_495 : i32 to vector<1x256xi32>
    %1206 = arith.cmpi slt, %1204, %1205 : vector<1x256xi32>
    %1207 = arith.andi %1202, %1206 : vector<1x256xi1>
    %c1_i32_496 = arith.constant 1 : i32
    %1208 = vector.broadcast %c1_i32_496 : i32 to vector<1x256xi32>
    %1209 = arith.addi %5, %1208 : vector<1x256xi32>
    %c0_i32_497 = arith.constant 0 : i32
    %1210 = vector.broadcast %c0_i32_497 : i32 to vector<1x256xi32>
    %1211 = arith.cmpi sge, %1209, %1210 : vector<1x256xi32>
    %1212 = arith.andi %1207, %1211 : vector<1x256xi1>
    %c1_i32_498 = arith.constant 1 : i32
    %1213 = vector.broadcast %c1_i32_498 : i32 to vector<1x256xi32>
    %1214 = arith.addi %5, %1213 : vector<1x256xi32>
    %c16_i32_499 = arith.constant 16 : i32
    %1215 = vector.broadcast %c16_i32_499 : i32 to vector<1x256xi32>
    %1216 = arith.cmpi slt, %1214, %1215 : vector<1x256xi32>
    %1217 = arith.andi %1212, %1216 : vector<1x256xi1>
    %cst_500 = arith.constant 0.000000e+00 : f32
    %1218 = vector.shape_cast %1217 : vector<1x256xi1> to vector<1x256xi1>
    %1219 = vector.broadcast %1218 : vector<1x256xi1> to vector<4x256xi1>
    %1220 = vector.broadcast %cst_500 : f32 to vector<4x256xf32>
    %1221 = arith.select %1219, %1198, %1220 : vector<4x256xi1>, vector<4x256xf32>
    %1222 = vector.broadcast %1197 : vector<4x1xf32> to vector<4x256xf32>
    %1223 = arith.mulf %1222, %1221 : vector<4x256xf32>
    %1224 = arith.addf %1195, %1223 : vector<4x256xf32>
    %c33 = arith.constant 33 : index
    %c0_501 = arith.constant 0 : index
    %c0_502 = arith.constant 0 : index
    %1225 = vector.load %arg4[%c33, %c0_501, %c0_502] : memref<49x4x1xf32, #tpu.memory_space<vmem>>, vector<1x4x1xf32>
    %1226 = vector.shape_cast %1225 : vector<1x4x1xf32> to vector<4x1xf32>
    %c238_i32 = arith.constant 238 : i32
    %1227 = tpu.dynamic_rotate %267 by %c238_i32 dim 1 : vector<4x256xf32>, i32 -> vector<4x256xf32>
    %c1_i32_503 = arith.constant 1 : i32
    %1228 = vector.broadcast %c1_i32_503 : i32 to vector<1x256xi32>
    %1229 = arith.addi %3, %1228 : vector<1x256xi32>
    %c0_i32_504 = arith.constant 0 : i32
    %1230 = vector.broadcast %c0_i32_504 : i32 to vector<1x256xi32>
    %1231 = arith.cmpi sge, %1229, %1230 : vector<1x256xi32>
    %c1_i32_505 = arith.constant 1 : i32
    %1232 = vector.broadcast %c1_i32_505 : i32 to vector<1x256xi32>
    %1233 = arith.addi %3, %1232 : vector<1x256xi32>
    %c16_i32_506 = arith.constant 16 : i32
    %1234 = vector.broadcast %c16_i32_506 : i32 to vector<1x256xi32>
    %1235 = arith.cmpi slt, %1233, %1234 : vector<1x256xi32>
    %1236 = arith.andi %1231, %1235 : vector<1x256xi1>
    %c2_i32_507 = arith.constant 2 : i32
    %1237 = vector.broadcast %c2_i32_507 : i32 to vector<1x256xi32>
    %1238 = arith.addi %5, %1237 : vector<1x256xi32>
    %c0_i32_508 = arith.constant 0 : i32
    %1239 = vector.broadcast %c0_i32_508 : i32 to vector<1x256xi32>
    %1240 = arith.cmpi sge, %1238, %1239 : vector<1x256xi32>
    %1241 = arith.andi %1236, %1240 : vector<1x256xi1>
    %c2_i32_509 = arith.constant 2 : i32
    %1242 = vector.broadcast %c2_i32_509 : i32 to vector<1x256xi32>
    %1243 = arith.addi %5, %1242 : vector<1x256xi32>
    %c16_i32_510 = arith.constant 16 : i32
    %1244 = vector.broadcast %c16_i32_510 : i32 to vector<1x256xi32>
    %1245 = arith.cmpi slt, %1243, %1244 : vector<1x256xi32>
    %1246 = arith.andi %1241, %1245 : vector<1x256xi1>
    %cst_511 = arith.constant 0.000000e+00 : f32
    %1247 = vector.shape_cast %1246 : vector<1x256xi1> to vector<1x256xi1>
    %1248 = vector.broadcast %1247 : vector<1x256xi1> to vector<4x256xi1>
    %1249 = vector.broadcast %cst_511 : f32 to vector<4x256xf32>
    %1250 = arith.select %1248, %1227, %1249 : vector<4x256xi1>, vector<4x256xf32>
    %1251 = vector.broadcast %1226 : vector<4x1xf32> to vector<4x256xf32>
    %1252 = arith.mulf %1251, %1250 : vector<4x256xf32>
    %1253 = arith.addf %1224, %1252 : vector<4x256xf32>
    %c34 = arith.constant 34 : index
    %c0_512 = arith.constant 0 : index
    %c0_513 = arith.constant 0 : index
    %1254 = vector.load %arg4[%c34, %c0_512, %c0_513] : memref<49x4x1xf32, #tpu.memory_space<vmem>>, vector<1x4x1xf32>
    %1255 = vector.shape_cast %1254 : vector<1x4x1xf32> to vector<4x1xf32>
    %c237_i32 = arith.constant 237 : i32
    %1256 = tpu.dynamic_rotate %267 by %c237_i32 dim 1 : vector<4x256xf32>, i32 -> vector<4x256xf32>
    %c1_i32_514 = arith.constant 1 : i32
    %1257 = vector.broadcast %c1_i32_514 : i32 to vector<1x256xi32>
    %1258 = arith.addi %3, %1257 : vector<1x256xi32>
    %c0_i32_515 = arith.constant 0 : i32
    %1259 = vector.broadcast %c0_i32_515 : i32 to vector<1x256xi32>
    %1260 = arith.cmpi sge, %1258, %1259 : vector<1x256xi32>
    %c1_i32_516 = arith.constant 1 : i32
    %1261 = vector.broadcast %c1_i32_516 : i32 to vector<1x256xi32>
    %1262 = arith.addi %3, %1261 : vector<1x256xi32>
    %c16_i32_517 = arith.constant 16 : i32
    %1263 = vector.broadcast %c16_i32_517 : i32 to vector<1x256xi32>
    %1264 = arith.cmpi slt, %1262, %1263 : vector<1x256xi32>
    %1265 = arith.andi %1260, %1264 : vector<1x256xi1>
    %c3_i32_518 = arith.constant 3 : i32
    %1266 = vector.broadcast %c3_i32_518 : i32 to vector<1x256xi32>
    %1267 = arith.addi %5, %1266 : vector<1x256xi32>
    %c0_i32_519 = arith.constant 0 : i32
    %1268 = vector.broadcast %c0_i32_519 : i32 to vector<1x256xi32>
    %1269 = arith.cmpi sge, %1267, %1268 : vector<1x256xi32>
    %1270 = arith.andi %1265, %1269 : vector<1x256xi1>
    %c3_i32_520 = arith.constant 3 : i32
    %1271 = vector.broadcast %c3_i32_520 : i32 to vector<1x256xi32>
    %1272 = arith.addi %5, %1271 : vector<1x256xi32>
    %c16_i32_521 = arith.constant 16 : i32
    %1273 = vector.broadcast %c16_i32_521 : i32 to vector<1x256xi32>
    %1274 = arith.cmpi slt, %1272, %1273 : vector<1x256xi32>
    %1275 = arith.andi %1270, %1274 : vector<1x256xi1>
    %cst_522 = arith.constant 0.000000e+00 : f32
    %1276 = vector.shape_cast %1275 : vector<1x256xi1> to vector<1x256xi1>
    %1277 = vector.broadcast %1276 : vector<1x256xi1> to vector<4x256xi1>
    %1278 = vector.broadcast %cst_522 : f32 to vector<4x256xf32>
    %1279 = arith.select %1277, %1256, %1278 : vector<4x256xi1>, vector<4x256xf32>
    %1280 = vector.broadcast %1255 : vector<4x1xf32> to vector<4x256xf32>
    %1281 = arith.mulf %1280, %1279 : vector<4x256xf32>
    %1282 = arith.addf %1253, %1281 : vector<4x256xf32>
    %c35 = arith.constant 35 : index
    %c0_523 = arith.constant 0 : index
    %c0_524 = arith.constant 0 : index
    %1283 = vector.load %arg4[%c35, %c0_523, %c0_524] : memref<49x4x1xf32, #tpu.memory_space<vmem>>, vector<1x4x1xf32>
    %1284 = vector.shape_cast %1283 : vector<1x4x1xf32> to vector<4x1xf32>
    %c227_i32 = arith.constant 227 : i32
    %1285 = tpu.dynamic_rotate %267 by %c227_i32 dim 1 : vector<4x256xf32>, i32 -> vector<4x256xf32>
    %c2_i32_525 = arith.constant 2 : i32
    %1286 = vector.broadcast %c2_i32_525 : i32 to vector<1x256xi32>
    %1287 = arith.addi %3, %1286 : vector<1x256xi32>
    %c0_i32_526 = arith.constant 0 : i32
    %1288 = vector.broadcast %c0_i32_526 : i32 to vector<1x256xi32>
    %1289 = arith.cmpi sge, %1287, %1288 : vector<1x256xi32>
    %c2_i32_527 = arith.constant 2 : i32
    %1290 = vector.broadcast %c2_i32_527 : i32 to vector<1x256xi32>
    %1291 = arith.addi %3, %1290 : vector<1x256xi32>
    %c16_i32_528 = arith.constant 16 : i32
    %1292 = vector.broadcast %c16_i32_528 : i32 to vector<1x256xi32>
    %1293 = arith.cmpi slt, %1291, %1292 : vector<1x256xi32>
    %1294 = arith.andi %1289, %1293 : vector<1x256xi1>
    %c-3_i32_529 = arith.constant -3 : i32
    %1295 = vector.broadcast %c-3_i32_529 : i32 to vector<1x256xi32>
    %1296 = arith.addi %5, %1295 : vector<1x256xi32>
    %c0_i32_530 = arith.constant 0 : i32
    %1297 = vector.broadcast %c0_i32_530 : i32 to vector<1x256xi32>
    %1298 = arith.cmpi sge, %1296, %1297 : vector<1x256xi32>
    %1299 = arith.andi %1294, %1298 : vector<1x256xi1>
    %c-3_i32_531 = arith.constant -3 : i32
    %1300 = vector.broadcast %c-3_i32_531 : i32 to vector<1x256xi32>
    %1301 = arith.addi %5, %1300 : vector<1x256xi32>
    %c16_i32_532 = arith.constant 16 : i32
    %1302 = vector.broadcast %c16_i32_532 : i32 to vector<1x256xi32>
    %1303 = arith.cmpi slt, %1301, %1302 : vector<1x256xi32>
    %1304 = arith.andi %1299, %1303 : vector<1x256xi1>
    %cst_533 = arith.constant 0.000000e+00 : f32
    %1305 = vector.shape_cast %1304 : vector<1x256xi1> to vector<1x256xi1>
    %1306 = vector.broadcast %1305 : vector<1x256xi1> to vector<4x256xi1>
    %1307 = vector.broadcast %cst_533 : f32 to vector<4x256xf32>
    %1308 = arith.select %1306, %1285, %1307 : vector<4x256xi1>, vector<4x256xf32>
    %1309 = vector.broadcast %1284 : vector<4x1xf32> to vector<4x256xf32>
    %1310 = arith.mulf %1309, %1308 : vector<4x256xf32>
    %1311 = arith.addf %1282, %1310 : vector<4x256xf32>
    %c36 = arith.constant 36 : index
    %c0_534 = arith.constant 0 : index
    %c0_535 = arith.constant 0 : index
    %1312 = vector.load %arg4[%c36, %c0_534, %c0_535] : memref<49x4x1xf32, #tpu.memory_space<vmem>>, vector<1x4x1xf32>
    %1313 = vector.shape_cast %1312 : vector<1x4x1xf32> to vector<4x1xf32>
    %c226_i32 = arith.constant 226 : i32
    %1314 = tpu.dynamic_rotate %267 by %c226_i32 dim 1 : vector<4x256xf32>, i32 -> vector<4x256xf32>
    %c2_i32_536 = arith.constant 2 : i32
    %1315 = vector.broadcast %c2_i32_536 : i32 to vector<1x256xi32>
    %1316 = arith.addi %3, %1315 : vector<1x256xi32>
    %c0_i32_537 = arith.constant 0 : i32
    %1317 = vector.broadcast %c0_i32_537 : i32 to vector<1x256xi32>
    %1318 = arith.cmpi sge, %1316, %1317 : vector<1x256xi32>
    %c2_i32_538 = arith.constant 2 : i32
    %1319 = vector.broadcast %c2_i32_538 : i32 to vector<1x256xi32>
    %1320 = arith.addi %3, %1319 : vector<1x256xi32>
    %c16_i32_539 = arith.constant 16 : i32
    %1321 = vector.broadcast %c16_i32_539 : i32 to vector<1x256xi32>
    %1322 = arith.cmpi slt, %1320, %1321 : vector<1x256xi32>
    %1323 = arith.andi %1318, %1322 : vector<1x256xi1>
    %c-2_i32_540 = arith.constant -2 : i32
    %1324 = vector.broadcast %c-2_i32_540 : i32 to vector<1x256xi32>
    %1325 = arith.addi %5, %1324 : vector<1x256xi32>
    %c0_i32_541 = arith.constant 0 : i32
    %1326 = vector.broadcast %c0_i32_541 : i32 to vector<1x256xi32>
    %1327 = arith.cmpi sge, %1325, %1326 : vector<1x256xi32>
    %1328 = arith.andi %1323, %1327 : vector<1x256xi1>
    %c-2_i32_542 = arith.constant -2 : i32
    %1329 = vector.broadcast %c-2_i32_542 : i32 to vector<1x256xi32>
    %1330 = arith.addi %5, %1329 : vector<1x256xi32>
    %c16_i32_543 = arith.constant 16 : i32
    %1331 = vector.broadcast %c16_i32_543 : i32 to vector<1x256xi32>
    %1332 = arith.cmpi slt, %1330, %1331 : vector<1x256xi32>
    %1333 = arith.andi %1328, %1332 : vector<1x256xi1>
    %cst_544 = arith.constant 0.000000e+00 : f32
    %1334 = vector.shape_cast %1333 : vector<1x256xi1> to vector<1x256xi1>
    %1335 = vector.broadcast %1334 : vector<1x256xi1> to vector<4x256xi1>
    %1336 = vector.broadcast %cst_544 : f32 to vector<4x256xf32>
    %1337 = arith.select %1335, %1314, %1336 : vector<4x256xi1>, vector<4x256xf32>
    %1338 = vector.broadcast %1313 : vector<4x1xf32> to vector<4x256xf32>
    %1339 = arith.mulf %1338, %1337 : vector<4x256xf32>
    %1340 = arith.addf %1311, %1339 : vector<4x256xf32>
    %c37 = arith.constant 37 : index
    %c0_545 = arith.constant 0 : index
    %c0_546 = arith.constant 0 : index
    %1341 = vector.load %arg4[%c37, %c0_545, %c0_546] : memref<49x4x1xf32, #tpu.memory_space<vmem>>, vector<1x4x1xf32>
    %1342 = vector.shape_cast %1341 : vector<1x4x1xf32> to vector<4x1xf32>
    %c225_i32 = arith.constant 225 : i32
    %1343 = tpu.dynamic_rotate %267 by %c225_i32 dim 1 : vector<4x256xf32>, i32 -> vector<4x256xf32>
    %c2_i32_547 = arith.constant 2 : i32
    %1344 = vector.broadcast %c2_i32_547 : i32 to vector<1x256xi32>
    %1345 = arith.addi %3, %1344 : vector<1x256xi32>
    %c0_i32_548 = arith.constant 0 : i32
    %1346 = vector.broadcast %c0_i32_548 : i32 to vector<1x256xi32>
    %1347 = arith.cmpi sge, %1345, %1346 : vector<1x256xi32>
    %c2_i32_549 = arith.constant 2 : i32
    %1348 = vector.broadcast %c2_i32_549 : i32 to vector<1x256xi32>
    %1349 = arith.addi %3, %1348 : vector<1x256xi32>
    %c16_i32_550 = arith.constant 16 : i32
    %1350 = vector.broadcast %c16_i32_550 : i32 to vector<1x256xi32>
    %1351 = arith.cmpi slt, %1349, %1350 : vector<1x256xi32>
    %1352 = arith.andi %1347, %1351 : vector<1x256xi1>
    %c-1_i32_551 = arith.constant -1 : i32
    %1353 = vector.broadcast %c-1_i32_551 : i32 to vector<1x256xi32>
    %1354 = arith.addi %5, %1353 : vector<1x256xi32>
    %c0_i32_552 = arith.constant 0 : i32
    %1355 = vector.broadcast %c0_i32_552 : i32 to vector<1x256xi32>
    %1356 = arith.cmpi sge, %1354, %1355 : vector<1x256xi32>
    %1357 = arith.andi %1352, %1356 : vector<1x256xi1>
    %c-1_i32_553 = arith.constant -1 : i32
    %1358 = vector.broadcast %c-1_i32_553 : i32 to vector<1x256xi32>
    %1359 = arith.addi %5, %1358 : vector<1x256xi32>
    %c16_i32_554 = arith.constant 16 : i32
    %1360 = vector.broadcast %c16_i32_554 : i32 to vector<1x256xi32>
    %1361 = arith.cmpi slt, %1359, %1360 : vector<1x256xi32>
    %1362 = arith.andi %1357, %1361 : vector<1x256xi1>
    %cst_555 = arith.constant 0.000000e+00 : f32
    %1363 = vector.shape_cast %1362 : vector<1x256xi1> to vector<1x256xi1>
    %1364 = vector.broadcast %1363 : vector<1x256xi1> to vector<4x256xi1>
    %1365 = vector.broadcast %cst_555 : f32 to vector<4x256xf32>
    %1366 = arith.select %1364, %1343, %1365 : vector<4x256xi1>, vector<4x256xf32>
    %1367 = vector.broadcast %1342 : vector<4x1xf32> to vector<4x256xf32>
    %1368 = arith.mulf %1367, %1366 : vector<4x256xf32>
    %1369 = arith.addf %1340, %1368 : vector<4x256xf32>
    %c38 = arith.constant 38 : index
    %c0_556 = arith.constant 0 : index
    %c0_557 = arith.constant 0 : index
    %1370 = vector.load %arg4[%c38, %c0_556, %c0_557] : memref<49x4x1xf32, #tpu.memory_space<vmem>>, vector<1x4x1xf32>
    %1371 = vector.shape_cast %1370 : vector<1x4x1xf32> to vector<4x1xf32>
    %c224_i32 = arith.constant 224 : i32
    %1372 = tpu.dynamic_rotate %267 by %c224_i32 dim 1 : vector<4x256xf32>, i32 -> vector<4x256xf32>
    %c2_i32_558 = arith.constant 2 : i32
    %1373 = vector.broadcast %c2_i32_558 : i32 to vector<1x256xi32>
    %1374 = arith.addi %3, %1373 : vector<1x256xi32>
    %c0_i32_559 = arith.constant 0 : i32
    %1375 = vector.broadcast %c0_i32_559 : i32 to vector<1x256xi32>
    %1376 = arith.cmpi sge, %1374, %1375 : vector<1x256xi32>
    %c2_i32_560 = arith.constant 2 : i32
    %1377 = vector.broadcast %c2_i32_560 : i32 to vector<1x256xi32>
    %1378 = arith.addi %3, %1377 : vector<1x256xi32>
    %c16_i32_561 = arith.constant 16 : i32
    %1379 = vector.broadcast %c16_i32_561 : i32 to vector<1x256xi32>
    %1380 = arith.cmpi slt, %1378, %1379 : vector<1x256xi32>
    %1381 = arith.andi %1376, %1380 : vector<1x256xi1>
    %c0_i32_562 = arith.constant 0 : i32
    %1382 = vector.broadcast %c0_i32_562 : i32 to vector<1x256xi32>
    %1383 = arith.addi %5, %1382 : vector<1x256xi32>
    %c0_i32_563 = arith.constant 0 : i32
    %1384 = vector.broadcast %c0_i32_563 : i32 to vector<1x256xi32>
    %1385 = arith.cmpi sge, %1383, %1384 : vector<1x256xi32>
    %1386 = arith.andi %1381, %1385 : vector<1x256xi1>
    %c0_i32_564 = arith.constant 0 : i32
    %1387 = vector.broadcast %c0_i32_564 : i32 to vector<1x256xi32>
    %1388 = arith.addi %5, %1387 : vector<1x256xi32>
    %c16_i32_565 = arith.constant 16 : i32
    %1389 = vector.broadcast %c16_i32_565 : i32 to vector<1x256xi32>
    %1390 = arith.cmpi slt, %1388, %1389 : vector<1x256xi32>
    %1391 = arith.andi %1386, %1390 : vector<1x256xi1>
    %cst_566 = arith.constant 0.000000e+00 : f32
    %1392 = vector.shape_cast %1391 : vector<1x256xi1> to vector<1x256xi1>
    %1393 = vector.broadcast %1392 : vector<1x256xi1> to vector<4x256xi1>
    %1394 = vector.broadcast %cst_566 : f32 to vector<4x256xf32>
    %1395 = arith.select %1393, %1372, %1394 : vector<4x256xi1>, vector<4x256xf32>
    %1396 = vector.broadcast %1371 : vector<4x1xf32> to vector<4x256xf32>
    %1397 = arith.mulf %1396, %1395 : vector<4x256xf32>
    %1398 = arith.addf %1369, %1397 : vector<4x256xf32>
    %c39 = arith.constant 39 : index
    %c0_567 = arith.constant 0 : index
    %c0_568 = arith.constant 0 : index
    %1399 = vector.load %arg4[%c39, %c0_567, %c0_568] : memref<49x4x1xf32, #tpu.memory_space<vmem>>, vector<1x4x1xf32>
    %1400 = vector.shape_cast %1399 : vector<1x4x1xf32> to vector<4x1xf32>
    %c223_i32 = arith.constant 223 : i32
    %1401 = tpu.dynamic_rotate %267 by %c223_i32 dim 1 : vector<4x256xf32>, i32 -> vector<4x256xf32>
    %c2_i32_569 = arith.constant 2 : i32
    %1402 = vector.broadcast %c2_i32_569 : i32 to vector<1x256xi32>
    %1403 = arith.addi %3, %1402 : vector<1x256xi32>
    %c0_i32_570 = arith.constant 0 : i32
    %1404 = vector.broadcast %c0_i32_570 : i32 to vector<1x256xi32>
    %1405 = arith.cmpi sge, %1403, %1404 : vector<1x256xi32>
    %c2_i32_571 = arith.constant 2 : i32
    %1406 = vector.broadcast %c2_i32_571 : i32 to vector<1x256xi32>
    %1407 = arith.addi %3, %1406 : vector<1x256xi32>
    %c16_i32_572 = arith.constant 16 : i32
    %1408 = vector.broadcast %c16_i32_572 : i32 to vector<1x256xi32>
    %1409 = arith.cmpi slt, %1407, %1408 : vector<1x256xi32>
    %1410 = arith.andi %1405, %1409 : vector<1x256xi1>
    %c1_i32_573 = arith.constant 1 : i32
    %1411 = vector.broadcast %c1_i32_573 : i32 to vector<1x256xi32>
    %1412 = arith.addi %5, %1411 : vector<1x256xi32>
    %c0_i32_574 = arith.constant 0 : i32
    %1413 = vector.broadcast %c0_i32_574 : i32 to vector<1x256xi32>
    %1414 = arith.cmpi sge, %1412, %1413 : vector<1x256xi32>
    %1415 = arith.andi %1410, %1414 : vector<1x256xi1>
    %c1_i32_575 = arith.constant 1 : i32
    %1416 = vector.broadcast %c1_i32_575 : i32 to vector<1x256xi32>
    %1417 = arith.addi %5, %1416 : vector<1x256xi32>
    %c16_i32_576 = arith.constant 16 : i32
    %1418 = vector.broadcast %c16_i32_576 : i32 to vector<1x256xi32>
    %1419 = arith.cmpi slt, %1417, %1418 : vector<1x256xi32>
    %1420 = arith.andi %1415, %1419 : vector<1x256xi1>
    %cst_577 = arith.constant 0.000000e+00 : f32
    %1421 = vector.shape_cast %1420 : vector<1x256xi1> to vector<1x256xi1>
    %1422 = vector.broadcast %1421 : vector<1x256xi1> to vector<4x256xi1>
    %1423 = vector.broadcast %cst_577 : f32 to vector<4x256xf32>
    %1424 = arith.select %1422, %1401, %1423 : vector<4x256xi1>, vector<4x256xf32>
    %1425 = vector.broadcast %1400 : vector<4x1xf32> to vector<4x256xf32>
    %1426 = arith.mulf %1425, %1424 : vector<4x256xf32>
    %1427 = arith.addf %1398, %1426 : vector<4x256xf32>
    %c40 = arith.constant 40 : index
    %c0_578 = arith.constant 0 : index
    %c0_579 = arith.constant 0 : index
    %1428 = vector.load %arg4[%c40, %c0_578, %c0_579] : memref<49x4x1xf32, #tpu.memory_space<vmem>>, vector<1x4x1xf32>
    %1429 = vector.shape_cast %1428 : vector<1x4x1xf32> to vector<4x1xf32>
    %c222_i32 = arith.constant 222 : i32
    %1430 = tpu.dynamic_rotate %267 by %c222_i32 dim 1 : vector<4x256xf32>, i32 -> vector<4x256xf32>
    %c2_i32_580 = arith.constant 2 : i32
    %1431 = vector.broadcast %c2_i32_580 : i32 to vector<1x256xi32>
    %1432 = arith.addi %3, %1431 : vector<1x256xi32>
    %c0_i32_581 = arith.constant 0 : i32
    %1433 = vector.broadcast %c0_i32_581 : i32 to vector<1x256xi32>
    %1434 = arith.cmpi sge, %1432, %1433 : vector<1x256xi32>
    %c2_i32_582 = arith.constant 2 : i32
    %1435 = vector.broadcast %c2_i32_582 : i32 to vector<1x256xi32>
    %1436 = arith.addi %3, %1435 : vector<1x256xi32>
    %c16_i32_583 = arith.constant 16 : i32
    %1437 = vector.broadcast %c16_i32_583 : i32 to vector<1x256xi32>
    %1438 = arith.cmpi slt, %1436, %1437 : vector<1x256xi32>
    %1439 = arith.andi %1434, %1438 : vector<1x256xi1>
    %c2_i32_584 = arith.constant 2 : i32
    %1440 = vector.broadcast %c2_i32_584 : i32 to vector<1x256xi32>
    %1441 = arith.addi %5, %1440 : vector<1x256xi32>
    %c0_i32_585 = arith.constant 0 : i32
    %1442 = vector.broadcast %c0_i32_585 : i32 to vector<1x256xi32>
    %1443 = arith.cmpi sge, %1441, %1442 : vector<1x256xi32>
    %1444 = arith.andi %1439, %1443 : vector<1x256xi1>
    %c2_i32_586 = arith.constant 2 : i32
    %1445 = vector.broadcast %c2_i32_586 : i32 to vector<1x256xi32>
    %1446 = arith.addi %5, %1445 : vector<1x256xi32>
    %c16_i32_587 = arith.constant 16 : i32
    %1447 = vector.broadcast %c16_i32_587 : i32 to vector<1x256xi32>
    %1448 = arith.cmpi slt, %1446, %1447 : vector<1x256xi32>
    %1449 = arith.andi %1444, %1448 : vector<1x256xi1>
    %cst_588 = arith.constant 0.000000e+00 : f32
    %1450 = vector.shape_cast %1449 : vector<1x256xi1> to vector<1x256xi1>
    %1451 = vector.broadcast %1450 : vector<1x256xi1> to vector<4x256xi1>
    %1452 = vector.broadcast %cst_588 : f32 to vector<4x256xf32>
    %1453 = arith.select %1451, %1430, %1452 : vector<4x256xi1>, vector<4x256xf32>
    %1454 = vector.broadcast %1429 : vector<4x1xf32> to vector<4x256xf32>
    %1455 = arith.mulf %1454, %1453 : vector<4x256xf32>
    %1456 = arith.addf %1427, %1455 : vector<4x256xf32>
    %c41 = arith.constant 41 : index
    %c0_589 = arith.constant 0 : index
    %c0_590 = arith.constant 0 : index
    %1457 = vector.load %arg4[%c41, %c0_589, %c0_590] : memref<49x4x1xf32, #tpu.memory_space<vmem>>, vector<1x4x1xf32>
    %1458 = vector.shape_cast %1457 : vector<1x4x1xf32> to vector<4x1xf32>
    %c221_i32 = arith.constant 221 : i32
    %1459 = tpu.dynamic_rotate %267 by %c221_i32 dim 1 : vector<4x256xf32>, i32 -> vector<4x256xf32>
    %c2_i32_591 = arith.constant 2 : i32
    %1460 = vector.broadcast %c2_i32_591 : i32 to vector<1x256xi32>
    %1461 = arith.addi %3, %1460 : vector<1x256xi32>
    %c0_i32_592 = arith.constant 0 : i32
    %1462 = vector.broadcast %c0_i32_592 : i32 to vector<1x256xi32>
    %1463 = arith.cmpi sge, %1461, %1462 : vector<1x256xi32>
    %c2_i32_593 = arith.constant 2 : i32
    %1464 = vector.broadcast %c2_i32_593 : i32 to vector<1x256xi32>
    %1465 = arith.addi %3, %1464 : vector<1x256xi32>
    %c16_i32_594 = arith.constant 16 : i32
    %1466 = vector.broadcast %c16_i32_594 : i32 to vector<1x256xi32>
    %1467 = arith.cmpi slt, %1465, %1466 : vector<1x256xi32>
    %1468 = arith.andi %1463, %1467 : vector<1x256xi1>
    %c3_i32_595 = arith.constant 3 : i32
    %1469 = vector.broadcast %c3_i32_595 : i32 to vector<1x256xi32>
    %1470 = arith.addi %5, %1469 : vector<1x256xi32>
    %c0_i32_596 = arith.constant 0 : i32
    %1471 = vector.broadcast %c0_i32_596 : i32 to vector<1x256xi32>
    %1472 = arith.cmpi sge, %1470, %1471 : vector<1x256xi32>
    %1473 = arith.andi %1468, %1472 : vector<1x256xi1>
    %c3_i32_597 = arith.constant 3 : i32
    %1474 = vector.broadcast %c3_i32_597 : i32 to vector<1x256xi32>
    %1475 = arith.addi %5, %1474 : vector<1x256xi32>
    %c16_i32_598 = arith.constant 16 : i32
    %1476 = vector.broadcast %c16_i32_598 : i32 to vector<1x256xi32>
    %1477 = arith.cmpi slt, %1475, %1476 : vector<1x256xi32>
    %1478 = arith.andi %1473, %1477 : vector<1x256xi1>
    %cst_599 = arith.constant 0.000000e+00 : f32
    %1479 = vector.shape_cast %1478 : vector<1x256xi1> to vector<1x256xi1>
    %1480 = vector.broadcast %1479 : vector<1x256xi1> to vector<4x256xi1>
    %1481 = vector.broadcast %cst_599 : f32 to vector<4x256xf32>
    %1482 = arith.select %1480, %1459, %1481 : vector<4x256xi1>, vector<4x256xf32>
    %1483 = vector.broadcast %1458 : vector<4x1xf32> to vector<4x256xf32>
    %1484 = arith.mulf %1483, %1482 : vector<4x256xf32>
    %1485 = arith.addf %1456, %1484 : vector<4x256xf32>
    %c42 = arith.constant 42 : index
    %c0_600 = arith.constant 0 : index
    %c0_601 = arith.constant 0 : index
    %1486 = vector.load %arg4[%c42, %c0_600, %c0_601] : memref<49x4x1xf32, #tpu.memory_space<vmem>>, vector<1x4x1xf32>
    %1487 = vector.shape_cast %1486 : vector<1x4x1xf32> to vector<4x1xf32>
    %c211_i32 = arith.constant 211 : i32
    %1488 = tpu.dynamic_rotate %267 by %c211_i32 dim 1 : vector<4x256xf32>, i32 -> vector<4x256xf32>
    %c3_i32_602 = arith.constant 3 : i32
    %1489 = vector.broadcast %c3_i32_602 : i32 to vector<1x256xi32>
    %1490 = arith.addi %3, %1489 : vector<1x256xi32>
    %c0_i32_603 = arith.constant 0 : i32
    %1491 = vector.broadcast %c0_i32_603 : i32 to vector<1x256xi32>
    %1492 = arith.cmpi sge, %1490, %1491 : vector<1x256xi32>
    %c3_i32_604 = arith.constant 3 : i32
    %1493 = vector.broadcast %c3_i32_604 : i32 to vector<1x256xi32>
    %1494 = arith.addi %3, %1493 : vector<1x256xi32>
    %c16_i32_605 = arith.constant 16 : i32
    %1495 = vector.broadcast %c16_i32_605 : i32 to vector<1x256xi32>
    %1496 = arith.cmpi slt, %1494, %1495 : vector<1x256xi32>
    %1497 = arith.andi %1492, %1496 : vector<1x256xi1>
    %c-3_i32_606 = arith.constant -3 : i32
    %1498 = vector.broadcast %c-3_i32_606 : i32 to vector<1x256xi32>
    %1499 = arith.addi %5, %1498 : vector<1x256xi32>
    %c0_i32_607 = arith.constant 0 : i32
    %1500 = vector.broadcast %c0_i32_607 : i32 to vector<1x256xi32>
    %1501 = arith.cmpi sge, %1499, %1500 : vector<1x256xi32>
    %1502 = arith.andi %1497, %1501 : vector<1x256xi1>
    %c-3_i32_608 = arith.constant -3 : i32
    %1503 = vector.broadcast %c-3_i32_608 : i32 to vector<1x256xi32>
    %1504 = arith.addi %5, %1503 : vector<1x256xi32>
    %c16_i32_609 = arith.constant 16 : i32
    %1505 = vector.broadcast %c16_i32_609 : i32 to vector<1x256xi32>
    %1506 = arith.cmpi slt, %1504, %1505 : vector<1x256xi32>
    %1507 = arith.andi %1502, %1506 : vector<1x256xi1>
    %cst_610 = arith.constant 0.000000e+00 : f32
    %1508 = vector.shape_cast %1507 : vector<1x256xi1> to vector<1x256xi1>
    %1509 = vector.broadcast %1508 : vector<1x256xi1> to vector<4x256xi1>
    %1510 = vector.broadcast %cst_610 : f32 to vector<4x256xf32>
    %1511 = arith.select %1509, %1488, %1510 : vector<4x256xi1>, vector<4x256xf32>
    %1512 = vector.broadcast %1487 : vector<4x1xf32> to vector<4x256xf32>
    %1513 = arith.mulf %1512, %1511 : vector<4x256xf32>
    %1514 = arith.addf %1485, %1513 : vector<4x256xf32>
    %c43 = arith.constant 43 : index
    %c0_611 = arith.constant 0 : index
    %c0_612 = arith.constant 0 : index
    %1515 = vector.load %arg4[%c43, %c0_611, %c0_612] : memref<49x4x1xf32, #tpu.memory_space<vmem>>, vector<1x4x1xf32>
    %1516 = vector.shape_cast %1515 : vector<1x4x1xf32> to vector<4x1xf32>
    %c210_i32 = arith.constant 210 : i32
    %1517 = tpu.dynamic_rotate %267 by %c210_i32 dim 1 : vector<4x256xf32>, i32 -> vector<4x256xf32>
    %c3_i32_613 = arith.constant 3 : i32
    %1518 = vector.broadcast %c3_i32_613 : i32 to vector<1x256xi32>
    %1519 = arith.addi %3, %1518 : vector<1x256xi32>
    %c0_i32_614 = arith.constant 0 : i32
    %1520 = vector.broadcast %c0_i32_614 : i32 to vector<1x256xi32>
    %1521 = arith.cmpi sge, %1519, %1520 : vector<1x256xi32>
    %c3_i32_615 = arith.constant 3 : i32
    %1522 = vector.broadcast %c3_i32_615 : i32 to vector<1x256xi32>
    %1523 = arith.addi %3, %1522 : vector<1x256xi32>
    %c16_i32_616 = arith.constant 16 : i32
    %1524 = vector.broadcast %c16_i32_616 : i32 to vector<1x256xi32>
    %1525 = arith.cmpi slt, %1523, %1524 : vector<1x256xi32>
    %1526 = arith.andi %1521, %1525 : vector<1x256xi1>
    %c-2_i32_617 = arith.constant -2 : i32
    %1527 = vector.broadcast %c-2_i32_617 : i32 to vector<1x256xi32>
    %1528 = arith.addi %5, %1527 : vector<1x256xi32>
    %c0_i32_618 = arith.constant 0 : i32
    %1529 = vector.broadcast %c0_i32_618 : i32 to vector<1x256xi32>
    %1530 = arith.cmpi sge, %1528, %1529 : vector<1x256xi32>
    %1531 = arith.andi %1526, %1530 : vector<1x256xi1>
    %c-2_i32_619 = arith.constant -2 : i32
    %1532 = vector.broadcast %c-2_i32_619 : i32 to vector<1x256xi32>
    %1533 = arith.addi %5, %1532 : vector<1x256xi32>
    %c16_i32_620 = arith.constant 16 : i32
    %1534 = vector.broadcast %c16_i32_620 : i32 to vector<1x256xi32>
    %1535 = arith.cmpi slt, %1533, %1534 : vector<1x256xi32>
    %1536 = arith.andi %1531, %1535 : vector<1x256xi1>
    %cst_621 = arith.constant 0.000000e+00 : f32
    %1537 = vector.shape_cast %1536 : vector<1x256xi1> to vector<1x256xi1>
    %1538 = vector.broadcast %1537 : vector<1x256xi1> to vector<4x256xi1>
    %1539 = vector.broadcast %cst_621 : f32 to vector<4x256xf32>
    %1540 = arith.select %1538, %1517, %1539 : vector<4x256xi1>, vector<4x256xf32>
    %1541 = vector.broadcast %1516 : vector<4x1xf32> to vector<4x256xf32>
    %1542 = arith.mulf %1541, %1540 : vector<4x256xf32>
    %1543 = arith.addf %1514, %1542 : vector<4x256xf32>
    %c44 = arith.constant 44 : index
    %c0_622 = arith.constant 0 : index
    %c0_623 = arith.constant 0 : index
    %1544 = vector.load %arg4[%c44, %c0_622, %c0_623] : memref<49x4x1xf32, #tpu.memory_space<vmem>>, vector<1x4x1xf32>
    %1545 = vector.shape_cast %1544 : vector<1x4x1xf32> to vector<4x1xf32>
    %c209_i32 = arith.constant 209 : i32
    %1546 = tpu.dynamic_rotate %267 by %c209_i32 dim 1 : vector<4x256xf32>, i32 -> vector<4x256xf32>
    %c3_i32_624 = arith.constant 3 : i32
    %1547 = vector.broadcast %c3_i32_624 : i32 to vector<1x256xi32>
    %1548 = arith.addi %3, %1547 : vector<1x256xi32>
    %c0_i32_625 = arith.constant 0 : i32
    %1549 = vector.broadcast %c0_i32_625 : i32 to vector<1x256xi32>
    %1550 = arith.cmpi sge, %1548, %1549 : vector<1x256xi32>
    %c3_i32_626 = arith.constant 3 : i32
    %1551 = vector.broadcast %c3_i32_626 : i32 to vector<1x256xi32>
    %1552 = arith.addi %3, %1551 : vector<1x256xi32>
    %c16_i32_627 = arith.constant 16 : i32
    %1553 = vector.broadcast %c16_i32_627 : i32 to vector<1x256xi32>
    %1554 = arith.cmpi slt, %1552, %1553 : vector<1x256xi32>
    %1555 = arith.andi %1550, %1554 : vector<1x256xi1>
    %c-1_i32_628 = arith.constant -1 : i32
    %1556 = vector.broadcast %c-1_i32_628 : i32 to vector<1x256xi32>
    %1557 = arith.addi %5, %1556 : vector<1x256xi32>
    %c0_i32_629 = arith.constant 0 : i32
    %1558 = vector.broadcast %c0_i32_629 : i32 to vector<1x256xi32>
    %1559 = arith.cmpi sge, %1557, %1558 : vector<1x256xi32>
    %1560 = arith.andi %1555, %1559 : vector<1x256xi1>
    %c-1_i32_630 = arith.constant -1 : i32
    %1561 = vector.broadcast %c-1_i32_630 : i32 to vector<1x256xi32>
    %1562 = arith.addi %5, %1561 : vector<1x256xi32>
    %c16_i32_631 = arith.constant 16 : i32
    %1563 = vector.broadcast %c16_i32_631 : i32 to vector<1x256xi32>
    %1564 = arith.cmpi slt, %1562, %1563 : vector<1x256xi32>
    %1565 = arith.andi %1560, %1564 : vector<1x256xi1>
    %cst_632 = arith.constant 0.000000e+00 : f32
    %1566 = vector.shape_cast %1565 : vector<1x256xi1> to vector<1x256xi1>
    %1567 = vector.broadcast %1566 : vector<1x256xi1> to vector<4x256xi1>
    %1568 = vector.broadcast %cst_632 : f32 to vector<4x256xf32>
    %1569 = arith.select %1567, %1546, %1568 : vector<4x256xi1>, vector<4x256xf32>
    %1570 = vector.broadcast %1545 : vector<4x1xf32> to vector<4x256xf32>
    %1571 = arith.mulf %1570, %1569 : vector<4x256xf32>
    %1572 = arith.addf %1543, %1571 : vector<4x256xf32>
    %c45 = arith.constant 45 : index
    %c0_633 = arith.constant 0 : index
    %c0_634 = arith.constant 0 : index
    %1573 = vector.load %arg4[%c45, %c0_633, %c0_634] : memref<49x4x1xf32, #tpu.memory_space<vmem>>, vector<1x4x1xf32>
    %1574 = vector.shape_cast %1573 : vector<1x4x1xf32> to vector<4x1xf32>
    %c208_i32 = arith.constant 208 : i32
    %1575 = tpu.dynamic_rotate %267 by %c208_i32 dim 1 : vector<4x256xf32>, i32 -> vector<4x256xf32>
    %c3_i32_635 = arith.constant 3 : i32
    %1576 = vector.broadcast %c3_i32_635 : i32 to vector<1x256xi32>
    %1577 = arith.addi %3, %1576 : vector<1x256xi32>
    %c0_i32_636 = arith.constant 0 : i32
    %1578 = vector.broadcast %c0_i32_636 : i32 to vector<1x256xi32>
    %1579 = arith.cmpi sge, %1577, %1578 : vector<1x256xi32>
    %c3_i32_637 = arith.constant 3 : i32
    %1580 = vector.broadcast %c3_i32_637 : i32 to vector<1x256xi32>
    %1581 = arith.addi %3, %1580 : vector<1x256xi32>
    %c16_i32_638 = arith.constant 16 : i32
    %1582 = vector.broadcast %c16_i32_638 : i32 to vector<1x256xi32>
    %1583 = arith.cmpi slt, %1581, %1582 : vector<1x256xi32>
    %1584 = arith.andi %1579, %1583 : vector<1x256xi1>
    %c0_i32_639 = arith.constant 0 : i32
    %1585 = vector.broadcast %c0_i32_639 : i32 to vector<1x256xi32>
    %1586 = arith.addi %5, %1585 : vector<1x256xi32>
    %c0_i32_640 = arith.constant 0 : i32
    %1587 = vector.broadcast %c0_i32_640 : i32 to vector<1x256xi32>
    %1588 = arith.cmpi sge, %1586, %1587 : vector<1x256xi32>
    %1589 = arith.andi %1584, %1588 : vector<1x256xi1>
    %c0_i32_641 = arith.constant 0 : i32
    %1590 = vector.broadcast %c0_i32_641 : i32 to vector<1x256xi32>
    %1591 = arith.addi %5, %1590 : vector<1x256xi32>
    %c16_i32_642 = arith.constant 16 : i32
    %1592 = vector.broadcast %c16_i32_642 : i32 to vector<1x256xi32>
    %1593 = arith.cmpi slt, %1591, %1592 : vector<1x256xi32>
    %1594 = arith.andi %1589, %1593 : vector<1x256xi1>
    %cst_643 = arith.constant 0.000000e+00 : f32
    %1595 = vector.shape_cast %1594 : vector<1x256xi1> to vector<1x256xi1>
    %1596 = vector.broadcast %1595 : vector<1x256xi1> to vector<4x256xi1>
    %1597 = vector.broadcast %cst_643 : f32 to vector<4x256xf32>
    %1598 = arith.select %1596, %1575, %1597 : vector<4x256xi1>, vector<4x256xf32>
    %1599 = vector.broadcast %1574 : vector<4x1xf32> to vector<4x256xf32>
    %1600 = arith.mulf %1599, %1598 : vector<4x256xf32>
    %1601 = arith.addf %1572, %1600 : vector<4x256xf32>
    %c46 = arith.constant 46 : index
    %c0_644 = arith.constant 0 : index
    %c0_645 = arith.constant 0 : index
    %1602 = vector.load %arg4[%c46, %c0_644, %c0_645] : memref<49x4x1xf32, #tpu.memory_space<vmem>>, vector<1x4x1xf32>
    %1603 = vector.shape_cast %1602 : vector<1x4x1xf32> to vector<4x1xf32>
    %c207_i32 = arith.constant 207 : i32
    %1604 = tpu.dynamic_rotate %267 by %c207_i32 dim 1 : vector<4x256xf32>, i32 -> vector<4x256xf32>
    %c3_i32_646 = arith.constant 3 : i32
    %1605 = vector.broadcast %c3_i32_646 : i32 to vector<1x256xi32>
    %1606 = arith.addi %3, %1605 : vector<1x256xi32>
    %c0_i32_647 = arith.constant 0 : i32
    %1607 = vector.broadcast %c0_i32_647 : i32 to vector<1x256xi32>
    %1608 = arith.cmpi sge, %1606, %1607 : vector<1x256xi32>
    %c3_i32_648 = arith.constant 3 : i32
    %1609 = vector.broadcast %c3_i32_648 : i32 to vector<1x256xi32>
    %1610 = arith.addi %3, %1609 : vector<1x256xi32>
    %c16_i32_649 = arith.constant 16 : i32
    %1611 = vector.broadcast %c16_i32_649 : i32 to vector<1x256xi32>
    %1612 = arith.cmpi slt, %1610, %1611 : vector<1x256xi32>
    %1613 = arith.andi %1608, %1612 : vector<1x256xi1>
    %c1_i32_650 = arith.constant 1 : i32
    %1614 = vector.broadcast %c1_i32_650 : i32 to vector<1x256xi32>
    %1615 = arith.addi %5, %1614 : vector<1x256xi32>
    %c0_i32_651 = arith.constant 0 : i32
    %1616 = vector.broadcast %c0_i32_651 : i32 to vector<1x256xi32>
    %1617 = arith.cmpi sge, %1615, %1616 : vector<1x256xi32>
    %1618 = arith.andi %1613, %1617 : vector<1x256xi1>
    %c1_i32_652 = arith.constant 1 : i32
    %1619 = vector.broadcast %c1_i32_652 : i32 to vector<1x256xi32>
    %1620 = arith.addi %5, %1619 : vector<1x256xi32>
    %c16_i32_653 = arith.constant 16 : i32
    %1621 = vector.broadcast %c16_i32_653 : i32 to vector<1x256xi32>
    %1622 = arith.cmpi slt, %1620, %1621 : vector<1x256xi32>
    %1623 = arith.andi %1618, %1622 : vector<1x256xi1>
    %cst_654 = arith.constant 0.000000e+00 : f32
    %1624 = vector.shape_cast %1623 : vector<1x256xi1> to vector<1x256xi1>
    %1625 = vector.broadcast %1624 : vector<1x256xi1> to vector<4x256xi1>
    %1626 = vector.broadcast %cst_654 : f32 to vector<4x256xf32>
    %1627 = arith.select %1625, %1604, %1626 : vector<4x256xi1>, vector<4x256xf32>
    %1628 = vector.broadcast %1603 : vector<4x1xf32> to vector<4x256xf32>
    %1629 = arith.mulf %1628, %1627 : vector<4x256xf32>
    %1630 = arith.addf %1601, %1629 : vector<4x256xf32>
    %c47 = arith.constant 47 : index
    %c0_655 = arith.constant 0 : index
    %c0_656 = arith.constant 0 : index
    %1631 = vector.load %arg4[%c47, %c0_655, %c0_656] : memref<49x4x1xf32, #tpu.memory_space<vmem>>, vector<1x4x1xf32>
    %1632 = vector.shape_cast %1631 : vector<1x4x1xf32> to vector<4x1xf32>
    %c206_i32 = arith.constant 206 : i32
    %1633 = tpu.dynamic_rotate %267 by %c206_i32 dim 1 : vector<4x256xf32>, i32 -> vector<4x256xf32>
    %c3_i32_657 = arith.constant 3 : i32
    %1634 = vector.broadcast %c3_i32_657 : i32 to vector<1x256xi32>
    %1635 = arith.addi %3, %1634 : vector<1x256xi32>
    %c0_i32_658 = arith.constant 0 : i32
    %1636 = vector.broadcast %c0_i32_658 : i32 to vector<1x256xi32>
    %1637 = arith.cmpi sge, %1635, %1636 : vector<1x256xi32>
    %c3_i32_659 = arith.constant 3 : i32
    %1638 = vector.broadcast %c3_i32_659 : i32 to vector<1x256xi32>
    %1639 = arith.addi %3, %1638 : vector<1x256xi32>
    %c16_i32_660 = arith.constant 16 : i32
    %1640 = vector.broadcast %c16_i32_660 : i32 to vector<1x256xi32>
    %1641 = arith.cmpi slt, %1639, %1640 : vector<1x256xi32>
    %1642 = arith.andi %1637, %1641 : vector<1x256xi1>
    %c2_i32_661 = arith.constant 2 : i32
    %1643 = vector.broadcast %c2_i32_661 : i32 to vector<1x256xi32>
    %1644 = arith.addi %5, %1643 : vector<1x256xi32>
    %c0_i32_662 = arith.constant 0 : i32
    %1645 = vector.broadcast %c0_i32_662 : i32 to vector<1x256xi32>
    %1646 = arith.cmpi sge, %1644, %1645 : vector<1x256xi32>
    %1647 = arith.andi %1642, %1646 : vector<1x256xi1>
    %c2_i32_663 = arith.constant 2 : i32
    %1648 = vector.broadcast %c2_i32_663 : i32 to vector<1x256xi32>
    %1649 = arith.addi %5, %1648 : vector<1x256xi32>
    %c16_i32_664 = arith.constant 16 : i32
    %1650 = vector.broadcast %c16_i32_664 : i32 to vector<1x256xi32>
    %1651 = arith.cmpi slt, %1649, %1650 : vector<1x256xi32>
    %1652 = arith.andi %1647, %1651 : vector<1x256xi1>
    %cst_665 = arith.constant 0.000000e+00 : f32
    %1653 = vector.shape_cast %1652 : vector<1x256xi1> to vector<1x256xi1>
    %1654 = vector.broadcast %1653 : vector<1x256xi1> to vector<4x256xi1>
    %1655 = vector.broadcast %cst_665 : f32 to vector<4x256xf32>
    %1656 = arith.select %1654, %1633, %1655 : vector<4x256xi1>, vector<4x256xf32>
    %1657 = vector.broadcast %1632 : vector<4x1xf32> to vector<4x256xf32>
    %1658 = arith.mulf %1657, %1656 : vector<4x256xf32>
    %1659 = arith.addf %1630, %1658 : vector<4x256xf32>
    %c48 = arith.constant 48 : index
    %c0_666 = arith.constant 0 : index
    %c0_667 = arith.constant 0 : index
    %1660 = vector.load %arg4[%c48, %c0_666, %c0_667] : memref<49x4x1xf32, #tpu.memory_space<vmem>>, vector<1x4x1xf32>
    %1661 = vector.shape_cast %1660 : vector<1x4x1xf32> to vector<4x1xf32>
    %c205_i32 = arith.constant 205 : i32
    %1662 = tpu.dynamic_rotate %267 by %c205_i32 dim 1 : vector<4x256xf32>, i32 -> vector<4x256xf32>
    %c3_i32_668 = arith.constant 3 : i32
    %1663 = vector.broadcast %c3_i32_668 : i32 to vector<1x256xi32>
    %1664 = arith.addi %3, %1663 : vector<1x256xi32>
    %c0_i32_669 = arith.constant 0 : i32
    %1665 = vector.broadcast %c0_i32_669 : i32 to vector<1x256xi32>
    %1666 = arith.cmpi sge, %1664, %1665 : vector<1x256xi32>
    %c3_i32_670 = arith.constant 3 : i32
    %1667 = vector.broadcast %c3_i32_670 : i32 to vector<1x256xi32>
    %1668 = arith.addi %3, %1667 : vector<1x256xi32>
    %c16_i32_671 = arith.constant 16 : i32
    %1669 = vector.broadcast %c16_i32_671 : i32 to vector<1x256xi32>
    %1670 = arith.cmpi slt, %1668, %1669 : vector<1x256xi32>
    %1671 = arith.andi %1666, %1670 : vector<1x256xi1>
    %c3_i32_672 = arith.constant 3 : i32
    %1672 = vector.broadcast %c3_i32_672 : i32 to vector<1x256xi32>
    %1673 = arith.addi %5, %1672 : vector<1x256xi32>
    %c0_i32_673 = arith.constant 0 : i32
    %1674 = vector.broadcast %c0_i32_673 : i32 to vector<1x256xi32>
    %1675 = arith.cmpi sge, %1673, %1674 : vector<1x256xi32>
    %1676 = arith.andi %1671, %1675 : vector<1x256xi1>
    %c3_i32_674 = arith.constant 3 : i32
    %1677 = vector.broadcast %c3_i32_674 : i32 to vector<1x256xi32>
    %1678 = arith.addi %5, %1677 : vector<1x256xi32>
    %c16_i32_675 = arith.constant 16 : i32
    %1679 = vector.broadcast %c16_i32_675 : i32 to vector<1x256xi32>
    %1680 = arith.cmpi slt, %1678, %1679 : vector<1x256xi32>
    %1681 = arith.andi %1676, %1680 : vector<1x256xi1>
    %cst_676 = arith.constant 0.000000e+00 : f32
    %1682 = vector.shape_cast %1681 : vector<1x256xi1> to vector<1x256xi1>
    %1683 = vector.broadcast %1682 : vector<1x256xi1> to vector<4x256xi1>
    %1684 = vector.broadcast %cst_676 : f32 to vector<4x256xf32>
    %1685 = arith.select %1683, %1662, %1684 : vector<4x256xi1>, vector<4x256xf32>
    %1686 = vector.broadcast %1661 : vector<4x1xf32> to vector<4x256xf32>
    %1687 = arith.mulf %1686, %1685 : vector<4x256xf32>
    %1688 = arith.addf %1659, %1687 : vector<4x256xf32>
    %c1_677 = arith.constant 1 : index
    %c0_678 = arith.constant 0 : index
    %c0_679 = arith.constant 0 : index
    %1689 = vector.load %arg6[%c1_677, %c0_678, %c0_679] : memref<3x4x1xf32, #tpu.memory_space<vmem>>, vector<1x4x1xf32>
    %1690 = vector.shape_cast %1689 : vector<1x4x1xf32> to vector<4x1xf32>
    %1691 = vector.broadcast %1690 : vector<4x1xf32> to vector<4x256xf32>
    %1692 = arith.mulf %1688, %1691 : vector<4x256xf32>
    %c1_680 = arith.constant 1 : index
    %c0_681 = arith.constant 0 : index
    %c0_682 = arith.constant 0 : index
    %1693 = vector.load %arg7[%c1_680, %c0_681, %c0_682] : memref<3x4x1xf32, #tpu.memory_space<vmem>>, vector<1x4x1xf32>
    %1694 = vector.shape_cast %1693 : vector<1x4x1xf32> to vector<4x1xf32>
    %1695 = vector.broadcast %1694 : vector<4x1xf32> to vector<4x256xf32>
    %1696 = arith.addf %1692, %1695 : vector<4x256xf32>
    %cst_683 = arith.constant 0.000000e+00 : f32
    %1697 = vector.broadcast %cst_683 : f32 to vector<4x256xf32>
    %1698 = arith.maximumf %1696, %1697 : vector<4x256xf32>
    %1699 = arith.addf %1698, %267 : vector<4x256xf32>
    %c0_684 = arith.constant 0 : index
    %c0_685 = arith.constant 0 : index
    %1700 = vector.load %arg5[%c0_684, %c0_685] : memref<4x4xf32, #tpu.memory_space<vmem>>, vector<4x4xf32>
    %cst_686 = arith.constant dense<0.000000e+00> : vector<4x256xf32>
    %1701 = tpu.matmul %1700, %1699, %cst_686 {dimension_numbers = #tpu.dot_dimension_numbers<[1], [0], [0], [1], [0, 0, 1, 1], [], []>} : vector<4x4xf32>, vector<4x256xf32>, vector<4x256xf32> -> vector<4x256xf32>
    %c2_687 = arith.constant 2 : index
    %c0_688 = arith.constant 0 : index
    %c0_689 = arith.constant 0 : index
    %1702 = vector.load %arg6[%c2_687, %c0_688, %c0_689] : memref<3x4x1xf32, #tpu.memory_space<vmem>>, vector<1x4x1xf32>
    %1703 = vector.shape_cast %1702 : vector<1x4x1xf32> to vector<4x1xf32>
    %1704 = vector.broadcast %1703 : vector<4x1xf32> to vector<4x256xf32>
    %1705 = arith.mulf %1701, %1704 : vector<4x256xf32>
    %c2_690 = arith.constant 2 : index
    %c0_691 = arith.constant 0 : index
    %c0_692 = arith.constant 0 : index
    %1706 = vector.load %arg7[%c2_690, %c0_691, %c0_692] : memref<3x4x1xf32, #tpu.memory_space<vmem>>, vector<1x4x1xf32>
    %1707 = vector.shape_cast %1706 : vector<1x4x1xf32> to vector<4x1xf32>
    %1708 = vector.broadcast %1707 : vector<4x1xf32> to vector<4x256xf32>
    %1709 = arith.addf %1705, %1708 : vector<4x256xf32>
    %cst_693 = arith.constant 0.000000e+00 : f32
    %1710 = vector.broadcast %cst_693 : f32 to vector<4x256xf32>
    %1711 = arith.maximumf %1709, %1710 : vector<4x256xf32>
    %1712 = arith.addf %1711, %1 : vector<4x256xf32>
    %c0_694 = arith.constant 0 : index
    %c0_695 = arith.constant 0 : index
    %c0_696 = arith.constant 0 : index
    %1713 = vector.load %arg8[%c0_694, %c0_695, %c0_696] : memref<1x4x256xf32, #tpu.memory_space<vmem>>, vector<1x4x256xf32>
    %1714 = vector.shape_cast %1713 : vector<1x4x256xf32> to vector<4x256xf32>
    %1715 = vector.shape_cast %1712 : vector<4x256xf32> to vector<1x4x256xf32>
    tpu.vector_store %arg8[%c0_694, %c0_695, %c0_696], %1715 {strides = array<i32>} : memref<1x4x256xf32, #tpu.memory_space<vmem>>, vector<1x4x256xf32>,
    return
  }
  func.func @transform_0(%arg0: i32) -> (i32, i32, i32) {
    %c0_i32 = arith.constant 0 : i32
    %c0_i32_0 = arith.constant 0 : i32
    %c0_i32_1 = arith.constant 0 : i32
    return %arg0, %c0_i32, %c0_i32_0 : i32, i32, i32
  }
  func.func @transform_1(%arg0: i32) -> (i32, i32, i32) {
    %c0_i32 = arith.constant 0 : i32
    %c0_i32_0 = arith.constant 0 : i32
    %c0_i32_1 = arith.constant 0 : i32
    %c0_i32_2 = arith.constant 0 : i32
    return %c0_i32, %c0_i32_0, %c0_i32_1 : i32, i32, i32
  }
  func.func @transform_2(%arg0: i32) -> (i32, i32, i32) {
    %c0_i32 = arith.constant 0 : i32
    %c0_i32_0 = arith.constant 0 : i32
    %c0_i32_1 = arith.constant 0 : i32
    %c0_i32_2 = arith.constant 0 : i32
    return %c0_i32, %c0_i32_0, %c0_i32_1 : i32, i32, i32
  }
  func.func @transform_3(%arg0: i32) -> (i32, i32, i32) {
    %c0_i32 = arith.constant 0 : i32
    %c0_i32_0 = arith.constant 0 : i32
    %c0_i32_1 = arith.constant 0 : i32
    %c0_i32_2 = arith.constant 0 : i32
    return %c0_i32, %c0_i32_0, %c0_i32_1 : i32, i32, i32
  }
  func.func @transform_4(%arg0: i32) -> (i32, i32) {
    %c0_i32 = arith.constant 0 : i32
    %c0_i32_0 = arith.constant 0 : i32
    %c0_i32_1 = arith.constant 0 : i32
    return %c0_i32, %c0_i32_0 : i32, i32
  }
  func.func @transform_5(%arg0: i32) -> (i32, i32, i32) {
    %c0_i32 = arith.constant 0 : i32
    %c0_i32_0 = arith.constant 0 : i32
    %c0_i32_1 = arith.constant 0 : i32
    %c0_i32_2 = arith.constant 0 : i32
    return %c0_i32, %c0_i32_0, %c0_i32_1 : i32, i32, i32
  }
  func.func @transform_6(%arg0: i32) -> (i32, i32, i32) {
    %c0_i32 = arith.constant 0 : i32
    %c0_i32_0 = arith.constant 0 : i32
    %c0_i32_1 = arith.constant 0 : i32
    %c0_i32_2 = arith.constant 0 : i32
    return %c0_i32, %c0_i32_0, %c0_i32_1 : i32, i32, i32
  }
  func.func @transform_7(%arg0: i32) -> (i32, i32, i32) {
    %c0_i32 = arith.constant 0 : i32
    %c0_i32_0 = arith.constant 0 : i32
    %c0_i32_1 = arith.constant 0 : i32
    return %arg0, %c0_i32, %c0_i32_0 : i32, i32, i32
  }
}

</mosaic_0001>

<llo_original>
// kernel: mixer_decoder_forward.1
$region0: #{mixer_decoder_forward.1}
  #allocation0 [shape = 'u32[]', space=smem, size = 0x4, offset = 0x4, fixed_abs, tag = 'smem constant byte address 0x4 - core index']
  #allocation1 [shape = 'u32[144,128]{1,0:T(1,128)}', space=vmem, size = 0x12000, scoped, tag = 'internal scratch']
  %s0 = inlined_call_operand.vmem [shape: f32[2,4,256], index: 0, kind: input, shape index: {}]
  %s1 = inlined_call_operand.vmem [shape: s32[2,1,256], index: 1, kind: input, shape index: {}]
  %s2 = inlined_call_operand.vmem [shape: f32[9,4,4], index: 2, kind: input, shape index: {}]
  %s3 = inlined_call_operand.vmem [shape: f32[49,4,1], index: 3, kind: input, shape index: {}]
  %s4 = inlined_call_operand.vmem [shape: f32[4,4], index: 4, kind: input, shape index: {}]
  %s5 = inlined_call_operand.vmem [shape: f32[3,4,1], index: 5, kind: input, shape index: {}]
  %s6 = inlined_call_operand.vmem [shape: f32[3,4,1], index: 6, kind: input, shape index: {}]
  %s7 = inlined_call_operand.vmem [shape: f32[2,4,256], index: 7, kind: output, shape index: {}]
  %s8 = sld [smem:[#allocation0]]
  $region61: #{mixer_decoder_forward.1} parent=0
    _
  %s10 = ssub.s32 1, %s8
  %s11 = scalar_select 0, %s10, %s8
  loop: start=0, step=1, limit=4
  $region2: #{mixer_decoder_forward.1} parent=0 // loop_pre_header
    _
  $region3: #{mixer_decoder_forward.1} parent=0 // loop_header
    %s13 = sphi 0, %s17
    %p14 = scmp.ge.s32.totalorder %s13, 4
    %s23 = sphi 0, %s25
    %s26 = sphi 0, %s23
    %s27 = sphi 0, %s26
    %s43 = sphi 0, %s27
    %s47 = sphi 0, %s47
    %s49 = sphi 0, %s47
    %s50 = sphi 0, %s49
    %s64 = sphi 0, %s50
    %s68 = sphi 0, %s68
    %s70 = sphi 0, %s68
    %s71 = sphi 0, %s70
    %s85 = sphi 0, %s71
    %s89 = sphi 0, %s89
    %s91 = sphi 0, %s89
    %s92 = sphi 0, %s91
    %s106 = sphi 0, %s92
    %s110 = sphi 0, %s110
    %s112 = sphi 0, %s110
    %s113 = sphi 0, %s112
    %s127 = sphi 0, %s113
    %s131 = sphi 0, %s131
    %s133 = sphi 0, %s131
    %s134 = sphi 0, %s133
    %s148 = sphi 0, %s134
    %s152 = sphi 0, %s152
    %s154 = sphi 0, %s152
    %s155 = sphi 0, %s154
    %s169 = sphi 0, %s155
    %s175 = sphi 0, %s177
    %s178 = sphi 0, %s175
    %s179 = sphi 0, %s178
    %s195 = sphi 0, %s179
  $region4: #{mixer_decoder_forward.1} parent=0 // loop_header_branch
    %16 = sbr.rel (%p14) target = $region8
  $region5: #{mixer_decoder_forward.1} parent=0 // loop_body
    %s18 = ssub.s32 %s13, 1
    %s19 = ssub.s32 %s13, 2
    %s20 = sadd.s32 %s13, 1
    %s21 = ssub.s32 %s13, %s20
    %p22 = scmp.eq.s32.totalorder %s21, 0
    %s24 = sadd.s32 %s23, 1
    %s25 = scalar_select %p22, %s23, %s24
    %p28 = pneg %p22
    %p29 = scmp.eq.s32.totalorder %s13, 1
    %p30 = por %p28, %p29
    %p31 = scmp.ne.s32.totalorder %s23, %s26
    %p32 = scmp.eq.s32.totalorder %s13, 0
    %p33 = por %p31, %p32
    %p34 = scmp.ne.s32.totalorder %s23, %s26
    %p35 = scmp.eq.s32.totalorder %s18, 1
    %p36 = por %p34, %p35
    %p37 = scmp.ne.s32.totalorder %s26, %s27
    %p38 = scmp.eq.s32.totalorder %s18, 0
    %p39 = por %p37, %p38
    %p40 = scmp.ne.s32.totalorder %s26, %s27
    %p41 = scmp.eq.s32.totalorder %s19, 1
    %p42 = por %p40, %p41
    %p44 = scmp.ne.s32.totalorder %s27, %s43
    %p45 = scmp.eq.s32.totalorder %s19, 0
    %p46 = por %p44, %p45
    %s48 = sadd.s32 %s47, 1
    %p51 = scmp.eq.s32.totalorder %s13, 1
    %p52 = scmp.ne.s32.totalorder %s47, %s49
    %p53 = scmp.eq.s32.totalorder %s13, 0
    %p54 = por %p52, %p53
    %p55 = scmp.ne.s32.totalorder %s47, %s49
    %p56 = scmp.eq.s32.totalorder %s18, 1
    %p57 = por %p55, %p56
    %p58 = scmp.ne.s32.totalorder %s49, %s50
    %p59 = scmp.eq.s32.totalorder %s18, 0
    %p60 = por %p58, %p59
    %p61 = scmp.ne.s32.totalorder %s49, %s50
    %p62 = scmp.eq.s32.totalorder %s19, 1
    %p63 = por %p61, %p62
    %p65 = scmp.ne.s32.totalorder %s50, %s64
    %p66 = scmp.eq.s32.totalorder %s19, 0
    %p67 = por %p65, %p66
    %s69 = sadd.s32 %s68, 1
    %p72 = scmp.eq.s32.totalorder %s13, 1
    %p73 = scmp.ne.s32.totalorder %s68, %s70
    %p74 = scmp.eq.s32.totalorder %s13, 0
    %p75 = por %p73, %p74
    %p76 = scmp.ne.s32.totalorder %s68, %s70
    %p77 = scmp.eq.s32.totalorder %s18, 1
    %p78 = por %p76, %p77
    %p79 = scmp.ne.s32.totalorder %s70, %s71
    %p80 = scmp.eq.s32.totalorder %s18, 0
    %p81 = por %p79, %p80
    %p82 = scmp.ne.s32.totalorder %s70, %s71
    %p83 = scmp.eq.s32.totalorder %s19, 1
    %p84 = por %p82, %p83
    %p86 = scmp.ne.s32.totalorder %s71, %s85
    %p87 = scmp.eq.s32.totalorder %s19, 0
    %p88 = por %p86, %p87
    %s90 = sadd.s32 %s89, 1
    %p93 = scmp.eq.s32.totalorder %s13, 1
    %p94 = scmp.ne.s32.totalorder %s89, %s91
    %p95 = scmp.eq.s32.totalorder %s13, 0
    %p96 = por %p94, %p95
    %p97 = scmp.ne.s32.totalorder %s89, %s91
    %p98 = scmp.eq.s32.totalorder %s18, 1
    %p99 = por %p97, %p98
    %p100 = scmp.ne.s32.totalorder %s91, %s92
    %p101 = scmp.eq.s32.totalorder %s18, 0
    %p102 = por %p100, %p101
    %p103 = scmp.ne.s32.totalorder %s91, %s92
    %p104 = scmp.eq.s32.totalorder %s19, 1
    %p105 = por %p103, %p104
    %p107 = scmp.ne.s32.totalorder %s92, %s106
    %p108 = scmp.eq.s32.totalorder %s19, 0
    %p109 = por %p107, %p108
    %s111 = sadd.s32 %s110, 1
    %p114 = scmp.eq.s32.totalorder %s13, 1
    %p115 = scmp.ne.s32.totalorder %s110, %s112
    %p116 = scmp.eq.s32.totalorder %s13, 0
    %p117 = por %p115, %p116
    %p118 = scmp.ne.s32.totalorder %s110, %s112
    %p119 = scmp.eq.s32.totalorder %s18, 1
    %p120 = por %p118, %p119
    %p121 = scmp.ne.s32.totalorder %s112, %s113
    %p122 = scmp.eq.s32.totalorder %s18, 0
    %p123 = por %p121, %p122
    %p124 = scmp.ne.s32.totalorder %s112, %s113
    %p125 = scmp.eq.s32.totalorder %s19, 1
    %p126 = por %p124, %p125
    %p128 = scmp.ne.s32.totalorder %s113, %s127
    %p129 = scmp.eq.s32.totalorder %s19, 0
    %p130 = por %p128, %p129
    %s132 = sadd.s32 %s131, 1
    %p135 = scmp.eq.s32.totalorder %s13, 1
    %p136 = scmp.ne.s32.totalorder %s131, %s133
    %p137 = scmp.eq.s32.totalorder %s13, 0
    %p138 = por %p136, %p137
    %p139 = scmp.ne.s32.totalorder %s131, %s133
    %p140 = scmp.eq.s32.totalorder %s18, 1
    %p141 = por %p139, %p140
    %p142 = scmp.ne.s32.totalorder %s133, %s134
    %p143 = scmp.eq.s32.totalorder %s18, 0
    %p144 = por %p142, %p143
    %p145 = scmp.ne.s32.totalorder %s133, %s134
    %p146 = scmp.eq.s32.totalorder %s19, 1
    %p147 = por %p145, %p146
    %p149 = scmp.ne.s32.totalorder %s134, %s148
    %p150 = scmp.eq.s32.totalorder %s19, 0
    %p151 = por %p149, %p150
    %s153 = sadd.s32 %s152, 1
    %p156 = scmp.eq.s32.totalorder %s13, 1
    %p157 = scmp.ne.s32.totalorder %s152, %s154
    %p158 = scmp.eq.s32.totalorder %s13, 0
    %p159 = por %p157, %p158
    %p160 = scmp.ne.s32.totalorder %s152, %s154
    %p161 = scmp.eq.s32.totalorder %s18, 1
    %p162 = por %p160, %p161
    %p163 = scmp.ne.s32.totalorder %s154, %s155
    %p164 = scmp.eq.s32.totalorder %s18, 0
    %p165 = por %p163, %p164
    %p166 = scmp.ne.s32.totalorder %s154, %s155
    %p167 = scmp.eq.s32.totalorder %s19, 1
    %p168 = por %p166, %p167
    %p170 = scmp.ne.s32.totalorder %s155, %s169
    %p171 = scmp.eq.s32.totalorder %s19, 0
    %p172 = por %p170, %p171
    %s173 = ssub.s32 %s13, %s20
    %p174 = scmp.eq.s32.totalorder %s173, 0
    %s176 = sadd.s32 %s175, 1
    %s177 = scalar_select %p174, %s175, %s176
    %p180 = pneg %p174
    %p181 = scmp.eq.s32.totalorder %s13, 1
    %p182 = por %p180, %p181
    %p183 = scmp.ne.s32.totalorder %s175, %s178
    %p184 = scmp.eq.s32.totalorder %s13, 0
    %p185 = por %p183, %p184
    %p186 = scmp.ne.s32.totalorder %s175, %s178
    %p187 = scmp.eq.s32.totalorder %s18, 1
    %p188 = por %p186, %p187
    %p189 = scmp.ne.s32.totalorder %s178, %s179
    %p190 = scmp.eq.s32.totalorder %s18, 0
    %p191 = por %p189, %p190
    %p192 = scmp.ne.s32.totalorder %s178, %s179
    %p193 = scmp.eq.s32.totalorder %s19, 1
    %p194 = por %p192, %p193
    %p196 = scmp.ne.s32.totalorder %s179, %s195
    %p197 = scmp.eq.s32.totalorder %s19, 0
    %p198 = por %p196, %p197
    %p199 = scmp.le.s32.totalorder 1, %s13
    %p200 = scmp.lt.s32.totalorder %s13, 3
    %p201 = pnand %p199, %p200
    %p202 = pneg %p201
    // Predicated region
    $region9: #{mixer_decoder_forward.1} parent=5 // pred_check
      _
    $region10: #{mixer_decoder_forward.1} parent=5 // pred_check_branch
      %204 = sbr.rel (%p201) target = $region12
    $region11: #{mixer_decoder_forward.1} parent=5 // pred_region
      %s205 = ssub.s32 %s13, 1
      // Predicated region
      $region13: #{mixer_decoder_forward.1} parent=11 // pred_check
        %p206 = pneg %p60
      $region14: #{mixer_decoder_forward.1} parent=11 // pred_check_branch
        %208 = sbr.rel (%p206) target = $region16
      $region15: #{mixer_decoder_forward.1} parent=11 // pred_region
        _
      $region16: #{mixer_decoder_forward.1} parent=11 // pred_fallthru
        _
      // Predicated region
      $region17: #{mixer_decoder_forward.1} parent=11 // pred_check
        %p209 = pneg %p81
      $region18: #{mixer_decoder_forward.1} parent=11 // pred_check_branch
        %211 = sbr.rel (%p209) target = $region20
      $region19: #{mixer_decoder_forward.1} parent=11 // pred_region
        _
      $region20: #{mixer_decoder_forward.1} parent=11 // pred_fallthru
        _
      // Predicated region
      $region21: #{mixer_decoder_forward.1} parent=11 // pred_check
        %p212 = pneg %p102
      $region22: #{mixer_decoder_forward.1} parent=11 // pred_check_branch
        %214 = sbr.rel (%p212) target = $region24
      $region23: #{mixer_decoder_forward.1} parent=11 // pred_region
        _
      $region24: #{mixer_decoder_forward.1} parent=11 // pred_fallthru
        _
      // Predicated region
      $region25: #{mixer_decoder_forward.1} parent=11 // pred_check
        %p215 = pneg %p123
      $region26: #{mixer_decoder_forward.1} parent=11 // pred_check_branch
        %217 = sbr.rel (%p215) target = $region28
      $region27: #{mixer_decoder_forward.1} parent=11 // pred_region
        _
      $region28: #{mixer_decoder_forward.1} parent=11 // pred_fallthru
        _
      // Predicated region
      $region29: #{mixer_decoder_forward.1} parent=11 // pred_check
        %p218 = pneg %p144
      $region30: #{mixer_decoder_forward.1} parent=11 // pred_check_branch
        %220 = sbr.rel (%p218) target = $region32
      $region31: #{mixer_decoder_forward.1} parent=11 // pred_region
        _
      $region32: #{mixer_decoder_forward.1} parent=11 // pred_fallthru
        _
      // Predicated region
      $region33: #{mixer_decoder_forward.1} parent=11 // pred_check
        %p221 = pneg %p165
      $region34: #{mixer_decoder_forward.1} parent=11 // pred_check_branch
        %223 = sbr.rel (%p221) target = $region36
      $region35: #{mixer_decoder_forward.1} parent=11 // pred_region
        _
      $region36: #{mixer_decoder_forward.1} parent=11 // pred_fallthru
        _
    $region12: #{mixer_decoder_forward.1} parent=5 // pred_fallthru
      _
    %p224 = scmp.lt.s32.totalorder %s13, 2
    // Predicated region
    $region37: #{mixer_decoder_forward.1} parent=5 // pred_check
      %p225 = pneg %p224
    $region38: #{mixer_decoder_forward.1} parent=5 // pred_check_branch
      %227 = sbr.rel (%p225) target = $region40
    $region39: #{mixer_decoder_forward.1} parent=5 // pred_region
      // Predicated region
      $region41: #{mixer_decoder_forward.1} parent=39 // pred_check
        %p228 = pneg %p33
      $region42: #{mixer_decoder_forward.1} parent=39 // pred_check_branch
        %230 = sbr.rel (%p228) target = $region44
      $region43: #{mixer_decoder_forward.1} parent=39 // pred_region
        %p231 = scmp.lt.s32.totalorder %s13, 1
        %s232 = scalar_select %p231, %s13, 1
        %s233 = smul.addr %s232, 2
        %s234 = smul.addr %s233, 4
        %s235 = scalar_lea.vmem %s0, %s234
      $region44: #{mixer_decoder_forward.1} parent=39 // pred_fallthru
        _
    $region40: #{mixer_decoder_forward.1} parent=5 // pred_fallthru
      _
    %p236 = scmp.le.s32.totalorder 1, %s13
    %p237 = scmp.lt.s32.totalorder %s13, 3
    %p238 = pnand %p236, %p237
    %p239 = pneg %p238
    // Predicated region
    $region45: #{mixer_decoder_forward.1} parent=5 // pred_check
      _
    $region46: #{mixer_decoder_forward.1} parent=5 // pred_check_branch
      %241 = sbr.rel (%p238) target = $region48
    $region47: #{mixer_decoder_forward.1} parent=5 // pred_region
      %s242 = ssub.s32 %s13, 1
      %p243 = scmp.lt.s32.totalorder %s18, 1
      %s244 = scalar_select %p243, %s18, 1
      %s245 = smul.addr %s244, 2
      %s246 = smul.addr %s245, 4
      %s247 = scalar_lea.vmem %s0, %s246
      %p248 = pneg %p39
      %p249 = pneg %p36
      %p250 = pneg %p60
      %p251 = pneg %p57
      %p252 = pneg %p81
      %p253 = pneg %p78
      %p254 = pneg %p102
      %p255 = pneg %p99
      %p256 = pneg %p123
      %p257 = pneg %p120
      %p258 = pneg %p144
      %p259 = pneg %p141
      %p260 = pneg %p165
      %p261 = pneg %p162
      %p262 = pneg %p191
      %p263 = pneg %p188
      %p264 = scmp.lt.s32.totalorder %s18, 1
      %s265 = scalar_select %p264, %s18, 1
      %s266 = smul.addr %s265, 2
      %s267 = smul.addr %s266, 4
      %s268 = scalar_lea.vmem %s7, %s267
      %p269 = scmp.lt.s32.totalorder %s18, 1
      %s270 = scalar_select %p269, %s18, 1
      %s271 = smul.addr %s270, 2
      %s272 = smul.addr %s271, 4
      %s273 = scalar_lea.vmem %s0, %s272
      %p274 = scmp.lt.s32.totalorder %s18, 1
      %s275 = scalar_select %p274, %s18, 1
      %s276 = smul.addr %s275, 2
      %s277 = smul.addr %s276, 4
      %s278 = scalar_lea.vmem %s7, %s277
      %v279 = vld [vmem:[%s273] sm:$0xff]
      %v280 = vld [vmem:[%s1] sm:$0x3]
      %s281 = scalar_lea.vmem %s1, 2
      %v282 = vld [vmem:[%s281] sm:$0x3]
      %v283 = vld [vmem:[%s2] sm:$0xf]
      %v285 = vcombine.high %v279, %v279
      %287 = vrot.lane.b32.xlu0 %v279, 17
      %v288 = vpop.permute.xlu0 %287
      %289 = vrot.lane.b32.xlu0 %v285, 17
      %v290 = vpop.permute.xlu0 %289
      %v291 = vlaneseq
      %v292 = vand.u32 %v291, 127
      %vm293 = vcmp.lt.s32.totalorder %v292, 17
      %v294 = vsel %vm293, %v288, %v290
      %v295 = vsel %vm293, %v290, %v288
      %v296 = vadd.s32 %v280, 4294967295
      %vm297 = vcmp.ge.s32.totalorder %v296, 0
      %vm298 = vcmp.lt.s32.totalorder %v296, 16
      %vm299 = vmand %vm297, %vm298
      %v300 = vadd.s32 %v282, 4294967295
      %vm301 = vcmp.ge.s32.totalorder %v300, 0
      %vm302 = vmand %vm299, %vm301
      %vm303 = vcmp.lt.s32.totalorder %v300, 16
      %vm304 = vmand %vm302, %vm303
      %v305 = vsel %vm304, 1, 0
      %v306 = vlaneseq
      %v307 = vshrl.u32 %v306, 7
      %v308 = vsub.s32 0, %v307
      %v309 = vrot.slane %v305, %v308
      %v310 = vlaneseq
      %v311 = vshrl.u32 %v310, 7
      %v312 = vsub.s32 1, %v311
      %v313 = vrot.slane %v305, %v312
      %vm314 = vcmp.eq.s32.totalorder %v309, 1
      %vm315 = vcmp.eq.s32.totalorder %v313, 1
      %v316 = vsel %vm314, %v295, 0.0
      %v317 = vsel %vm315, %v294, 0.0
      %s318 = scalar_lea.vmem %s2, 4
      %v319 = vld [vmem:[%s318] sm:$0xf]
      %320 = vrot.lane.b32.xlu0 %v279, 16
      %v321 = vpop.permute.xlu0 %320
      %322 = vrot.lane.b32.xlu0 %v285, 16
      %v323 = vpop.permute.xlu0 %322
      %vm324 = vcmp.lt.s32.totalorder %v292, 16
      %v325 = vsel %vm324, %v321, %v323
      %v326 = vsel %vm324, %v323, %v321
      %vm327 = vcmp.ge.s32.totalorder %v282, 0
      %vm328 = vmand %vm299, %vm327
      %vm329 = vcmp.lt.s32.totalorder %v282, 16
      %vm330 = vmand %vm328, %vm329
      %v331 = vsel %vm330, 1, 0
      %v332 = vlaneseq
      %v333 = vshrl.u32 %v332, 7
      %v334 = vsub.s32 0, %v333
      %v335 = vrot.slane %v331, %v334
      %v336 = vlaneseq
      %v337 = vshrl.u32 %v336, 7
      %v338 = vsub.s32 1, %v337
      %v339 = vrot.slane %v331, %v338
      %vm340 = vcmp.eq.s32.totalorder %v335, 1
      %vm341 = vcmp.eq.s32.totalorder %v339, 1
      %v342 = vsel %vm340, %v326, 0.0
      %v343 = vsel %vm341, %v325, 0.0
      %vm344 = vcmask 31744
      %v346 = vsel %vm344, %v319, 0
      %vm348 = vcmask 1043456
      %v350 = vsel %vm348, %v342, 0
      %v353 = vsel %vm348, %v343, 0
      %355 = vmatprep.subr.mxu0 0.0
      %356 = vmatpush1.msra.mxu0 0.0
      %357 = vmatprep.subr.mxu0 0.0
      %358 = vmatpush1.msra.mxu0 0.0
      %359 = vmatprep.subr.mxu0 0.0
      %360 = vmatpush1.msra.mxu0 0.0
      %361 = vmatprep.subr.mxu0 0.0
      %362 = vmatpush1.msra.mxu0 0.0
      %363 = vmatprep.subr.mxu0 0.0
      %364 = vmatpush1.msra.mxu0 0.0
      %365 = vmatprep.subr.mxu0 0.0
      %366 = vmatpush1.msra.mxu0 0.0
      %367 = vmatprep.subr.mxu0 0.0
      %368 = vmatpush1.msra.mxu0 0.0
      %369 = vmatprep.subr.mxu0 0.0
      %370 = vmatpush1.msra.mxu0 0.0
      %371 = vmatprep.subr.mxu0 0.0
      %372 = vmatpush1.msra.mxu0 0.0
      %373 = vmatprep.subr.mxu0 0.0
      %374 = vmatpush1.msra.mxu0 0.0
      %375 = vmatprep.subr.mxu0 0.0
      %376 = vmatpush1.msra.mxu0 0.0
      %377 = vmatprep.subr.mxu0 0.0
      %378 = vmatpush1.msra.mxu0 0.0
      %379 = vmatprep.subr.mxu0 0.0
      %380 = vmatpush1.msra.mxu0 0.0
      %381 = vmatprep.subr.mxu0 0.0
      %382 = vmatpush1.msra.mxu0 0.0
      %383 = vmatprep.subr.mxu0 0.0
      %384 = vmatpush1.msra.mxu0 0.0
      %385 = vmatprep.subr.mxu0 %v353
      %386 = vmatpush1.msra.mxu0 %v350
      %387 = vmatprep.subr.mxu0 0.0
      %388 = vmatpush2.msra.mxu0 0.0
      %389 = vmatprep.subr.mxu0 0.0
      %390 = vmatpush2.msra.mxu0 0.0
      %391 = vmatprep.subr.mxu0 0.0
      %392 = vmatpush2.msra.mxu0 0.0
      %393 = vmatprep.subr.mxu0 0.0
      %394 = vmatpush2.msra.mxu0 0.0
      %395 = vmatprep.subr.mxu0 0.0
      %396 = vmatpush2.msra.mxu0 0.0
      %397 = vmatprep.subr.mxu0 0.0
      %398 = vmatpush2.msra.mxu0 0.0
      %399 = vmatprep.subr.mxu0 0.0
      %400 = vmatpush2.msra.mxu0 0.0
      %401 = vmatprep.subr.mxu0 0.0
      %402 = vmatpush2.msra.mxu0 0.0
      %403 = vmatprep.subr.mxu0 0.0
      %404 = vmatpush2.msra.mxu0 0.0
      %405 = vmatprep.subr.mxu0 0.0
      %406 = vmatpush2.msra.mxu0 0.0
      %407 = vmatprep.subr.mxu0 0.0
      %408 = vmatpush2.msra.mxu0 0.0
      %409 = vmatprep.subr.mxu0 0.0
      %410 = vmatpush2.msra.mxu0 0.0
      %411 = vmatprep.subr.mxu0 0.0
      %412 = vmatpush2.msra.mxu0 0.0
      %413 = vmatprep.subr.mxu0 0.0
      %414 = vmatpush2.msra.mxu0 0.0
      %415 = vmatprep.subr.mxu0 0.0
      %416 = vmatpush2.msra.mxu0 0.0
      %417 = vmatprep.subr.mxu0 0.0
      %418 = vmatpush2.msra.mxu0 0.0
      %419 = vmatprep.mubr.f32.mxu0 0.0
      %420 = vmatmul.mubr.f32.gmra.mxu0 %v346
      %v421 = vpop.f32.mrf.mxu0
      %v422 = vadd.f32 0.0, %v421
      %v423 = vpop.f32.mrf.mxu0
      %v424 = vadd.f32 0.0, %v423
      %425 = vdwg.mxu0
      %v427 = vsel %vm344, %v283, 0
      %v430 = vsel %vm348, %v316, 0
      %v433 = vsel %vm348, %v317, 0
      %435 = vmatprep.subr.mxu0 0.0
      %436 = vmatpush1.msra.mxu0 0.0
      %437 = vmatprep.subr.mxu0 0.0
      %438 = vmatpush1.msra.mxu0 0.0
      %439 = vmatprep.subr.mxu0 0.0
      %440 = vmatpush1.msra.mxu0 0.0
      %441 = vmatprep.subr.mxu0 0.0
      %442 = vmatpush1.msra.mxu0 0.0
      %443 = vmatprep.subr.mxu0 0.0
      %444 = vmatpush1.msra.mxu0 0.0
      %445 = vmatprep.subr.mxu0 0.0
      %446 = vmatpush1.msra.mxu0 0.0
      %447 = vmatprep.subr.mxu0 0.0
      %448 = vmatpush1.msra.mxu0 0.0
      %449 = vmatprep.subr.mxu0 0.0
      %450 = vmatpush1.msra.mxu0 0.0
      %451 = vmatprep.subr.mxu0 0.0
      %452 = vmatpush1.msra.mxu0 0.0
      %453 = vmatprep.subr.mxu0 0.0
      %454 = vmatpush1.msra.mxu0 0.0
      %455 = vmatprep.subr.mxu0 0.0
      %456 = vmatpush1.msra.mxu0 0.0
      %457 = vmatprep.subr.mxu0 0.0
      %458 = vmatpush1.msra.mxu0 0.0
      %459 = vmatprep.subr.mxu0 0.0
      %460 = vmatpush1.msra.mxu0 0.0
      %461 = vmatprep.subr.mxu0 0.0
      %462 = vmatpush1.msra.mxu0 0.0
      %463 = vmatprep.subr.mxu0 0.0
      %464 = vmatpush1.msra.mxu0 0.0
      %465 = vmatprep.subr.mxu0 %v433
      %466 = vmatpush1.msra.mxu0 %v430
      %467 = vmatprep.subr.mxu0 0.0
      %468 = vmatpush2.msra.mxu0 0.0
      %469 = vmatprep.subr.mxu0 0.0
      %470 = vmatpush2.msra.mxu0 0.0
      %471 = vmatprep.subr.mxu0 0.0
      %472 = vmatpush2.msra.mxu0 0.0
      %473 = vmatprep.subr.mxu0 0.0
      %474 = vmatpush2.msra.mxu0 0.0
      %475 = vmatprep.subr.mxu0 0.0
      %476 = vmatpush2.msra.mxu0 0.0
      %477 = vmatprep.subr.mxu0 0.0
      %478 = vmatpush2.msra.mxu0 0.0
      %479 = vmatprep.subr.mxu0 0.0
      %480 = vmatpush2.msra.mxu0 0.0
      %481 = vmatprep.subr.mxu0 0.0
      %482 = vmatpush2.msra.mxu0 0.0
      %483 = vmatprep.subr.mxu0 0.0
      %484 = vmatpush2.msra.mxu0 0.0
      %485 = vmatprep.subr.mxu0 0.0
      %486 = vmatpush2.msra.mxu0 0.0
      %487 = vmatprep.subr.mxu0 0.0
      %488 = vmatpush2.msra.mxu0 0.0
      %489 = vmatprep.subr.mxu0 0.0
      %490 = vmatpush2.msra.mxu0 0.0
      %491 = vmatprep.subr.mxu0 0.0
      %492 = vmatpush2.msra.mxu0 0.0
      %493 = vmatprep.subr.mxu0 0.0
      %494 = vmatpush2.msra.mxu0 0.0
      %495 = vmatprep.subr.mxu0 0.0
      %496 = vmatpush2.msra.mxu0 0.0
      %497 = vmatprep.subr.mxu0 0.0
      %498 = vmatpush2.msra.mxu0 0.0
      %499 = vmatprep.mubr.f32.mxu0 0.0
      %500 = vmatmul.mubr.f32.gmra.mxu0 %v427
      %v501 = vpop.f32.mrf.mxu0
      %v502 = vadd.f32 %v422, %v501
      %v503 = vpop.f32.mrf.mxu0
      %v504 = vadd.f32 %v424, %v503
      %505 = vdwg.mxu0
      %s506 = scalar_lea.vmem %s2, 8
      %v507 = vld [vmem:[%s506] sm:$0xf]
      %508 = vrot.lane.b32.xlu0 %v279, 15
      %v509 = vpop.permute.xlu0 %508
      %510 = vrot.lane.b32.xlu0 %v285, 15
      %v511 = vpop.permute.xlu0 %510
      %vm512 = vcmp.lt.s32.totalorder %v292, 15
      %v513 = vsel %vm512, %v509, %v511
      %v514 = vsel %vm512, %v511, %v509
      %v515 = vadd.s32 %v282, 1
      %vm516 = vcmp.ge.s32.totalorder %v515, 0
      %vm517 = vmand %vm299, %vm516
      %vm518 = vcmp.lt.s32.totalorder %v515, 16
      %vm519 = vmand %vm517, %vm518
      %v520 = vsel %vm519, 1, 0
      %v521 = vlaneseq
      %v522 = vshrl.u32 %v521, 7
      %v523 = vsub.s32 0, %v522
      %v524 = vrot.slane %v520, %v523
      %v525 = vlaneseq
      %v526 = vshrl.u32 %v525, 7
      %v527 = vsub.s32 1, %v526
      %v528 = vrot.slane %v520, %v527
      %vm529 = vcmp.eq.s32.totalorder %v524, 1
      %vm530 = vcmp.eq.s32.totalorder %v528, 1
      %v531 = vsel %vm529, %v514, 0.0
      %v532 = vsel %vm530, %v513, 0.0
      %v534 = vsel %vm344, %v507, 0
      %v537 = vsel %vm348, %v531, 0
      %v540 = vsel %vm348, %v532, 0
      %542 = vmatprep.subr.mxu0 0.0
      %543 = vmatpush1.msra.mxu0 0.0
      %544 = vmatprep.subr.mxu0 0.0
      %545 = vmatpush1.msra.mxu0 0.0
      %546 = vmatprep.subr.mxu0 0.0
      %547 = vmatpush1.msra.mxu0 0.0
      %548 = vmatprep.subr.mxu0 0.0
      %549 = vmatpush1.msra.mxu0 0.0
      %550 = vmatprep.subr.mxu0 0.0
      %551 = vmatpush1.msra.mxu0 0.0
      %552 = vmatprep.subr.mxu0 0.0
      %553 = vmatpush1.msra.mxu0 0.0
      %554 = vmatprep.subr.mxu0 0.0
      %555 = vmatpush1.msra.mxu0 0.0
      %556 = vmatprep.subr.mxu0 0.0
      %557 = vmatpush1.msra.mxu0 0.0
      %558 = vmatprep.subr.mxu0 0.0
      %559 = vmatpush1.msra.mxu0 0.0
      %560 = vmatprep.subr.mxu0 0.0
      %561 = vmatpush1.msra.mxu0 0.0
      %562 = vmatprep.subr.mxu0 0.0
      %563 = vmatpush1.msra.mxu0 0.0
      %564 = vmatprep.subr.mxu0 0.0
      %565 = vmatpush1.msra.mxu0 0.0
      %566 = vmatprep.subr.mxu0 0.0
      %567 = vmatpush1.msra.mxu0 0.0
      %568 = vmatprep.subr.mxu0 0.0
      %569 = vmatpush1.msra.mxu0 0.0
      %570 = vmatprep.subr.mxu0 0.0
      %571 = vmatpush1.msra.mxu0 0.0
      %572 = vmatprep.subr.mxu0 %v540
      %573 = vmatpush1.msra.mxu0 %v537
      %574 = vmatprep.subr.mxu0 0.0
      %575 = vmatpush2.msra.mxu0 0.0
      %576 = vmatprep.subr.mxu0 0.0
      %577 = vmatpush2.msra.mxu0 0.0
      %578 = vmatprep.subr.mxu0 0.0
      %579 = vmatpush2.msra.mxu0 0.0
      %580 = vmatprep.subr.mxu0 0.0
      %581 = vmatpush2.msra.mxu0 0.0
      %582 = vmatprep.subr.mxu0 0.0
      %583 = vmatpush2.msra.mxu0 0.0
      %584 = vmatprep.subr.mxu0 0.0
      %585 = vmatpush2.msra.mxu0 0.0
      %586 = vmatprep.subr.mxu0 0.0
      %587 = vmatpush2.msra.mxu0 0.0
      %588 = vmatprep.subr.mxu0 0.0
      %589 = vmatpush2.msra.mxu0 0.0
      %590 = vmatprep.subr.mxu0 0.0
      %591 = vmatpush2.msra.mxu0 0.0
      %592 = vmatprep.subr.mxu0 0.0
      %593 = vmatpush2.msra.mxu0 0.0
      %594 = vmatprep.subr.mxu0 0.0
      %595 = vmatpush2.msra.mxu0 0.0
      %596 = vmatprep.subr.mxu0 0.0
      %597 = vmatpush2.msra.mxu0 0.0
      %598 = vmatprep.subr.mxu0 0.0
      %599 = vmatpush2.msra.mxu0 0.0
      %600 = vmatprep.subr.mxu0 0.0
      %601 = vmatpush2.msra.mxu0 0.0
      %602 = vmatprep.subr.mxu0 0.0
      %603 = vmatpush2.msra.mxu0 0.0
      %604 = vmatprep.subr.mxu0 0.0
      %605 = vmatpush2.msra.mxu0 0.0
      %606 = vmatprep.mubr.f32.mxu0 0.0
      %607 = vmatmul.mubr.f32.gmra.mxu0 %v534
      %v608 = vpop.f32.mrf.mxu0
      %v609 = vadd.f32 0.0, %v608
      %v610 = vpop.f32.mrf.mxu0
      %v611 = vadd.f32 0.0, %v610
      %612 = vdwg.mxu0
      %v613 = vadd.f32 %v502, %v609
      %v614 = vadd.f32 %v504, %v611
      %s615 = scalar_lea.vmem %s2, 12
      %v616 = vld [vmem:[%s615] sm:$0xf]
      %617 = vrot.lane.b32.xlu0 %v279, 1
      %v618 = vpop.permute.xlu0 %617
      %619 = vrot.lane.b32.xlu0 %v285, 1
      %v620 = vpop.permute.xlu0 %619
      %vm621 = vcmp.lt.s32.totalorder %v292, 1
      %v622 = vsel %vm621, %v618, %v620
      %v623 = vsel %vm621, %v620, %v618
      %vm624 = vcmp.ge.s32.totalorder %v280, 0
      %vm625 = vcmp.lt.s32.totalorder %v280, 16
      %vm626 = vmand %vm624, %vm625
      %vm627 = vmand %vm626, %vm301
      %vm628 = vmand %vm627, %vm303
      %v629 = vsel %vm628, 1, 0
      %v630 = vlaneseq
      %v631 = vshrl.u32 %v630, 7
      %v632 = vsub.s32 0, %v631
      %v633 = vrot.slane %v629, %v632
      %v634 = vlaneseq
      %v635 = vshrl.u32 %v634, 7
      %v636 = vsub.s32 1, %v635
      %v637 = vrot.slane %v629, %v636
      %vm638 = vcmp.eq.s32.totalorder %v633, 1
      %vm639 = vcmp.eq.s32.totalorder %v637, 1
      %v640 = vsel %vm638, %v623, 0.0
      %v641 = vsel %vm639, %v622, 0.0
      %v643 = vsel %vm344, %v616, 0
      %v646 = vsel %vm348, %v640, 0
      %v649 = vsel %vm348, %v641, 0
      %651 = vmatprep.subr.mxu0 0.0
      %652 = vmatpush1.msra.mxu0 0.0
      %653 = vmatprep.subr.mxu0 0.0
      %654 = vmatpush1.msra.mxu0 0.0
      %655 = vmatprep.subr.mxu0 0.0
      %656 = vmatpush1.msra.mxu0 0.0
      %657 = vmatprep.subr.mxu0 0.0
      %658 = vmatpush1.msra.mxu0 0.0
      %659 = vmatprep.subr.mxu0 0.0
      %660 = vmatpush1.msra.mxu0 0.0
      %661 = vmatprep.subr.mxu0 0.0
      %662 = vmatpush1.msra.mxu0 0.0
      %663 = vmatprep.subr.mxu0 0.0
      %664 = vmatpush1.msra.mxu0 0.0
      %665 = vmatprep.subr.mxu0 0.0
      %666 = vmatpush1.msra.mxu0 0.0
      %667 = vmatprep.subr.mxu0 0.0
      %668 = vmatpush1.msra.mxu0 0.0
      %669 = vmatprep.subr.mxu0 0.0
      %670 = vmatpush1.msra.mxu0 0.0
      %671 = vmatprep.subr.mxu0 0.0
      %672 = vmatpush1.msra.mxu0 0.0
      %673 = vmatprep.subr.mxu0 0.0
      %674 = vmatpush1.msra.mxu0 0.0
      %675 = vmatprep.subr.mxu0 0.0
      %676 = vmatpush1.msra.mxu0 0.0
      %677 = vmatprep.subr.mxu0 0.0
      %678 = vmatpush1.msra.mxu0 0.0
      %679 = vmatprep.subr.mxu0 0.0
      %680 = vmatpush1.msra.mxu0 0.0
      %681 = vmatprep.subr.mxu0 %v649
      %682 = vmatpush1.msra.mxu0 %v646
      %683 = vmatprep.subr.mxu0 0.0
      %684 = vmatpush2.msra.mxu0 0.0
      %685 = vmatprep.subr.mxu0 0.0
      %686 = vmatpush2.msra.mxu0 0.0
      %687 = vmatprep.subr.mxu0 0.0
      %688 = vmatpush2.msra.mxu0 0.0
      %689 = vmatprep.subr.mxu0 0.0
      %690 = vmatpush2.msra.mxu0 0.0
      %691 = vmatprep.subr.mxu0 0.0
      %692 = vmatpush2.msra.mxu0 0.0
      %693 = vmatprep.subr.mxu0 0.0
      %694 = vmatpush2.msra.mxu0 0.0
      %695 = vmatprep.subr.mxu0 0.0
      %696 = vmatpush2.msra.mxu0 0.0
      %697 = vmatprep.subr.mxu0 0.0
      %698 = vmatpush2.msra.mxu0 0.0
      %699 = vmatprep.subr.mxu0 0.0
      %700 = vmatpush2.msra.mxu0 0.0
      %701 = vmatprep.subr.mxu0 0.0
      %702 = vmatpush2.msra.mxu0 0.0
      %703 = vmatprep.subr.mxu0 0.0
      %704 = vmatpush2.msra.mxu0 0.0
      %705 = vmatprep.subr.mxu0 0.0
      %706 = vmatpush2.msra.mxu0 0.0
      %707 = vmatprep.subr.mxu0 0.0
      %708 = vmatpush2.msra.mxu0 0.0
      %709 = vmatprep.subr.mxu0 0.0
      %710 = vmatpush2.msra.mxu0 0.0
      %711 = vmatprep.subr.mxu0 0.0
      %712 = vmatpush2.msra.mxu0 0.0
      %713 = vmatprep.subr.mxu0 0.0
      %714 = vmatpush2.msra.mxu0 0.0
      %715 = vmatprep.mubr.f32.mxu0 0.0
      %716 = vmatmul.mubr.f32.gmra.mxu0 %v643
      %v717 = vpop.f32.mrf.mxu0
      %v718 = vadd.f32 0.0, %v717
      %v719 = vpop.f32.mrf.mxu0
      %v720 = vadd.f32 0.0, %v719
      %721 = vdwg.mxu0
      %v722 = vadd.f32 %v613, %v718
      %v723 = vadd.f32 %v614, %v720
      %s724 = scalar_lea.vmem %s2, 16
      %v725 = vld [vmem:[%s724] sm:$0xf]
      %vm726 = vmand %vm626, %vm327
      %vm727 = vmand %vm726, %vm329
      %v728 = vsel %vm727, 1, 0
      %v729 = vlaneseq
      %v730 = vshrl.u32 %v729, 7
      %v731 = vsub.s32 0, %v730
      %v732 = vrot.slane %v728, %v731
      %v733 = vlaneseq
      %v734 = vshrl.u32 %v733, 7
      %v735 = vsub.s32 1, %v734
      %v736 = vrot.slane %v728, %v735
      %vm737 = vcmp.eq.s32.totalorder %v732, 1
      %vm738 = vcmp.eq.s32.totalorder %v736, 1
      %v739 = vsel %vm737, %v279, 0.0
      %v740 = vsel %vm738, %v285, 0.0
      %v742 = vsel %vm344, %v725, 0
      %v745 = vsel %vm348, %v739, 0
      %v748 = vsel %vm348, %v740, 0
      %750 = vmatprep.subr.mxu0 0.0
      %751 = vmatpush1.msra.mxu0 0.0
      %752 = vmatprep.subr.mxu0 0.0
      %753 = vmatpush1.msra.mxu0 0.0
      %754 = vmatprep.subr.mxu0 0.0
      %755 = vmatpush1.msra.mxu0 0.0
      %756 = vmatprep.subr.mxu0 0.0
      %757 = vmatpush1.msra.mxu0 0.0
      %758 = vmatprep.subr.mxu0 0.0
      %759 = vmatpush1.msra.mxu0 0.0
      %760 = vmatprep.subr.mxu0 0.0
      %761 = vmatpush1.msra.mxu0 0.0
      %762 = vmatprep.subr.mxu0 0.0
      %763 = vmatpush1.msra.mxu0 0.0
      %764 = vmatprep.subr.mxu0 0.0
      %765 = vmatpush1.msra.mxu0 0.0
      %766 = vmatprep.subr.mxu0 0.0
      %767 = vmatpush1.msra.mxu0 0.0
      %768 = vmatprep.subr.mxu0 0.0
      %769 = vmatpush1.msra.mxu0 0.0
      %770 = vmatprep.subr.mxu0 0.0
      %771 = vmatpush1.msra.mxu0 0.0
      %772 = vmatprep.subr.mxu0 0.0
      %773 = vmatpush1.msra.mxu0 0.0
      %774 = vmatprep.subr.mxu0 0.0
      %775 = vmatpush1.msra.mxu0 0.0
      %776 = vmatprep.subr.mxu0 0.0
      %777 = vmatpush1.msra.mxu0 0.0
      %778 = vmatprep.subr.mxu0 0.0
      %779 = vmatpush1.msra.mxu0 0.0
      %780 = vmatprep.subr.mxu0 %v748
      %781 = vmatpush1.msra.mxu0 %v745
      %782 = vmatprep.subr.mxu0 0.0
      %783 = vmatpush2.msra.mxu0 0.0
      %784 = vmatprep.subr.mxu0 0.0
      %785 = vmatpush2.msra.mxu0 0.0
      %786 = vmatprep.subr.mxu0 0.0
      %787 = vmatpush2.msra.mxu0 0.0
      %788 = vmatprep.subr.mxu0 0.0
      %789 = vmatpush2.msra.mxu0 0.0
      %790 = vmatprep.subr.mxu0 0.0
      %791 = vmatpush2.msra.mxu0 0.0
      %792 = vmatprep.subr.mxu0 0.0
      %793 = vmatpush2.msra.mxu0 0.0
      %794 = vmatprep.subr.mxu0 0.0
      %795 = vmatpush2.msra.mxu0 0.0
      %796 = vmatprep.subr.mxu0 0.0
      %797 = vmatpush2.msra.mxu0 0.0
      %798 = vmatprep.subr.mxu0 0.0
      %799 = vmatpush2.msra.mxu0 0.0
      %800 = vmatprep.subr.mxu0 0.0
      %801 = vmatpush2.msra.mxu0 0.0
      %802 = vmatprep.subr.mxu0 0.0
      %803 = vmatpush2.msra.mxu0 0.0
      %804 = vmatprep.subr.mxu0 0.0
      %805 = vmatpush2.msra.mxu0 0.0
      %806 = vmatprep.subr.mxu0 0.0
      %807 = vmatpush2.msra.mxu0 0.0
      %808 = vmatprep.subr.mxu0 0.0
      %809 = vmatpush2.msra.mxu0 0.0
      %810 = vmatprep.subr.mxu0 0.0
      %811 = vmatpush2.msra.mxu0 0.0
      %812 = vmatprep.subr.mxu0 0.0
      %813 = vmatpush2.msra.mxu0 0.0
      %814 = vmatprep.mubr.f32.mxu0 0.0
      %815 = vmatmul.mubr.f32.gmra.mxu0 %v742
      %v816 = vpop.f32.mrf.mxu0
      %v817 = vadd.f32 0.0, %v816
      %v818 = vpop.f32.mrf.mxu0
      %v819 = vadd.f32 0.0, %v818
      %820 = vdwg.mxu0
      %v821 = vadd.f32 %v722, %v817
      %v822 = vadd.f32 %v723, %v819
      %s823 = scalar_lea.vmem %s2, 20
      %v824 = vld [vmem:[%s823] sm:$0xf]
      %825 = vrot.lane.b32.xlu0 %v279, 127
      %v826 = vpop.permute.xlu0 %825
      %827 = vrot.lane.b32.xlu0 %v285, 127
      %v828 = vpop.permute.xlu0 %827
      %vm829 = vcmp.lt.s32.totalorder %v292, 127
      %v830 = vsel %vm829, %v826, %v828
      %v831 = vsel %vm829, %v828, %v826
      %vm832 = vmand %vm626, %vm516
      %vm833 = vmand %vm832, %vm518
      %v834 = vsel %vm833, 1, 0
      %v835 = vlaneseq
      %v836 = vshrl.u32 %v835, 7
      %v837 = vsub.s32 0, %v836
      %v838 = vrot.slane %v834, %v837
      %v839 = vlaneseq
      %v840 = vshrl.u32 %v839, 7
      %v841 = vsub.s32 1, %v840
      %v842 = vrot.slane %v834, %v841
      %vm843 = vcmp.eq.s32.totalorder %v838, 1
      %vm844 = vcmp.eq.s32.totalorder %v842, 1
      %v845 = vsel %vm843, %v830, 0.0
      %v846 = vsel %vm844, %v831, 0.0
      %v848 = vsel %vm344, %v824, 0
      %v851 = vsel %vm348, %v845, 0
      %v854 = vsel %vm348, %v846, 0
      %856 = vmatprep.subr.mxu0 0.0
      %857 = vmatpush1.msra.mxu0 0.0
      %858 = vmatprep.subr.mxu0 0.0
      %859 = vmatpush1.msra.mxu0 0.0
      %860 = vmatprep.subr.mxu0 0.0
      %861 = vmatpush1.msra.mxu0 0.0
      %862 = vmatprep.subr.mxu0 0.0
      %863 = vmatpush1.msra.mxu0 0.0
      %864 = vmatprep.subr.mxu0 0.0
      %865 = vmatpush1.msra.mxu0 0.0
      %866 = vmatprep.subr.mxu0 0.0
      %867 = vmatpush1.msra.mxu0 0.0
      %868 = vmatprep.subr.mxu0 0.0
      %869 = vmatpush1.msra.mxu0 0.0
      %870 = vmatprep.subr.mxu0 0.0
      %871 = vmatpush1.msra.mxu0 0.0
      %872 = vmatprep.subr.mxu0 0.0
      %873 = vmatpush1.msra.mxu0 0.0
      %874 = vmatprep.subr.mxu0 0.0
      %875 = vmatpush1.msra.mxu0 0.0
      %876 = vmatprep.subr.mxu0 0.0
      %877 = vmatpush1.msra.mxu0 0.0
      %878 = vmatprep.subr.mxu0 0.0
      %879 = vmatpush1.msra.mxu0 0.0
      %880 = vmatprep.subr.mxu0 0.0
      %881 = vmatpush1.msra.mxu0 0.0
      %882 = vmatprep.subr.mxu0 0.0
      %883 = vmatpush1.msra.mxu0 0.0
      %884 = vmatprep.subr.mxu0 0.0
      %885 = vmatpush1.msra.mxu0 0.0
      %886 = vmatprep.subr.mxu0 %v854
      %887 = vmatpush1.msra.mxu0 %v851
      %888 = vmatprep.subr.mxu0 0.0
      %889 = vmatpush2.msra.mxu0 0.0
      %890 = vmatprep.subr.mxu0 0.0
      %891 = vmatpush2.msra.mxu0 0.0
      %892 = vmatprep.subr.mxu0 0.0
      %893 = vmatpush2.msra.mxu0 0.0
      %894 = vmatprep.subr.mxu0 0.0
      %895 = vmatpush2.msra.mxu0 0.0
      %896 = vmatprep.subr.mxu0 0.0
      %897 = vmatpush2.msra.mxu0 0.0
      %898 = vmatprep.subr.mxu0 0.0
      %899 = vmatpush2.msra.mxu0 0.0
      %900 = vmatprep.subr.mxu0 0.0
      %901 = vmatpush2.msra.mxu0 0.0
      %902 = vmatprep.subr.mxu0 0.0
      %903 = vmatpush2.msra.mxu0 0.0
      %904 = vmatprep.subr.mxu0 0.0
      %905 = vmatpush2.msra.mxu0 0.0
      %906 = vmatprep.subr.mxu0 0.0
      %907 = vmatpush2.msra.mxu0 0.0
      %908 = vmatprep.subr.mxu0 0.0
      %909 = vmatpush2.msra.mxu0 0.0
      %910 = vmatprep.subr.mxu0 0.0
      %911 = vmatpush2.msra.mxu0 0.0
      %912 = vmatprep.subr.mxu0 0.0
      %913 = vmatpush2.msra.mxu0 0.0
      %914 = vmatprep.subr.mxu0 0.0
      %915 = vmatpush2.msra.mxu0 0.0
      %916 = vmatprep.subr.mxu0 0.0
      %917 = vmatpush2.msra.mxu0 0.0
      %918 = vmatprep.subr.mxu0 0.0
      %919 = vmatpush2.msra.mxu0 0.0
      %920 = vmatprep.mubr.f32.mxu0 0.0
      %921 = vmatmul.mubr.f32.gmra.mxu0 %v848
      %v922 = vpop.f32.mrf.mxu0
      %v923 = vadd.f32 0.0, %v922
      %v924 = vpop.f32.mrf.mxu0
      %v925 = vadd.f32 0.0, %v924
      %926 = vdwg.mxu0
      %v927 = vadd.f32 %v821, %v923
      %v928 = vadd.f32 %v822, %v925
      %s929 = scalar_lea.vmem %s2, 24
      %v930 = vld [vmem:[%s929] sm:$0xf]
      %931 = vrot.lane.b32.xlu0 %v279, 113
      %v932 = vpop.permute.xlu0 %931
      %933 = vrot.lane.b32.xlu0 %v285, 113
      %v934 = vpop.permute.xlu0 %933
      %vm935 = vcmp.lt.s32.totalorder %v292, 113
      %v936 = vsel %vm935, %v932, %v934
      %v937 = vsel %vm935, %v934, %v932
      %v938 = vadd.s32 %v280, 1
      %vm939 = vcmp.ge.s32.totalorder %v938, 0
      %vm940 = vcmp.lt.s32.totalorder %v938, 16
      %vm941 = vmand %vm939, %vm940
      %vm942 = vmand %vm941, %vm301
      %vm943 = vmand %vm942, %vm303
      %v944 = vsel %vm943, 1, 0
      %v945 = vlaneseq
      %v946 = vshrl.u32 %v945, 7
      %v947 = vsub.s32 0, %v946
      %v948 = vrot.slane %v944, %v947
      %v949 = vlaneseq
      %v950 = vshrl.u32 %v949, 7
      %v951 = vsub.s32 1, %v950
      %v952 = vrot.slane %v944, %v951
      %vm953 = vcmp.eq.s32.totalorder %v948, 1
      %vm954 = vcmp.eq.s32.totalorder %v952, 1
      %v955 = vsel %vm953, %v936, 0.0
      %v956 = vsel %vm954, %v937, 0.0
      %v958 = vsel %vm344, %v930, 0
      %v961 = vsel %vm348, %v955, 0
      %v964 = vsel %vm348, %v956, 0
      %966 = vmatprep.subr.mxu0 0.0
      %967 = vmatpush1.msra.mxu0 0.0
      %968 = vmatprep.subr.mxu0 0.0
      %969 = vmatpush1.msra.mxu0 0.0
      %970 = vmatprep.subr.mxu0 0.0
      %971 = vmatpush1.msra.mxu0 0.0
      %972 = vmatprep.subr.mxu0 0.0
      %973 = vmatpush1.msra.mxu0 0.0
      %974 = vmatprep.subr.mxu0 0.0
      %975 = vmatpush1.msra.mxu0 0.0
      %976 = vmatprep.subr.mxu0 0.0
      %977 = vmatpush1.msra.mxu0 0.0
      %978 = vmatprep.subr.mxu0 0.0
      %979 = vmatpush1.msra.mxu0 0.0
      %980 = vmatprep.subr.mxu0 0.0
      %981 = vmatpush1.msra.mxu0 0.0
      %982 = vmatprep.subr.mxu0 0.0
      %983 = vmatpush1.msra.mxu0 0.0
      %984 = vmatprep.subr.mxu0 0.0
      %985 = vmatpush1.msra.mxu0 0.0
      %986 = vmatprep.subr.mxu0 0.0
      %987 = vmatpush1.msra.mxu0 0.0
      %988 = vmatprep.subr.mxu0 0.0
      %989 = vmatpush1.msra.mxu0 0.0
      %990 = vmatprep.subr.mxu0 0.0
      %991 = vmatpush1.msra.mxu0 0.0
      %992 = vmatprep.subr.mxu0 0.0
      %993 = vmatpush1.msra.mxu0 0.0
      %994 = vmatprep.subr.mxu0 0.0
      %995 = vmatpush1.msra.mxu0 0.0
      %996 = vmatprep.subr.mxu0 %v964
      %997 = vmatpush1.msra.mxu0 %v961
      %998 = vmatprep.subr.mxu0 0.0
      %999 = vmatpush2.msra.mxu0 0.0
      %1000 = vmatprep.subr.mxu0 0.0
      %1001 = vmatpush2.msra.mxu0 0.0
      %1002 = vmatprep.subr.mxu0 0.0
      %1003 = vmatpush2.msra.mxu0 0.0
      %1004 = vmatprep.subr.mxu0 0.0
      %1005 = vmatpush2.msra.mxu0 0.0
      %1006 = vmatprep.subr.mxu0 0.0
      %1007 = vmatpush2.msra.mxu0 0.0
      %1008 = vmatprep.subr.mxu0 0.0
      %1009 = vmatpush2.msra.mxu0 0.0
      %1010 = vmatprep.subr.mxu0 0.0
      %1011 = vmatpush2.msra.mxu0 0.0
      %1012 = vmatprep.subr.mxu0 0.0
      %1013 = vmatpush2.msra.mxu0 0.0
      %1014 = vmatprep.subr.mxu0 0.0
      %1015 = vmatpush2.msra.mxu0 0.0
      %1016 = vmatprep.subr.mxu0 0.0
      %1017 = vmatpush2.msra.mxu0 0.0
      %1018 = vmatprep.subr.mxu0 0.0
      %1019 = vmatpush2.msra.mxu0 0.0
      %1020 = vmatprep.subr.mxu0 0.0
      %1021 = vmatpush2.msra.mxu0 0.0
      %1022 = vmatprep.subr.mxu0 0.0
      %1023 = vmatpush2.msra.mxu0 0.0
      %1024 = vmatprep.subr.mxu0 0.0
      %1025 = vmatpush2.msra.mxu0 0.0
      %1026 = vmatprep.subr.mxu0 0.0
      %1027 = vmatpush2.msra.mxu0 0.0
      %1028 = vmatprep.subr.mxu0 0.0
      %1029 = vmatpush2.msra.mxu0 0.0
      %1030 = vmatprep.mubr.f32.mxu0 0.0
      %1031 = vmatmul.mubr.f32.gmra.mxu0 %v958
      %v1032 = vpop.f32.mrf.mxu0
      %v1033 = vadd.f32 0.0, %v1032
      %v1034 = vpop.f32.mrf.mxu0
      %v1035 = vadd.f32 0.0, %v1034
      %1036 = vdwg.mxu0
      %v1037 = vadd.f32 %v927, %v1033
      %v1038 = vadd.f32 %v928, %v1035
      %s1039 = scalar_lea.vmem %s2, 28
      %v1040 = vld [vmem:[%s1039] sm:$0xf]
      %1041 = vrot.lane.b32.xlu0 %v279, 112
      %v1042 = vpop.permute.xlu0 %1041
      %1043 = vrot.lane.b32.xlu0 %v285, 112
      %v1044 = vpop.permute.xlu0 %1043
      %vm1045 = vcmp.lt.s32.totalorder %v292, 112
      %v1046 = vsel %vm1045, %v1042, %v1044
      %v1047 = vsel %vm1045, %v1044, %v1042
      %vm1048 = vmand %vm941, %vm327
      %vm1049 = vmand %vm1048, %vm329
      %v1050 = vsel %vm1049, 1, 0
      %v1051 = vlaneseq
      %v1052 = vshrl.u32 %v1051, 7
      %v1053 = vsub.s32 0, %v1052
      %v1054 = vrot.slane %v1050, %v1053
      %v1055 = vlaneseq
      %v1056 = vshrl.u32 %v1055, 7
      %v1057 = vsub.s32 1, %v1056
      %v1058 = vrot.slane %v1050, %v1057
      %vm1059 = vcmp.eq.s32.totalorder %v1054, 1
      %vm1060 = vcmp.eq.s32.totalorder %v1058, 1
      %v1061 = vsel %vm1059, %v1046, 0.0
      %v1062 = vsel %vm1060, %v1047, 0.0
      %v1064 = vsel %vm344, %v1040, 0
      %v1067 = vsel %vm348, %v1061, 0
      %v1070 = vsel %vm348, %v1062, 0
      %1072 = vmatprep.subr.mxu0 0.0
      %1073 = vmatpush1.msra.mxu0 0.0
      %1074 = vmatprep.subr.mxu0 0.0
      %1075 = vmatpush1.msra.mxu0 0.0
      %1076 = vmatprep.subr.mxu0 0.0
      %1077 = vmatpush1.msra.mxu0 0.0
      %1078 = vmatprep.subr.mxu0 0.0
      %1079 = vmatpush1.msra.mxu0 0.0
      %1080 = vmatprep.subr.mxu0 0.0
      %1081 = vmatpush1.msra.mxu0 0.0
      %1082 = vmatprep.subr.mxu0 0.0
      %1083 = vmatpush1.msra.mxu0 0.0
      %1084 = vmatprep.subr.mxu0 0.0
      %1085 = vmatpush1.msra.mxu0 0.0
      %1086 = vmatprep.subr.mxu0 0.0
      %1087 = vmatpush1.msra.mxu0 0.0
      %1088 = vmatprep.subr.mxu0 0.0
      %1089 = vmatpush1.msra.mxu0 0.0
      %1090 = vmatprep.subr.mxu0 0.0
      %1091 = vmatpush1.msra.mxu0 0.0
      %1092 = vmatprep.subr.mxu0 0.0
      %1093 = vmatpush1.msra.mxu0 0.0
      %1094 = vmatprep.subr.mxu0 0.0
      %1095 = vmatpush1.msra.mxu0 0.0
      %1096 = vmatprep.subr.mxu0 0.0
      %1097 = vmatpush1.msra.mxu0 0.0
      %1098 = vmatprep.subr.mxu0 0.0
      %1099 = vmatpush1.msra.mxu0 0.0
      %1100 = vmatprep.subr.mxu0 0.0
      %1101 = vmatpush1.msra.mxu0 0.0
      %1102 = vmatprep.subr.mxu0 %v1070
      %1103 = vmatpush1.msra.mxu0 %v1067
      %1104 = vmatprep.subr.mxu0 0.0
      %1105 = vmatpush2.msra.mxu0 0.0
      %1106 = vmatprep.subr.mxu0 0.0
      %1107 = vmatpush2.msra.mxu0 0.0
      %1108 = vmatprep.subr.mxu0 0.0
      %1109 = vmatpush2.msra.mxu0 0.0
      %1110 = vmatprep.subr.mxu0 0.0
      %1111 = vmatpush2.msra.mxu0 0.0
      %1112 = vmatprep.subr.mxu0 0.0
      %1113 = vmatpush2.msra.mxu0 0.0
      %1114 = vmatprep.subr.mxu0 0.0
      %1115 = vmatpush2.msra.mxu0 0.0
      %1116 = vmatprep.subr.mxu0 0.0
      %1117 = vmatpush2.msra.mxu0 0.0
      %1118 = vmatprep.subr.mxu0 0.0
      %1119 = vmatpush2.msra.mxu0 0.0
      %1120 = vmatprep.subr.mxu0 0.0
      %1121 = vmatpush2.msra.mxu0 0.0
      %1122 = vmatprep.subr.mxu0 0.0
      %1123 = vmatpush2.msra.mxu0 0.0
      %1124 = vmatprep.subr.mxu0 0.0
      %1125 = vmatpush2.msra.mxu0 0.0
      %1126 = vmatprep.subr.mxu0 0.0
      %1127 = vmatpush2.msra.mxu0 0.0
      %1128 = vmatprep.subr.mxu0 0.0
      %1129 = vmatpush2.msra.mxu0 0.0
      %1130 = vmatprep.subr.mxu0 0.0
      %1131 = vmatpush2.msra.mxu0 0.0
      %1132 = vmatprep.subr.mxu0 0.0
      %1133 = vmatpush2.msra.mxu0 0.0
      %1134 = vmatprep.subr.mxu0 0.0
      %1135 = vmatpush2.msra.mxu0 0.0
      %1136 = vmatprep.mubr.f32.mxu0 0.0
      %1137 = vmatmul.mubr.f32.gmra.mxu0 %v1064
      %v1138 = vpop.f32.mrf.mxu0
      %v1139 = vadd.f32 0.0, %v1138
      %v1140 = vpop.f32.mrf.mxu0
      %v1141 = vadd.f32 0.0, %v1140
      %1142 = vdwg.mxu0
      %v1143 = vadd.f32 %v1037, %v1139
      %v1144 = vadd.f32 %v1038, %v1141
      %s1145 = scalar_lea.vmem %s2, 32
      %v1146 = vld [vmem:[%s1145] sm:$0xf]
      %1147 = vrot.lane.b32.xlu0 %v279, 111
      %v1148 = vpop.permute.xlu0 %1147
      %1149 = vrot.lane.b32.xlu0 %v285, 111
      %v1150 = vpop.permute.xlu0 %1149
      %vm1151 = vcmp.lt.s32.totalorder %v292, 111
      %v1152 = vsel %vm1151, %v1148, %v1150
      %v1153 = vsel %vm1151, %v1150, %v1148
      %vm1154 = vmand %vm941, %vm516
      %vm1155 = vmand %vm1154, %vm518
      %v1156 = vsel %vm1155, 1, 0
      %v1157 = vlaneseq
      %v1158 = vshrl.u32 %v1157, 7
      %v1159 = vsub.s32 0, %v1158
      %v1160 = vrot.slane %v1156, %v1159
      %v1161 = vlaneseq
      %v1162 = vshrl.u32 %v1161, 7
      %v1163 = vsub.s32 1, %v1162
      %v1164 = vrot.slane %v1156, %v1163
      %vm1165 = vcmp.eq.s32.totalorder %v1160, 1
      %vm1166 = vcmp.eq.s32.totalorder %v1164, 1
      %v1167 = vsel %vm1165, %v1152, 0.0
      %v1168 = vsel %vm1166, %v1153, 0.0
      %v1170 = vsel %vm344, %v1146, 0
      %v1173 = vsel %vm348, %v1167, 0
      %v1176 = vsel %vm348, %v1168, 0
      %1178 = vmatprep.subr.mxu0 0.0
      %1179 = vmatpush1.msra.mxu0 0.0
      %1180 = vmatprep.subr.mxu0 0.0
      %1181 = vmatpush1.msra.mxu0 0.0
      %1182 = vmatprep.subr.mxu0 0.0
      %1183 = vmatpush1.msra.mxu0 0.0
      %1184 = vmatprep.subr.mxu0 0.0
      %1185 = vmatpush1.msra.mxu0 0.0
      %1186 = vmatprep.subr.mxu0 0.0
      %1187 = vmatpush1.msra.mxu0 0.0
      %1188 = vmatprep.subr.mxu0 0.0
      %1189 = vmatpush1.msra.mxu0 0.0
      %1190 = vmatprep.subr.mxu0 0.0
      %1191 = vmatpush1.msra.mxu0 0.0
      %1192 = vmatprep.subr.mxu0 0.0
      %1193 = vmatpush1.msra.mxu0 0.0
      %1194 = vmatprep.subr.mxu0 0.0
      %1195 = vmatpush1.msra.mxu0 0.0
      %1196 = vmatprep.subr.mxu0 0.0
      %1197 = vmatpush1.msra.mxu0 0.0
      %1198 = vmatprep.subr.mxu0 0.0
      %1199 = vmatpush1.msra.mxu0 0.0
      %1200 = vmatprep.subr.mxu0 0.0
      %1201 = vmatpush1.msra.mxu0 0.0
      %1202 = vmatprep.subr.mxu0 0.0
      %1203 = vmatpush1.msra.mxu0 0.0
      %1204 = vmatprep.subr.mxu0 0.0
      %1205 = vmatpush1.msra.mxu0 0.0
      %1206 = vmatprep.subr.mxu0 0.0
      %1207 = vmatpush1.msra.mxu0 0.0
      %1208 = vmatprep.subr.mxu0 %v1176
      %1209 = vmatpush1.msra.mxu0 %v1173
      %1210 = vmatprep.subr.mxu0 0.0
      %1211 = vmatpush2.msra.mxu0 0.0
      %1212 = vmatprep.subr.mxu0 0.0
      %1213 = vmatpush2.msra.mxu0 0.0
      %1214 = vmatprep.subr.mxu0 0.0
      %1215 = vmatpush2.msra.mxu0 0.0
      %1216 = vmatprep.subr.mxu0 0.0
      %1217 = vmatpush2.msra.mxu0 0.0
      %1218 = vmatprep.subr.mxu0 0.0
      %1219 = vmatpush2.msra.mxu0 0.0
      %1220 = vmatprep.subr.mxu0 0.0
      %1221 = vmatpush2.msra.mxu0 0.0
      %1222 = vmatprep.subr.mxu0 0.0
      %1223 = vmatpush2.msra.mxu0 0.0
      %1224 = vmatprep.subr.mxu0 0.0
      %1225 = vmatpush2.msra.mxu0 0.0
      %1226 = vmatprep.subr.mxu0 0.0
      %1227 = vmatpush2.msra.mxu0 0.0
      %1228 = vmatprep.subr.mxu0 0.0
      %1229 = vmatpush2.msra.mxu0 0.0
      %1230 = vmatprep.subr.mxu0 0.0
      %1231 = vmatpush2.msra.mxu0 0.0
      %1232 = vmatprep.subr.mxu0 0.0
      %1233 = vmatpush2.msra.mxu0 0.0
      %1234 = vmatprep.subr.mxu0 0.0
      %1235 = vmatpush2.msra.mxu0 0.0
      %1236 = vmatprep.subr.mxu0 0.0
      %1237 = vmatpush2.msra.mxu0 0.0
      %1238 = vmatprep.subr.mxu0 0.0
      %1239 = vmatpush2.msra.mxu0 0.0
      %1240 = vmatprep.subr.mxu0 0.0
      %1241 = vmatpush2.msra.mxu0 0.0
      %1242 = vmatprep.mubr.f32.mxu0 0.0
      %1243 = vmatmul.mubr.f32.gmra.mxu0 %v1170
      %v1244 = vpop.f32.mrf.mxu0
      %v1245 = vadd.f32 0.0, %v1244
      %v1246 = vpop.f32.mrf.mxu0
      %v1247 = vadd.f32 0.0, %v1246
      %1248 = vdwg.mxu0
      %v1249 = vadd.f32 %v1143, %v1245
      %v1250 = vadd.f32 %v1144, %v1247
      %v1251 = vld [vmem:[%s5] sm:$0xf]
      %1253 = vset.pattern.permute.xlu0 0
      %1254 = vperm.xlu0 %1253, %v1251
      %v1255 = vpop.permute.xlu0 %1254
      %v1257 = vmul.f32 %v1249, %v1255
      %v1258 = vmul.f32 %v1250, %v1255
      %v1259 = vld [vmem:[%s6] sm:$0xf]
      %1261 = vset.pattern.permute.xlu0 0
      %1262 = vperm.xlu0 %1261, %v1259
      %v1263 = vpop.permute.xlu0 %1262
      %v1265 = vadd.f32 %v1257, %v1263
      %v1266 = vadd.f32 %v1258, %v1263
      %v1267 = vmax.f32 %v1265, 0.0
      %v1268 = vmax.f32 %v1266, 0.0
      %v1269 = vld [vmem:[%s3] sm:$0xf]
      %1270 = vrot.lane.b32.xlu0 %v1267, 51
      %v1271 = vpop.permute.xlu0 %1270
      %1272 = vrot.lane.b32.xlu0 %v1268, 51
      %v1273 = vpop.permute.xlu0 %1272
      %vm1274 = vcmp.lt.s32.totalorder %v292, 51
      %v1275 = vsel %vm1274, %v1271, %v1273
      %v1276 = vsel %vm1274, %v1273, %v1271
      %v1277 = vadd.s32 %v280, 4294967293
      %vm1278 = vcmp.ge.s32.totalorder %v1277, 0
      %vm1279 = vcmp.lt.s32.totalorder %v1277, 16
      %vm1280 = vmand %vm1278, %vm1279
      %v1281 = vadd.s32 %v282, 4294967293
      %vm1282 = vcmp.ge.s32.totalorder %v1281, 0
      %vm1283 = vmand %vm1280, %vm1282
      %vm1284 = vcmp.lt.s32.totalorder %v1281, 16
      %vm1285 = vmand %vm1283, %vm1284
      %v1286 = vsel %vm1285, 1, 0
      %v1287 = vlaneseq
      %v1288 = vshrl.u32 %v1287, 7
      %v1289 = vsub.s32 0, %v1288
      %v1290 = vrot.slane %v1286, %v1289
      %v1291 = vlaneseq
      %v1292 = vshrl.u32 %v1291, 7
      %v1293 = vsub.s32 1, %v1292
      %v1294 = vrot.slane %v1286, %v1293
      %vm1295 = vcmp.eq.s32.totalorder %v1290, 1
      %vm1296 = vcmp.eq.s32.totalorder %v1294, 1
      %v1297 = vsel %vm1295, %v1276, 0.0
      %v1298 = vsel %vm1296, %v1275, 0.0
      %1300 = vset.pattern.permute.xlu0 0
      %1301 = vperm.xlu0 %1300, %v1269
      %v1302 = vpop.permute.xlu0 %1301
      %v1304 = vmul.f32 %v1302, %v1297
      %v1305 = vmul.f32 %v1302, %v1298
      %v1306 = vadd.f32 %v1304, 0.0
      %v1307 = vadd.f32 %v1305, 0.0
      %s1308 = scalar_lea.vmem %s3, 4
      %v1309 = vld [vmem:[%s1308] sm:$0xf]
      %1310 = vrot.lane.b32.xlu0 %v1267, 50
      %v1311 = vpop.permute.xlu0 %1310
      %1312 = vrot.lane.b32.xlu0 %v1268, 50
      %v1313 = vpop.permute.xlu0 %1312
      %vm1314 = vcmp.lt.s32.totalorder %v292, 50
      %v1315 = vsel %vm1314, %v1311, %v1313
      %v1316 = vsel %vm1314, %v1313, %v1311
      %v1317 = vadd.s32 %v282, 4294967294
      %vm1318 = vcmp.ge.s32.totalorder %v1317, 0
      %vm1319 = vmand %vm1280, %vm1318
      %vm1320 = vcmp.lt.s32.totalorder %v1317, 16
      %vm1321 = vmand %vm1319, %vm1320
      %v1322 = vsel %vm1321, 1, 0
      %v1323 = vlaneseq
      %v1324 = vshrl.u32 %v1323, 7
      %v1325 = vsub.s32 0, %v1324
      %v1326 = vrot.slane %v1322, %v1325
      %v1327 = vlaneseq
      %v1328 = vshrl.u32 %v1327, 7
      %v1329 = vsub.s32 1, %v1328
      %v1330 = vrot.slane %v1322, %v1329
      %vm1331 = vcmp.eq.s32.totalorder %v1326, 1
      %vm1332 = vcmp.eq.s32.totalorder %v1330, 1
      %v1333 = vsel %vm1331, %v1316, 0.0
      %v1334 = vsel %vm1332, %v1315, 0.0
      %1336 = vset.pattern.permute.xlu0 0
      %1337 = vperm.xlu0 %1336, %v1309
      %v1338 = vpop.permute.xlu0 %1337
      %v1340 = vmul.f32 %v1338, %v1333
      %v1341 = vmul.f32 %v1338, %v1334
      %v1342 = vadd.f32 %v1306, %v1340
      %v1343 = vadd.f32 %v1307, %v1341
      %s1344 = scalar_lea.vmem %s3, 8
      %v1345 = vld [vmem:[%s1344] sm:$0xf]
      %1346 = vrot.lane.b32.xlu0 %v1267, 49
      %v1347 = vpop.permute.xlu0 %1346
      %1348 = vrot.lane.b32.xlu0 %v1268, 49
      %v1349 = vpop.permute.xlu0 %1348
      %vm1350 = vcmp.lt.s32.totalorder %v292, 49
      %v1351 = vsel %vm1350, %v1347, %v1349
      %v1352 = vsel %vm1350, %v1349, %v1347
      %vm1353 = vmand %vm1280, %vm301
      %vm1354 = vmand %vm1353, %vm303
      %v1355 = vsel %vm1354, 1, 0
      %v1356 = vlaneseq
      %v1357 = vshrl.u32 %v1356, 7
      %v1358 = vsub.s32 0, %v1357
      %v1359 = vrot.slane %v1355, %v1358
      %v1360 = vlaneseq
      %v1361 = vshrl.u32 %v1360, 7
      %v1362 = vsub.s32 1, %v1361
      %v1363 = vrot.slane %v1355, %v1362
      %vm1364 = vcmp.eq.s32.totalorder %v1359, 1
      %vm1365 = vcmp.eq.s32.totalorder %v1363, 1
      %v1366 = vsel %vm1364, %v1352, 0.0
      %v1367 = vsel %vm1365, %v1351, 0.0
      %1369 = vset.pattern.permute.xlu0 0
      %1370 = vperm.xlu0 %1369, %v1345
      %v1371 = vpop.permute.xlu0 %1370
      %v1373 = vmul.f32 %v1371, %v1366
      %v1374 = vmul.f32 %v1371, %v1367
      %v1375 = vadd.f32 %v1342, %v1373
      %v1376 = vadd.f32 %v1343, %v1374
      %s1377 = scalar_lea.vmem %s3, 12
      %v1378 = vld [vmem:[%s1377] sm:$0xf]
      %1379 = vrot.lane.b32.xlu0 %v1267, 48
      %v1380 = vpop.permute.xlu0 %1379
      %1381 = vrot.lane.b32.xlu0 %v1268, 48
      %v1382 = vpop.permute.xlu0 %1381
      %vm1383 = vcmp.lt.s32.totalorder %v292, 48
      %v1384 = vsel %vm1383, %v1380, %v1382
      %v1385 = vsel %vm1383, %v1382, %v1380
      %vm1386 = vmand %vm1280, %vm327
      %vm1387 = vmand %vm1386, %vm329
      %v1388 = vsel %vm1387, 1, 0
      %v1389 = vlaneseq
      %v1390 = vshrl.u32 %v1389, 7
      %v1391 = vsub.s32 0, %v1390
      %v1392 = vrot.slane %v1388, %v1391
      %v1393 = vlaneseq
      %v1394 = vshrl.u32 %v1393, 7
      %v1395 = vsub.s32 1, %v1394
      %v1396 = vrot.slane %v1388, %v1395
      %vm1397 = vcmp.eq.s32.totalorder %v1392, 1
      %vm1398 = vcmp.eq.s32.totalorder %v1396, 1
      %v1399 = vsel %vm1397, %v1385, 0.0
      %v1400 = vsel %vm1398, %v1384, 0.0
      %1402 = vset.pattern.permute.xlu0 0
      %1403 = vperm.xlu0 %1402, %v1378
      %v1404 = vpop.permute.xlu0 %1403
      %v1406 = vmul.f32 %v1404, %v1399
      %v1407 = vmul.f32 %v1404, %v1400
      %v1408 = vadd.f32 %v1375, %v1406
      %v1409 = vadd.f32 %v1376, %v1407
      %s1410 = scalar_lea.vmem %s3, 16
      %v1411 = vld [vmem:[%s1410] sm:$0xf]
      %1412 = vrot.lane.b32.xlu0 %v1267, 47
      %v1413 = vpop.permute.xlu0 %1412
      %1414 = vrot.lane.b32.xlu0 %v1268, 47
      %v1415 = vpop.permute.xlu0 %1414
      %vm1416 = vcmp.lt.s32.totalorder %v292, 47
      %v1417 = vsel %vm1416, %v1413, %v1415
      %v1418 = vsel %vm1416, %v1415, %v1413
      %vm1419 = vmand %vm1280, %vm516
      %vm1420 = vmand %vm1419, %vm518
      %v1421 = vsel %vm1420, 1, 0
      %v1422 = vlaneseq
      %v1423 = vshrl.u32 %v1422, 7
      %v1424 = vsub.s32 0, %v1423
      %v1425 = vrot.slane %v1421, %v1424
      %v1426 = vlaneseq
      %v1427 = vshrl.u32 %v1426, 7
      %v1428 = vsub.s32 1, %v1427
      %v1429 = vrot.slane %v1421, %v1428
      %vm1430 = vcmp.eq.s32.totalorder %v1425, 1
      %vm1431 = vcmp.eq.s32.totalorder %v1429, 1
      %v1432 = vsel %vm1430, %v1418, 0.0
      %v1433 = vsel %vm1431, %v1417, 0.0
      %1435 = vset.pattern.permute.xlu0 0
      %1436 = vperm.xlu0 %1435, %v1411
      %v1437 = vpop.permute.xlu0 %1436
      %v1439 = vmul.f32 %v1437, %v1432
      %v1440 = vmul.f32 %v1437, %v1433
      %v1441 = vadd.f32 %v1408, %v1439
      %v1442 = vadd.f32 %v1409, %v1440
      %s1443 = scalar_lea.vmem %s3, 20
      %v1444 = vld [vmem:[%s1443] sm:$0xf]
      %1445 = vrot.lane.b32.xlu0 %v1267, 46
      %v1446 = vpop.permute.xlu0 %1445
      %1447 = vrot.lane.b32.xlu0 %v1268, 46
      %v1448 = vpop.permute.xlu0 %1447
      %vm1449 = vcmp.lt.s32.totalorder %v292, 46
      %v1450 = vsel %vm1449, %v1446, %v1448
      %v1451 = vsel %vm1449, %v1448, %v1446
      %v1452 = vadd.s32 %v282, 2
      %vm1453 = vcmp.ge.s32.totalorder %v1452, 0
      %vm1454 = vmand %vm1280, %vm1453
      %vm1455 = vcmp.lt.s32.totalorder %v1452, 16
      %vm1456 = vmand %vm1454, %vm1455
      %v1457 = vsel %vm1456, 1, 0
      %v1458 = vlaneseq
      %v1459 = vshrl.u32 %v1458, 7
      %v1460 = vsub.s32 0, %v1459
      %v1461 = vrot.slane %v1457, %v1460
      %v1462 = vlaneseq
      %v1463 = vshrl.u32 %v1462, 7
      %v1464 = vsub.s32 1, %v1463
      %v1465 = vrot.slane %v1457, %v1464
      %vm1466 = vcmp.eq.s32.totalorder %v1461, 1
      %vm1467 = vcmp.eq.s32.totalorder %v1465, 1
      %v1468 = vsel %vm1466, %v1451, 0.0
      %v1469 = vsel %vm1467, %v1450, 0.0
      %1471 = vset.pattern.permute.xlu0 0
      %1472 = vperm.xlu0 %1471, %v1444
      %v1473 = vpop.permute.xlu0 %1472
      %v1475 = vmul.f32 %v1473, %v1468
      %v1476 = vmul.f32 %v1473, %v1469
      %v1477 = vadd.f32 %v1441, %v1475
      %v1478 = vadd.f32 %v1442, %v1476
      %s1479 = scalar_lea.vmem %s3, 24
      %v1480 = vld [vmem:[%s1479] sm:$0xf]
      %1481 = vrot.lane.b32.xlu0 %v1267, 45
      %v1482 = vpop.permute.xlu0 %1481
      %1483 = vrot.lane.b32.xlu0 %v1268, 45
      %v1484 = vpop.permute.xlu0 %1483
      %vm1485 = vcmp.lt.s32.totalorder %v292, 45
      %v1486 = vsel %vm1485, %v1482, %v1484
      %v1487 = vsel %vm1485, %v1484, %v1482
      %v1488 = vadd.s32 %v282, 3
      %vm1489 = vcmp.ge.s32.totalorder %v1488, 0
      %vm1490 = vmand %vm1280, %vm1489
      %vm1491 = vcmp.lt.s32.totalorder %v1488, 16
      %vm1492 = vmand %vm1490, %vm1491
      %v1493 = vsel %vm1492, 1, 0
      %v1494 = vlaneseq
      %v1495 = vshrl.u32 %v1494, 7
      %v1496 = vsub.s32 0, %v1495
      %v1497 = vrot.slane %v1493, %v1496
      %v1498 = vlaneseq
      %v1499 = vshrl.u32 %v1498, 7
      %v1500 = vsub.s32 1, %v1499
      %v1501 = vrot.slane %v1493, %v1500
      %vm1502 = vcmp.eq.s32.totalorder %v1497, 1
      %vm1503 = vcmp.eq.s32.totalorder %v1501, 1
      %v1504 = vsel %vm1502, %v1487, 0.0
      %v1505 = vsel %vm1503, %v1486, 0.0
      %1507 = vset.pattern.permute.xlu0 0
      %1508 = vperm.xlu0 %1507, %v1480
      %v1509 = vpop.permute.xlu0 %1508
      %v1511 = vmul.f32 %v1509, %v1504
      %v1512 = vmul.f32 %v1509, %v1505
      %v1513 = vadd.f32 %v1477, %v1511
      %v1514 = vadd.f32 %v1478, %v1512
      %s1515 = scalar_lea.vmem %s3, 28
      %v1516 = vld [vmem:[%s1515] sm:$0xf]
      %1517 = vrot.lane.b32.xlu0 %v1267, 35
      %v1518 = vpop.permute.xlu0 %1517
      %1519 = vrot.lane.b32.xlu0 %v1268, 35
      %v1520 = vpop.permute.xlu0 %1519
      %vm1521 = vcmp.lt.s32.totalorder %v292, 35
      %v1522 = vsel %vm1521, %v1518, %v1520
      %v1523 = vsel %vm1521, %v1520, %v1518
      %v1524 = vadd.s32 %v280, 4294967294
      %vm1525 = vcmp.ge.s32.totalorder %v1524, 0
      %vm1526 = vcmp.lt.s32.totalorder %v1524, 16
      %vm1527 = vmand %vm1525, %vm1526
      %vm1528 = vmand %vm1527, %vm1282
      %vm1529 = vmand %vm1528, %vm1284
      %v1530 = vsel %vm1529, 1, 0
      %v1531 = vlaneseq
      %v1532 = vshrl.u32 %v1531, 7
      %v1533 = vsub.s32 0, %v1532
      %v1534 = vrot.slane %v1530, %v1533
      %v1535 = vlaneseq
      %v1536 = vshrl.u32 %v1535, 7
      %v1537 = vsub.s32 1, %v1536
      %v1538 = vrot.slane %v1530, %v1537
      %vm1539 = vcmp.eq.s32.totalorder %v1534, 1
      %vm1540 = vcmp.eq.s32.totalorder %v1538, 1
      %v1541 = vsel %vm1539, %v1523, 0.0
      %v1542 = vsel %vm1540, %v1522, 0.0
      %1544 = vset.pattern.permute.xlu0 0
      %1545 = vperm.xlu0 %1544, %v1516
      %v1546 = vpop.permute.xlu0 %1545
      %v1548 = vmul.f32 %v1546, %v1541
      %v1549 = vmul.f32 %v1546, %v1542
      %v1550 = vadd.f32 %v1513, %v1548
      %v1551 = vadd.f32 %v1514, %v1549
      %s1552 = scalar_lea.vmem %s3, 32
      %v1553 = vld [vmem:[%s1552] sm:$0xf]
      %1554 = vrot.lane.b32.xlu0 %v1267, 34
      %v1555 = vpop.permute.xlu0 %1554
      %1556 = vrot.lane.b32.xlu0 %v1268, 34
      %v1557 = vpop.permute.xlu0 %1556
      %vm1558 = vcmp.lt.s32.totalorder %v292, 34
      %v1559 = vsel %vm1558, %v1555, %v1557
      %v1560 = vsel %vm1558, %v1557, %v1555
      %vm1561 = vmand %vm1527, %vm1318
      %vm1562 = vmand %vm1561, %vm1320
      %v1563 = vsel %vm1562, 1, 0
      %v1564 = vlaneseq
      %v1565 = vshrl.u32 %v1564, 7
      %v1566 = vsub.s32 0, %v1565
      %v1567 = vrot.slane %v1563, %v1566
      %v1568 = vlaneseq
      %v1569 = vshrl.u32 %v1568, 7
      %v1570 = vsub.s32 1, %v1569
      %v1571 = vrot.slane %v1563, %v1570
      %vm1572 = vcmp.eq.s32.totalorder %v1567, 1
      %vm1573 = vcmp.eq.s32.totalorder %v1571, 1
      %v1574 = vsel %vm1572, %v1560, 0.0
      %v1575 = vsel %vm1573, %v1559, 0.0
      %1577 = vset.pattern.permute.xlu0 0
      %1578 = vperm.xlu0 %1577, %v1553
      %v1579 = vpop.permute.xlu0 %1578
      %v1581 = vmul.f32 %v1579, %v1574
      %v1582 = vmul.f32 %v1579, %v1575
      %v1583 = vadd.f32 %v1550, %v1581
      %v1584 = vadd.f32 %v1551, %v1582
      %s1585 = scalar_lea.vmem %s3, 36
      %v1586 = vld [vmem:[%s1585] sm:$0xf]
      %1587 = vrot.lane.b32.xlu0 %v1267, 33
      %v1588 = vpop.permute.xlu0 %1587
      %1589 = vrot.lane.b32.xlu0 %v1268, 33
      %v1590 = vpop.permute.xlu0 %1589
      %vm1591 = vcmp.lt.s32.totalorder %v292, 33
      %v1592 = vsel %vm1591, %v1588, %v1590
      %v1593 = vsel %vm1591, %v1590, %v1588
      %vm1594 = vmand %vm1527, %vm301
      %vm1595 = vmand %vm1594, %vm303
      %v1596 = vsel %vm1595, 1, 0
      %v1597 = vlaneseq
      %v1598 = vshrl.u32 %v1597, 7
      %v1599 = vsub.s32 0, %v1598
      %v1600 = vrot.slane %v1596, %v1599
      %v1601 = vlaneseq
      %v1602 = vshrl.u32 %v1601, 7
      %v1603 = vsub.s32 1, %v1602
      %v1604 = vrot.slane %v1596, %v1603
      %vm1605 = vcmp.eq.s32.totalorder %v1600, 1
      %vm1606 = vcmp.eq.s32.totalorder %v1604, 1
      %v1607 = vsel %vm1605, %v1593, 0.0
      %v1608 = vsel %vm1606, %v1592, 0.0
      %1610 = vset.pattern.permute.xlu0 0
      %1611 = vperm.xlu0 %1610, %v1586
      %v1612 = vpop.permute.xlu0 %1611
      %v1614 = vmul.f32 %v1612, %v1607
      %v1615 = vmul.f32 %v1612, %v1608
      %v1616 = vadd.f32 %v1583, %v1614
      %v1617 = vadd.f32 %v1584, %v1615
      %s1618 = scalar_lea.vmem %s3, 40
      %v1619 = vld [vmem:[%s1618] sm:$0xf]
      %1620 = vrot.lane.b32.xlu0 %v1267, 32
      %v1621 = vpop.permute.xlu0 %1620
      %1622 = vrot.lane.b32.xlu0 %v1268, 32
      %v1623 = vpop.permute.xlu0 %1622
      %vm1624 = vcmp.lt.s32.totalorder %v292, 32
      %v1625 = vsel %vm1624, %v1621, %v1623
      %v1626 = vsel %vm1624, %v1623, %v1621
      %vm1627 = vmand %vm1527, %vm327
      %vm1628 = vmand %vm1627, %vm329
      %v1629 = vsel %vm1628, 1, 0
      %v1630 = vlaneseq
      %v1631 = vshrl.u32 %v1630, 7
      %v1632 = vsub.s32 0, %v1631
      %v1633 = vrot.slane %v1629, %v1632
      %v1634 = vlaneseq
      %v1635 = vshrl.u32 %v1634, 7
      %v1636 = vsub.s32 1, %v1635
      %v1637 = vrot.slane %v1629, %v1636
      %vm1638 = vcmp.eq.s32.totalorder %v1633, 1
      %vm1639 = vcmp.eq.s32.totalorder %v1637, 1
      %v1640 = vsel %vm1638, %v1626, 0.0
      %v1641 = vsel %vm1639, %v1625, 0.0
      %1643 = vset.pattern.permute.xlu0 0
      %1644 = vperm.xlu0 %1643, %v1619
      %v1645 = vpop.permute.xlu0 %1644
      %v1647 = vmul.f32 %v1645, %v1640
      %v1648 = vmul.f32 %v1645, %v1641
      %v1649 = vadd.f32 %v1616, %v1647
      %v1650 = vadd.f32 %v1617, %v1648
      %s1651 = scalar_lea.vmem %s3, 44
      %v1652 = vld [vmem:[%s1651] sm:$0xf]
      %1653 = vrot.lane.b32.xlu0 %v1267, 31
      %v1654 = vpop.permute.xlu0 %1653
      %1655 = vrot.lane.b32.xlu0 %v1268, 31
      %v1656 = vpop.permute.xlu0 %1655
      %vm1657 = vcmp.lt.s32.totalorder %v292, 31
      %v1658 = vsel %vm1657, %v1654, %v1656
      %v1659 = vsel %vm1657, %v1656, %v1654
      %vm1660 = vmand %vm1527, %vm516
      %vm1661 = vmand %vm1660, %vm518
      %v1662 = vsel %vm1661, 1, 0
      %v1663 = vlaneseq
      %v1664 = vshrl.u32 %v1663, 7
      %v1665 = vsub.s32 0, %v1664
      %v1666 = vrot.slane %v1662, %v1665
      %v1667 = vlaneseq
      %v1668 = vshrl.u32 %v1667, 7
      %v1669 = vsub.s32 1, %v1668
      %v1670 = vrot.slane %v1662, %v1669
      %vm1671 = vcmp.eq.s32.totalorder %v1666, 1
      %vm1672 = vcmp.eq.s32.totalorder %v1670, 1
      %v1673 = vsel %vm1671, %v1659, 0.0
      %v1674 = vsel %vm1672, %v1658, 0.0
      %1676 = vset.pattern.permute.xlu0 0
      %1677 = vperm.xlu0 %1676, %v1652
      %v1678 = vpop.permute.xlu0 %1677
      %v1680 = vmul.f32 %v1678, %v1673
      %v1681 = vmul.f32 %v1678, %v1674
      %v1682 = vadd.f32 %v1649, %v1680
      %v1683 = vadd.f32 %v1650, %v1681
      %s1684 = scalar_lea.vmem %s3, 48
      %v1685 = vld [vmem:[%s1684] sm:$0xf]
      %1686 = vrot.lane.b32.xlu0 %v1267, 30
      %v1687 = vpop.permute.xlu0 %1686
      %1688 = vrot.lane.b32.xlu0 %v1268, 30
      %v1689 = vpop.permute.xlu0 %1688
      %vm1690 = vcmp.lt.s32.totalorder %v292, 30
      %v1691 = vsel %vm1690, %v1687, %v1689
      %v1692 = vsel %vm1690, %v1689, %v1687
      %vm1693 = vmand %vm1527, %vm1453
      %vm1694 = vmand %vm1693, %vm1455
      %v1695 = vsel %vm1694, 1, 0
      %v1696 = vlaneseq
      %v1697 = vshrl.u32 %v1696, 7
      %v1698 = vsub.s32 0, %v1697
      %v1699 = vrot.slane %v1695, %v1698
      %v1700 = vlaneseq
      %v1701 = vshrl.u32 %v1700, 7
      %v1702 = vsub.s32 1, %v1701
      %v1703 = vrot.slane %v1695, %v1702
      %vm1704 = vcmp.eq.s32.totalorder %v1699, 1
      %vm1705 = vcmp.eq.s32.totalorder %v1703, 1
      %v1706 = vsel %vm1704, %v1692, 0.0
      %v1707 = vsel %vm1705, %v1691, 0.0
      %1709 = vset.pattern.permute.xlu0 0
      %1710 = vperm.xlu0 %1709, %v1685
      %v1711 = vpop.permute.xlu0 %1710
      %v1713 = vmul.f32 %v1711, %v1706
      %v1714 = vmul.f32 %v1711, %v1707
      %v1715 = vadd.f32 %v1682, %v1713
      %v1716 = vadd.f32 %v1683, %v1714
      %s1717 = scalar_lea.vmem %s3, 52
      %v1718 = vld [vmem:[%s1717] sm:$0xf]
      %1719 = vrot.lane.b32.xlu0 %v1267, 29
      %v1720 = vpop.permute.xlu0 %1719
      %1721 = vrot.lane.b32.xlu0 %v1268, 29
      %v1722 = vpop.permute.xlu0 %1721
      %vm1723 = vcmp.lt.s32.totalorder %v292, 29
      %v1724 = vsel %vm1723, %v1720, %v1722
      %v1725 = vsel %vm1723, %v1722, %v1720
      %vm1726 = vmand %vm1527, %vm1489
      %vm1727 = vmand %vm1726, %vm1491
      %v1728 = vsel %vm1727, 1, 0
      %v1729 = vlaneseq
      %v1730 = vshrl.u32 %v1729, 7
      %v1731 = vsub.s32 0, %v1730
      %v1732 = vrot.slane %v1728, %v1731
      %v1733 = vlaneseq
      %v1734 = vshrl.u32 %v1733, 7
      %v1735 = vsub.s32 1, %v1734
      %v1736 = vrot.slane %v1728, %v1735
      %vm1737 = vcmp.eq.s32.totalorder %v1732, 1
      %vm1738 = vcmp.eq.s32.totalorder %v1736, 1
      %v1739 = vsel %vm1737, %v1725, 0.0
      %v1740 = vsel %vm1738, %v1724, 0.0
      %1742 = vset.pattern.permute.xlu0 0
      %1743 = vperm.xlu0 %1742, %v1718
      %v1744 = vpop.permute.xlu0 %1743
      %v1746 = vmul.f32 %v1744, %v1739
      %v1747 = vmul.f32 %v1744, %v1740
      %v1748 = vadd.f32 %v1715, %v1746
      %v1749 = vadd.f32 %v1716, %v1747
      %s1750 = scalar_lea.vmem %s3, 56
      %v1751 = vld [vmem:[%s1750] sm:$0xf]
      %1752 = vrot.lane.b32.xlu0 %v1267, 19
      %v1753 = vpop.permute.xlu0 %1752
      %1754 = vrot.lane.b32.xlu0 %v1268, 19
      %v1755 = vpop.permute.xlu0 %1754
      %vm1756 = vcmp.lt.s32.totalorder %v292, 19
      %v1757 = vsel %vm1756, %v1753, %v1755
      %v1758 = vsel %vm1756, %v1755, %v1753
      %vm1759 = vmand %vm299, %vm1282
      %vm1760 = vmand %vm1759, %vm1284
      %v1761 = vsel %vm1760, 1, 0
      %v1762 = vlaneseq
      %v1763 = vshrl.u32 %v1762, 7
      %v1764 = vsub.s32 0, %v1763
      %v1765 = vrot.slane %v1761, %v1764
      %v1766 = vlaneseq
      %v1767 = vshrl.u32 %v1766, 7
      %v1768 = vsub.s32 1, %v1767
      %v1769 = vrot.slane %v1761, %v1768
      %vm1770 = vcmp.eq.s32.totalorder %v1765, 1
      %vm1771 = vcmp.eq.s32.totalorder %v1769, 1
      %v1772 = vsel %vm1770, %v1758, 0.0
      %v1773 = vsel %vm1771, %v1757, 0.0
      %1775 = vset.pattern.permute.xlu0 0
      %1776 = vperm.xlu0 %1775, %v1751
      %v1777 = vpop.permute.xlu0 %1776
      %v1779 = vmul.f32 %v1777, %v1772
      %v1780 = vmul.f32 %v1777, %v1773
      %v1781 = vadd.f32 %v1748, %v1779
      %v1782 = vadd.f32 %v1749, %v1780
      %s1783 = scalar_lea.vmem %s3, 60
      %v1784 = vld [vmem:[%s1783] sm:$0xf]
      %1785 = vrot.lane.b32.xlu0 %v1267, 18
      %v1786 = vpop.permute.xlu0 %1785
      %1787 = vrot.lane.b32.xlu0 %v1268, 18
      %v1788 = vpop.permute.xlu0 %1787
      %vm1789 = vcmp.lt.s32.totalorder %v292, 18
      %v1790 = vsel %vm1789, %v1786, %v1788
      %v1791 = vsel %vm1789, %v1788, %v1786
      %vm1792 = vmand %vm299, %vm1318
      %vm1793 = vmand %vm1792, %vm1320
      %v1794 = vsel %vm1793, 1, 0
      %v1795 = vlaneseq
      %v1796 = vshrl.u32 %v1795, 7
      %v1797 = vsub.s32 0, %v1796
      %v1798 = vrot.slane %v1794, %v1797
      %v1799 = vlaneseq
      %v1800 = vshrl.u32 %v1799, 7
      %v1801 = vsub.s32 1, %v1800
      %v1802 = vrot.slane %v1794, %v1801
      %vm1803 = vcmp.eq.s32.totalorder %v1798, 1
      %vm1804 = vcmp.eq.s32.totalorder %v1802, 1
      %v1805 = vsel %vm1803, %v1791, 0.0
      %v1806 = vsel %vm1804, %v1790, 0.0
      %1808 = vset.pattern.permute.xlu0 0
      %1809 = vperm.xlu0 %1808, %v1784
      %v1810 = vpop.permute.xlu0 %1809
      %v1812 = vmul.f32 %v1810, %v1805
      %v1813 = vmul.f32 %v1810, %v1806
      %v1814 = vadd.f32 %v1781, %v1812
      %v1815 = vadd.f32 %v1782, %v1813
      %s1816 = scalar_lea.vmem %s3, 64
      %v1817 = vld [vmem:[%s1816] sm:$0xf]
      %1818 = vrot.lane.b32.xlu0 %v1267, 17
      %v1819 = vpop.permute.xlu0 %1818
      %1820 = vrot.lane.b32.xlu0 %v1268, 17
      %v1821 = vpop.permute.xlu0 %1820
      %v1822 = vsel %vm293, %v1819, %v1821
      %v1823 = vsel %vm293, %v1821, %v1819
      %v1824 = vsel %vm314, %v1823, 0.0
      %v1825 = vsel %vm315, %v1822, 0.0
      %1827 = vset.pattern.permute.xlu0 0
      %1828 = vperm.xlu0 %1827, %v1817
      %v1829 = vpop.permute.xlu0 %1828
      %v1831 = vmul.f32 %v1829, %v1824
      %v1832 = vmul.f32 %v1829, %v1825
      %v1833 = vadd.f32 %v1814, %v1831
      %v1834 = vadd.f32 %v1815, %v1832
      %s1835 = scalar_lea.vmem %s3, 68
      %v1836 = vld [vmem:[%s1835] sm:$0xf]
      %1837 = vrot.lane.b32.xlu0 %v1267, 16
      %v1838 = vpop.permute.xlu0 %1837
      %1839 = vrot.lane.b32.xlu0 %v1268, 16
      %v1840 = vpop.permute.xlu0 %1839
      %v1841 = vsel %vm324, %v1838, %v1840
      %v1842 = vsel %vm324, %v1840, %v1838
      %v1843 = vsel %vm340, %v1842, 0.0
      %v1844 = vsel %vm341, %v1841, 0.0
      %1846 = vset.pattern.permute.xlu0 0
      %1847 = vperm.xlu0 %1846, %v1836
      %v1848 = vpop.permute.xlu0 %1847
      %v1850 = vmul.f32 %v1848, %v1843
      %v1851 = vmul.f32 %v1848, %v1844
      %v1852 = vadd.f32 %v1833, %v1850
      %v1853 = vadd.f32 %v1834, %v1851
      %s1854 = scalar_lea.vmem %s3, 72
      %v1855 = vld [vmem:[%s1854] sm:$0xf]
      %1856 = vrot.lane.b32.xlu0 %v1267, 15
      %v1857 = vpop.permute.xlu0 %1856
      %1858 = vrot.lane.b32.xlu0 %v1268, 15
      %v1859 = vpop.permute.xlu0 %1858
      %v1860 = vsel %vm512, %v1857, %v1859
      %v1861 = vsel %vm512, %v1859, %v1857
      %v1862 = vsel %vm529, %v1861, 0.0
      %v1863 = vsel %vm530, %v1860, 0.0
      %1865 = vset.pattern.permute.xlu0 0
      %1866 = vperm.xlu0 %1865, %v1855
      %v1867 = vpop.permute.xlu0 %1866
      %v1869 = vmul.f32 %v1867, %v1862
      %v1870 = vmul.f32 %v1867, %v1863
      %v1871 = vadd.f32 %v1852, %v1869
      %v1872 = vadd.f32 %v1853, %v1870
      %s1873 = scalar_lea.vmem %s3, 76
      %v1874 = vld [vmem:[%s1873] sm:$0xf]
      %1875 = vrot.lane.b32.xlu0 %v1267, 14
      %v1876 = vpop.permute.xlu0 %1875
      %1877 = vrot.lane.b32.xlu0 %v1268, 14
      %v1878 = vpop.permute.xlu0 %1877
      %vm1879 = vcmp.lt.s32.totalorder %v292, 14
      %v1880 = vsel %vm1879, %v1876, %v1878
      %v1881 = vsel %vm1879, %v1878, %v1876
      %vm1882 = vmand %vm299, %vm1453
      %vm1883 = vmand %vm1882, %vm1455
      %v1884 = vsel %vm1883, 1, 0
      %v1885 = vlaneseq
      %v1886 = vshrl.u32 %v1885, 7
      %v1887 = vsub.s32 0, %v1886
      %v1888 = vrot.slane %v1884, %v1887
      %v1889 = vlaneseq
      %v1890 = vshrl.u32 %v1889, 7
      %v1891 = vsub.s32 1, %v1890
      %v1892 = vrot.slane %v1884, %v1891
      %vm1893 = vcmp.eq.s32.totalorder %v1888, 1
      %vm1894 = vcmp.eq.s32.totalorder %v1892, 1
      %v1895 = vsel %vm1893, %v1881, 0.0
      %v1896 = vsel %vm1894, %v1880, 0.0
      %1898 = vset.pattern.permute.xlu0 0
      %1899 = vperm.xlu0 %1898, %v1874
      %v1900 = vpop.permute.xlu0 %1899
      %v1902 = vmul.f32 %v1900, %v1895
      %v1903 = vmul.f32 %v1900, %v1896
      %v1904 = vadd.f32 %v1871, %v1902
      %v1905 = vadd.f32 %v1872, %v1903
      %s1906 = scalar_lea.vmem %s3, 80
      %v1907 = vld [vmem:[%s1906] sm:$0xf]
      %1908 = vrot.lane.b32.xlu0 %v1267, 13
      %v1909 = vpop.permute.xlu0 %1908
      %1910 = vrot.lane.b32.xlu0 %v1268, 13
      %v1911 = vpop.permute.xlu0 %1910
      %vm1912 = vcmp.lt.s32.totalorder %v292, 13
      %v1913 = vsel %vm1912, %v1909, %v1911
      %v1914 = vsel %vm1912, %v1911, %v1909
      %vm1915 = vmand %vm299, %vm1489
      %vm1916 = vmand %vm1915, %vm1491
      %v1917 = vsel %vm1916, 1, 0
      %v1918 = vlaneseq
      %v1919 = vshrl.u32 %v1918, 7
      %v1920 = vsub.s32 0, %v1919
      %v1921 = vrot.slane %v1917, %v1920
      %v1922 = vlaneseq
      %v1923 = vshrl.u32 %v1922, 7
      %v1924 = vsub.s32 1, %v1923
      %v1925 = vrot.slane %v1917, %v1924
      %vm1926 = vcmp.eq.s32.totalorder %v1921, 1
      %vm1927 = vcmp.eq.s32.totalorder %v1925, 1
      %v1928 = vsel %vm1926, %v1914, 0.0
      %v1929 = vsel %vm1927, %v1913, 0.0
      %1931 = vset.pattern.permute.xlu0 0
      %1932 = vperm.xlu0 %1931, %v1907
      %v1933 = vpop.permute.xlu0 %1932
      %v1935 = vmul.f32 %v1933, %v1928
      %v1936 = vmul.f32 %v1933, %v1929
      %v1937 = vadd.f32 %v1904, %v1935
      %v1938 = vadd.f32 %v1905, %v1936
      %s1939 = scalar_lea.vmem %s3, 84
      %v1940 = vld [vmem:[%s1939] sm:$0xf]
      %1941 = vrot.lane.b32.xlu0 %v1267, 3
      %v1942 = vpop.permute.xlu0 %1941
      %1943 = vrot.lane.b32.xlu0 %v1268, 3
      %v1944 = vpop.permute.xlu0 %1943
      %vm1945 = vcmp.lt.s32.totalorder %v292, 3
      %v1946 = vsel %vm1945, %v1942, %v1944
      %v1947 = vsel %vm1945, %v1944, %v1942
      %vm1948 = vmand %vm626, %vm1282
      %vm1949 = vmand %vm1948, %vm1284
      %v1950 = vsel %vm1949, 1, 0
      %v1951 = vlaneseq
      %v1952 = vshrl.u32 %v1951, 7
      %v1953 = vsub.s32 0, %v1952
      %v1954 = vrot.slane %v1950, %v1953
      %v1955 = vlaneseq
      %v1956 = vshrl.u32 %v1955, 7
      %v1957 = vsub.s32 1, %v1956
      %v1958 = vrot.slane %v1950, %v1957
      %vm1959 = vcmp.eq.s32.totalorder %v1954, 1
      %vm1960 = vcmp.eq.s32.totalorder %v1958, 1
      %v1961 = vsel %vm1959, %v1947, 0.0
      %v1962 = vsel %vm1960, %v1946, 0.0
      %1964 = vset.pattern.permute.xlu0 0
      %1965 = vperm.xlu0 %1964, %v1940
      %v1966 = vpop.permute.xlu0 %1965
      %v1968 = vmul.f32 %v1966, %v1961
      %v1969 = vmul.f32 %v1966, %v1962
      %v1970 = vadd.f32 %v1937, %v1968
      %v1971 = vadd.f32 %v1938, %v1969
      %s1972 = scalar_lea.vmem %s3, 88
      %v1973 = vld [vmem:[%s1972] sm:$0xf]
      %1974 = vrot.lane.b32.xlu0 %v1267, 2
      %v1975 = vpop.permute.xlu0 %1974
      %1976 = vrot.lane.b32.xlu0 %v1268, 2
      %v1977 = vpop.permute.xlu0 %1976
      %vm1978 = vcmp.lt.s32.totalorder %v292, 2
      %v1979 = vsel %vm1978, %v1975, %v1977
      %v1980 = vsel %vm1978, %v1977, %v1975
      %vm1981 = vmand %vm626, %vm1318
      %vm1982 = vmand %vm1981, %vm1320
      %v1983 = vsel %vm1982, 1, 0
      %v1984 = vlaneseq
      %v1985 = vshrl.u32 %v1984, 7
      %v1986 = vsub.s32 0, %v1985
      %v1987 = vrot.slane %v1983, %v1986
      %v1988 = vlaneseq
      %v1989 = vshrl.u32 %v1988, 7
      %v1990 = vsub.s32 1, %v1989
      %v1991 = vrot.slane %v1983, %v1990
      %vm1992 = vcmp.eq.s32.totalorder %v1987, 1
      %vm1993 = vcmp.eq.s32.totalorder %v1991, 1
      %v1994 = vsel %vm1992, %v1980, 0.0
      %v1995 = vsel %vm1993, %v1979, 0.0
      %1997 = vset.pattern.permute.xlu0 0
      %1998 = vperm.xlu0 %1997, %v1973
      %v1999 = vpop.permute.xlu0 %1998
      %v2001 = vmul.f32 %v1999, %v1994
      %v2002 = vmul.f32 %v1999, %v1995
      %v2003 = vadd.f32 %v1970, %v2001
      %v2004 = vadd.f32 %v1971, %v2002
      %s2005 = scalar_lea.vmem %s3, 92
      %v2006 = vld [vmem:[%s2005] sm:$0xf]
      %2007 = vrot.lane.b32.xlu0 %v1267, 1
      %v2008 = vpop.permute.xlu0 %2007
      %2009 = vrot.lane.b32.xlu0 %v1268, 1
      %v2010 = vpop.permute.xlu0 %2009
      %v2011 = vsel %vm621, %v2008, %v2010
      %v2012 = vsel %vm621, %v2010, %v2008
      %v2013 = vsel %vm638, %v2012, 0.0
      %v2014 = vsel %vm639, %v2011, 0.0
      %2016 = vset.pattern.permute.xlu0 0
      %2017 = vperm.xlu0 %2016, %v2006
      %v2018 = vpop.permute.xlu0 %2017
      %v2020 = vmul.f32 %v2018, %v2013
      %v2021 = vmul.f32 %v2018, %v2014
      %v2022 = vadd.f32 %v2003, %v2020
      %v2023 = vadd.f32 %v2004, %v2021
      %s2024 = scalar_lea.vmem %s3, 96
      %v2025 = vld [vmem:[%s2024] sm:$0xf]
      %v2026 = vsel %vm737, %v1267, 0.0
      %v2027 = vsel %vm738, %v1268, 0.0
      %2029 = vset.pattern.permute.xlu0 0
      %2030 = vperm.xlu0 %2029, %v2025
      %v2031 = vpop.permute.xlu0 %2030
      %v2033 = vmul.f32 %v2031, %v2026
      %v2034 = vmul.f32 %v2031, %v2027
      %v2035 = vadd.f32 %v2022, %v2033
      %v2036 = vadd.f32 %v2023, %v2034
      %s2037 = scalar_lea.vmem %s3, 100
      %v2038 = vld [vmem:[%s2037] sm:$0xf]
      %2039 = vrot.lane.b32.xlu0 %v1267, 127
      %v2040 = vpop.permute.xlu0 %2039
      %2041 = vrot.lane.b32.xlu0 %v1268, 127
      %v2042 = vpop.permute.xlu0 %2041
      %v2043 = vsel %vm829, %v2040, %v2042
      %v2044 = vsel %vm829, %v2042, %v2040
      %v2045 = vsel %vm843, %v2043, 0.0
      %v2046 = vsel %vm844, %v2044, 0.0
      %2048 = vset.pattern.permute.xlu0 0
      %2049 = vperm.xlu0 %2048, %v2038
      %v2050 = vpop.permute.xlu0 %2049
      %v2052 = vmul.f32 %v2050, %v2045
      %v2053 = vmul.f32 %v2050, %v2046
      %v2054 = vadd.f32 %v2035, %v2052
      %v2055 = vadd.f32 %v2036, %v2053
      %s2056 = scalar_lea.vmem %s3, 104
      %v2057 = vld [vmem:[%s2056] sm:$0xf]
      %2058 = vrot.lane.b32.xlu0 %v1267, 126
      %v2059 = vpop.permute.xlu0 %2058
      %2060 = vrot.lane.b32.xlu0 %v1268, 126
      %v2061 = vpop.permute.xlu0 %2060
      %vm2062 = vcmp.lt.s32.totalorder %v292, 126
      %v2063 = vsel %vm2062, %v2059, %v2061
      %v2064 = vsel %vm2062, %v2061, %v2059
      %vm2065 = vmand %vm626, %vm1453
      %vm2066 = vmand %vm2065, %vm1455
      %v2067 = vsel %vm2066, 1, 0
      %v2068 = vlaneseq
      %v2069 = vshrl.u32 %v2068, 7
      %v2070 = vsub.s32 0, %v2069
      %v2071 = vrot.slane %v2067, %v2070
      %v2072 = vlaneseq
      %v2073 = vshrl.u32 %v2072, 7
      %v2074 = vsub.s32 1, %v2073
      %v2075 = vrot.slane %v2067, %v2074
      %vm2076 = vcmp.eq.s32.totalorder %v2071, 1
      %vm2077 = vcmp.eq.s32.totalorder %v2075, 1
      %v2078 = vsel %vm2076, %v2063, 0.0
      %v2079 = vsel %vm2077, %v2064, 0.0
      %2081 = vset.pattern.permute.xlu0 0
      %2082 = vperm.xlu0 %2081, %v2057
      %v2083 = vpop.permute.xlu0 %2082
      %v2085 = vmul.f32 %v2083, %v2078
      %v2086 = vmul.f32 %v2083, %v2079
      %v2087 = vadd.f32 %v2054, %v2085
      %v2088 = vadd.f32 %v2055, %v2086
      %s2089 = scalar_lea.vmem %s3, 108
      %v2090 = vld [vmem:[%s2089] sm:$0xf]
      %2091 = vrot.lane.b32.xlu0 %v1267, 125
      %v2092 = vpop.permute.xlu0 %2091
      %2093 = vrot.lane.b32.xlu0 %v1268, 125
      %v2094 = vpop.permute.xlu0 %2093
      %vm2095 = vcmp.lt.s32.totalorder %v292, 125
      %v2096 = vsel %vm2095, %v2092, %v2094
      %v2097 = vsel %vm2095, %v2094, %v2092
      %vm2098 = vmand %vm626, %vm1489
      %vm2099 = vmand %vm2098, %vm1491
      %v2100 = vsel %vm2099, 1, 0
      %v2101 = vlaneseq
      %v2102 = vshrl.u32 %v2101, 7
      %v2103 = vsub.s32 0, %v2102
      %v2104 = vrot.slane %v2100, %v2103
      %v2105 = vlaneseq
      %v2106 = vshrl.u32 %v2105, 7
      %v2107 = vsub.s32 1, %v2106
      %v2108 = vrot.slane %v2100, %v2107
      %vm2109 = vcmp.eq.s32.totalorder %v2104, 1
      %vm2110 = vcmp.eq.s32.totalorder %v2108, 1
      %v2111 = vsel %vm2109, %v2096, 0.0
      %v2112 = vsel %vm2110, %v2097, 0.0
      %2114 = vset.pattern.permute.xlu0 0
      %2115 = vperm.xlu0 %2114, %v2090
      %v2116 = vpop.permute.xlu0 %2115
      %v2118 = vmul.f32 %v2116, %v2111
      %v2119 = vmul.f32 %v2116, %v2112
      %v2120 = vadd.f32 %v2087, %v2118
      %v2121 = vadd.f32 %v2088, %v2119
      %s2122 = scalar_lea.vmem %s3, 112
      %v2123 = vld [vmem:[%s2122] sm:$0xf]
      %2124 = vrot.lane.b32.xlu0 %v1267, 115
      %v2125 = vpop.permute.xlu0 %2124
      %2126 = vrot.lane.b32.xlu0 %v1268, 115
      %v2127 = vpop.permute.xlu0 %2126
      %vm2128 = vcmp.lt.s32.totalorder %v292, 115
      %v2129 = vsel %vm2128, %v2125, %v2127
      %v2130 = vsel %vm2128, %v2127, %v2125
      %vm2131 = vmand %vm941, %vm1282
      %vm2132 = vmand %vm2131, %vm1284
      %v2133 = vsel %vm2132, 1, 0
      %v2134 = vlaneseq
      %v2135 = vshrl.u32 %v2134, 7
      %v2136 = vsub.s32 0, %v2135
      %v2137 = vrot.slane %v2133, %v2136
      %v2138 = vlaneseq
      %v2139 = vshrl.u32 %v2138, 7
      %v2140 = vsub.s32 1, %v2139
      %v2141 = vrot.slane %v2133, %v2140
      %vm2142 = vcmp.eq.s32.totalorder %v2137, 1
      %vm2143 = vcmp.eq.s32.totalorder %v2141, 1
      %v2144 = vsel %vm2142, %v2129, 0.0
      %v2145 = vsel %vm2143, %v2130, 0.0
      %2147 = vset.pattern.permute.xlu0 0
      %2148 = vperm.xlu0 %2147, %v2123
      %v2149 = vpop.permute.xlu0 %2148
      %v2151 = vmul.f32 %v2149, %v2144
      %v2152 = vmul.f32 %v2149, %v2145
      %v2153 = vadd.f32 %v2120, %v2151
      %v2154 = vadd.f32 %v2121, %v2152
      %s2155 = scalar_lea.vmem %s3, 116
      %v2156 = vld [vmem:[%s2155] sm:$0xf]
      %2157 = vrot.lane.b32.xlu0 %v1267, 114
      %v2158 = vpop.permute.xlu0 %2157
      %2159 = vrot.lane.b32.xlu0 %v1268, 114
      %v2160 = vpop.permute.xlu0 %2159
      %vm2161 = vcmp.lt.s32.totalorder %v292, 114
      %v2162 = vsel %vm2161, %v2158, %v2160
      %v2163 = vsel %vm2161, %v2160, %v2158
      %vm2164 = vmand %vm941, %vm1318
      %vm2165 = vmand %vm2164, %vm1320
      %v2166 = vsel %vm2165, 1, 0
      %v2167 = vlaneseq
      %v2168 = vshrl.u32 %v2167, 7
      %v2169 = vsub.s32 0, %v2168
      %v2170 = vrot.slane %v2166, %v2169
      %v2171 = vlaneseq
      %v2172 = vshrl.u32 %v2171, 7
      %v2173 = vsub.s32 1, %v2172
      %v2174 = vrot.slane %v2166, %v2173
      %vm2175 = vcmp.eq.s32.totalorder %v2170, 1
      %vm2176 = vcmp.eq.s32.totalorder %v2174, 1
      %v2177 = vsel %vm2175, %v2162, 0.0
      %v2178 = vsel %vm2176, %v2163, 0.0
      %2180 = vset.pattern.permute.xlu0 0
      %2181 = vperm.xlu0 %2180, %v2156
      %v2182 = vpop.permute.xlu0 %2181
      %v2184 = vmul.f32 %v2182, %v2177
      %v2185 = vmul.f32 %v2182, %v2178
      %v2186 = vadd.f32 %v2153, %v2184
      %v2187 = vadd.f32 %v2154, %v2185
      %s2188 = scalar_lea.vmem %s3, 120
      %v2189 = vld [vmem:[%s2188] sm:$0xf]
      %2190 = vrot.lane.b32.xlu0 %v1267, 113
      %v2191 = vpop.permute.xlu0 %2190
      %2192 = vrot.lane.b32.xlu0 %v1268, 113
      %v2193 = vpop.permute.xlu0 %2192
      %v2194 = vsel %vm935, %v2191, %v2193
      %v2195 = vsel %vm935, %v2193, %v2191
      %v2196 = vsel %vm953, %v2194, 0.0
      %v2197 = vsel %vm954, %v2195, 0.0
      %2199 = vset.pattern.permute.xlu0 0
      %2200 = vperm.xlu0 %2199, %v2189
      %v2201 = vpop.permute.xlu0 %2200
      %v2203 = vmul.f32 %v2201, %v2196
      %v2204 = vmul.f32 %v2201, %v2197
      %v2205 = vadd.f32 %v2186, %v2203
      %v2206 = vadd.f32 %v2187, %v2204
      %s2207 = scalar_lea.vmem %s3, 124
      %v2208 = vld [vmem:[%s2207] sm:$0xf]
      %2209 = vrot.lane.b32.xlu0 %v1267, 112
      %v2210 = vpop.permute.xlu0 %2209
      %2211 = vrot.lane.b32.xlu0 %v1268, 112
      %v2212 = vpop.permute.xlu0 %2211
      %v2213 = vsel %vm1045, %v2210, %v2212
      %v2214 = vsel %vm1045, %v2212, %v2210
      %v2215 = vsel %vm1059, %v2213, 0.0
      %v2216 = vsel %vm1060, %v2214, 0.0
      %2218 = vset.pattern.permute.xlu0 0
      %2219 = vperm.xlu0 %2218, %v2208
      %v2220 = vpop.permute.xlu0 %2219
      %v2222 = vmul.f32 %v2220, %v2215
      %v2223 = vmul.f32 %v2220, %v2216
      %v2224 = vadd.f32 %v2205, %v2222
      %v2225 = vadd.f32 %v2206, %v2223
      %s2226 = scalar_lea.vmem %s3, 128
      %v2227 = vld [vmem:[%s2226] sm:$0xf]
      %2228 = vrot.lane.b32.xlu0 %v1267, 111
      %v2229 = vpop.permute.xlu0 %2228
      %2230 = vrot.lane.b32.xlu0 %v1268, 111
      %v2231 = vpop.permute.xlu0 %2230
      %v2232 = vsel %vm1151, %v2229, %v2231
      %v2233 = vsel %vm1151, %v2231, %v2229
      %v2234 = vsel %vm1165, %v2232, 0.0
      %v2235 = vsel %vm1166, %v2233, 0.0
      %2237 = vset.pattern.permute.xlu0 0
      %2238 = vperm.xlu0 %2237, %v2227
      %v2239 = vpop.permute.xlu0 %2238
      %v2241 = vmul.f32 %v2239, %v2234
      %v2242 = vmul.f32 %v2239, %v2235
      %v2243 = vadd.f32 %v2224, %v2241
      %v2244 = vadd.f32 %v2225, %v2242
      %s2245 = scalar_lea.vmem %s3, 132
      %v2246 = vld [vmem:[%s2245] sm:$0xf]
      %2247 = vrot.lane.b32.xlu0 %v1267, 110
      %v2248 = vpop.permute.xlu0 %2247
      %2249 = vrot.lane.b32.xlu0 %v1268, 110
      %v2250 = vpop.permute.xlu0 %2249
      %vm2251 = vcmp.lt.s32.totalorder %v292, 110
      %v2252 = vsel %vm2251, %v2248, %v2250
      %v2253 = vsel %vm2251, %v2250, %v2248
      %vm2254 = vmand %vm941, %vm1453
      %vm2255 = vmand %vm2254, %vm1455
      %v2256 = vsel %vm2255, 1, 0
      %v2257 = vlaneseq
      %v2258 = vshrl.u32 %v2257, 7
      %v2259 = vsub.s32 0, %v2258
      %v2260 = vrot.slane %v2256, %v2259
      %v2261 = vlaneseq
      %v2262 = vshrl.u32 %v2261, 7
      %v2263 = vsub.s32 1, %v2262
      %v2264 = vrot.slane %v2256, %v2263
      %vm2265 = vcmp.eq.s32.totalorder %v2260, 1
      %vm2266 = vcmp.eq.s32.totalorder %v2264, 1
      %v2267 = vsel %vm2265, %v2252, 0.0
      %v2268 = vsel %vm2266, %v2253, 0.0
      %2270 = vset.pattern.permute.xlu0 0
      %2271 = vperm.xlu0 %2270, %v2246
      %v2272 = vpop.permute.xlu0 %2271
      %v2274 = vmul.f32 %v2272, %v2267
      %v2275 = vmul.f32 %v2272, %v2268
      %v2276 = vadd.f32 %v2243, %v2274
      %v2277 = vadd.f32 %v2244, %v2275
      %s2278 = scalar_lea.vmem %s3, 136
      %v2279 = vld [vmem:[%s2278] sm:$0xf]
      %2280 = vrot.lane.b32.xlu0 %v1267, 109
      %v2281 = vpop.permute.xlu0 %2280
      %2282 = vrot.lane.b32.xlu0 %v1268, 109
      %v2283 = vpop.permute.xlu0 %2282
      %vm2284 = vcmp.lt.s32.totalorder %v292, 109
      %v2285 = vsel %vm2284, %v2281, %v2283
      %v2286 = vsel %vm2284, %v2283, %v2281
      %vm2287 = vmand %vm941, %vm1489
      %vm2288 = vmand %vm2287, %vm1491
      %v2289 = vsel %vm2288, 1, 0
      %v2290 = vlaneseq
      %v2291 = vshrl.u32 %v2290, 7
      %v2292 = vsub.s32 0, %v2291
      %v2293 = vrot.slane %v2289, %v2292
      %v2294 = vlaneseq
      %v2295 = vshrl.u32 %v2294, 7
      %v2296 = vsub.s32 1, %v2295
      %v2297 = vrot.slane %v2289, %v2296
      %vm2298 = vcmp.eq.s32.totalorder %v2293, 1
      %vm2299 = vcmp.eq.s32.totalorder %v2297, 1
      %v2300 = vsel %vm2298, %v2285, 0.0
      %v2301 = vsel %vm2299, %v2286, 0.0
      %2303 = vset.pattern.permute.xlu0 0
      %2304 = vperm.xlu0 %2303, %v2279
      %v2305 = vpop.permute.xlu0 %2304
      %v2307 = vmul.f32 %v2305, %v2300
      %v2308 = vmul.f32 %v2305, %v2301
      %v2309 = vadd.f32 %v2276, %v2307
      %v2310 = vadd.f32 %v2277, %v2308
      %s2311 = scalar_lea.vmem %s3, 140
      %v2312 = vld [vmem:[%s2311] sm:$0xf]
      %2313 = vrot.lane.b32.xlu0 %v1267, 99
      %v2314 = vpop.permute.xlu0 %2313
      %2315 = vrot.lane.b32.xlu0 %v1268, 99
      %v2316 = vpop.permute.xlu0 %2315
      %vm2317 = vcmp.lt.s32.totalorder %v292, 99
      %v2318 = vsel %vm2317, %v2314, %v2316
      %v2319 = vsel %vm2317, %v2316, %v2314
      %v2320 = vadd.s32 %v280, 2
      %vm2321 = vcmp.ge.s32.totalorder %v2320, 0
      %vm2322 = vcmp.lt.s32.totalorder %v2320, 16
      %vm2323 = vmand %vm2321, %vm2322
      %vm2324 = vmand %vm2323, %vm1282
      %vm2325 = vmand %vm2324, %vm1284
      %v2326 = vsel %vm2325, 1, 0
      %v2327 = vlaneseq
      %v2328 = vshrl.u32 %v2327, 7
      %v2329 = vsub.s32 0, %v2328
      %v2330 = vrot.slane %v2326, %v2329
      %v2331 = vlaneseq
      %v2332 = vshrl.u32 %v2331, 7
      %v2333 = vsub.s32 1, %v2332
      %v2334 = vrot.slane %v2326, %v2333
      %vm2335 = vcmp.eq.s32.totalorder %v2330, 1
      %vm2336 = vcmp.eq.s32.totalorder %v2334, 1
      %v2337 = vsel %vm2335, %v2318, 0.0
      %v2338 = vsel %vm2336, %v2319, 0.0
      %2340 = vset.pattern.permute.xlu0 0
      %2341 = vperm.xlu0 %2340, %v2312
      %v2342 = vpop.permute.xlu0 %2341
      %v2344 = vmul.f32 %v2342, %v2337
      %v2345 = vmul.f32 %v2342, %v2338
      %v2346 = vadd.f32 %v2309, %v2344
      %v2347 = vadd.f32 %v2310, %v2345
      %s2348 = scalar_lea.vmem %s3, 144
      %v2349 = vld [vmem:[%s2348] sm:$0xf]
      %2350 = vrot.lane.b32.xlu0 %v1267, 98
      %v2351 = vpop.permute.xlu0 %2350
      %2352 = vrot.lane.b32.xlu0 %v1268, 98
      %v2353 = vpop.permute.xlu0 %2352
      %vm2354 = vcmp.lt.s32.totalorder %v292, 98
      %v2355 = vsel %vm2354, %v2351, %v2353
      %v2356 = vsel %vm2354, %v2353, %v2351
      %vm2357 = vmand %vm2323, %vm1318
      %vm2358 = vmand %vm2357, %vm1320
      %v2359 = vsel %vm2358, 1, 0
      %v2360 = vlaneseq
      %v2361 = vshrl.u32 %v2360, 7
      %v2362 = vsub.s32 0, %v2361
      %v2363 = vrot.slane %v2359, %v2362
      %v2364 = vlaneseq
      %v2365 = vshrl.u32 %v2364, 7
      %v2366 = vsub.s32 1, %v2365
      %v2367 = vrot.slane %v2359, %v2366
      %vm2368 = vcmp.eq.s32.totalorder %v2363, 1
      %vm2369 = vcmp.eq.s32.totalorder %v2367, 1
      %v2370 = vsel %vm2368, %v2355, 0.0
      %v2371 = vsel %vm2369, %v2356, 0.0
      %2373 = vset.pattern.permute.xlu0 0
      %2374 = vperm.xlu0 %2373, %v2349
      %v2375 = vpop.permute.xlu0 %2374
      %v2377 = vmul.f32 %v2375, %v2370
      %v2378 = vmul.f32 %v2375, %v2371
      %v2379 = vadd.f32 %v2346, %v2377
      %v2380 = vadd.f32 %v2347, %v2378
      %s2381 = scalar_lea.vmem %s3, 148
      %v2382 = vld [vmem:[%s2381] sm:$0xf]
      %2383 = vrot.lane.b32.xlu0 %v1267, 97
      %v2384 = vpop.permute.xlu0 %2383
      %2385 = vrot.lane.b32.xlu0 %v1268, 97
      %v2386 = vpop.permute.xlu0 %2385
      %vm2387 = vcmp.lt.s32.totalorder %v292, 97
      %v2388 = vsel %vm2387, %v2384, %v2386
      %v2389 = vsel %vm2387, %v2386, %v2384
      %vm2390 = vmand %vm2323, %vm301
      %vm2391 = vmand %vm2390, %vm303
      %v2392 = vsel %vm2391, 1, 0
      %v2393 = vlaneseq
      %v2394 = vshrl.u32 %v2393, 7
      %v2395 = vsub.s32 0, %v2394
      %v2396 = vrot.slane %v2392, %v2395
      %v2397 = vlaneseq
      %v2398 = vshrl.u32 %v2397, 7
      %v2399 = vsub.s32 1, %v2398
      %v2400 = vrot.slane %v2392, %v2399
      %vm2401 = vcmp.eq.s32.totalorder %v2396, 1
      %vm2402 = vcmp.eq.s32.totalorder %v2400, 1
      %v2403 = vsel %vm2401, %v2388, 0.0
      %v2404 = vsel %vm2402, %v2389, 0.0
      %2406 = vset.pattern.permute.xlu0 0
      %2407 = vperm.xlu0 %2406, %v2382
      %v2408 = vpop.permute.xlu0 %2407
      %v2410 = vmul.f32 %v2408, %v2403
      %v2411 = vmul.f32 %v2408, %v2404
      %v2412 = vadd.f32 %v2379, %v2410
      %v2413 = vadd.f32 %v2380, %v2411
      %s2414 = scalar_lea.vmem %s3, 152
      %v2415 = vld [vmem:[%s2414] sm:$0xf]
      %2416 = vrot.lane.b32.xlu0 %v1267, 96
      %v2417 = vpop.permute.xlu0 %2416
      %2418 = vrot.lane.b32.xlu0 %v1268, 96
      %v2419 = vpop.permute.xlu0 %2418
      %vm2420 = vcmp.lt.s32.totalorder %v292, 96
      %v2421 = vsel %vm2420, %v2417, %v2419
      %v2422 = vsel %vm2420, %v2419, %v2417
      %vm2423 = vmand %vm2323, %vm327
      %vm2424 = vmand %vm2423, %vm329
      %v2425 = vsel %vm2424, 1, 0
      %v2426 = vlaneseq
      %v2427 = vshrl.u32 %v2426, 7
      %v2428 = vsub.s32 0, %v2427
      %v2429 = vrot.slane %v2425, %v2428
      %v2430 = vlaneseq
      %v2431 = vshrl.u32 %v2430, 7
      %v2432 = vsub.s32 1, %v2431
      %v2433 = vrot.slane %v2425, %v2432
      %vm2434 = vcmp.eq.s32.totalorder %v2429, 1
      %vm2435 = vcmp.eq.s32.totalorder %v2433, 1
      %v2436 = vsel %vm2434, %v2421, 0.0
      %v2437 = vsel %vm2435, %v2422, 0.0
      %2439 = vset.pattern.permute.xlu0 0
      %2440 = vperm.xlu0 %2439, %v2415
      %v2441 = vpop.permute.xlu0 %2440
      %v2443 = vmul.f32 %v2441, %v2436
      %v2444 = vmul.f32 %v2441, %v2437
      %v2445 = vadd.f32 %v2412, %v2443
      %v2446 = vadd.f32 %v2413, %v2444
      %s2447 = scalar_lea.vmem %s3, 156
      %v2448 = vld [vmem:[%s2447] sm:$0xf]
      %2449 = vrot.lane.b32.xlu0 %v1267, 95
      %v2450 = vpop.permute.xlu0 %2449
      %2451 = vrot.lane.b32.xlu0 %v1268, 95
      %v2452 = vpop.permute.xlu0 %2451
      %vm2453 = vcmp.lt.s32.totalorder %v292, 95
      %v2454 = vsel %vm2453, %v2450, %v2452
      %v2455 = vsel %vm2453, %v2452, %v2450
      %vm2456 = vmand %vm2323, %vm516
      %vm2457 = vmand %vm2456, %vm518
      %v2458 = vsel %vm2457, 1, 0
      %v2459 = vlaneseq
      %v2460 = vshrl.u32 %v2459, 7
      %v2461 = vsub.s32 0, %v2460
      %v2462 = vrot.slane %v2458, %v2461
      %v2463 = vlaneseq
      %v2464 = vshrl.u32 %v2463, 7
      %v2465 = vsub.s32 1, %v2464
      %v2466 = vrot.slane %v2458, %v2465
      %vm2467 = vcmp.eq.s32.totalorder %v2462, 1
      %vm2468 = vcmp.eq.s32.totalorder %v2466, 1
      %v2469 = vsel %vm2467, %v2454, 0.0
      %v2470 = vsel %vm2468, %v2455, 0.0
      %2472 = vset.pattern.permute.xlu0 0
      %2473 = vperm.xlu0 %2472, %v2448
      %v2474 = vpop.permute.xlu0 %2473
      %v2476 = vmul.f32 %v2474, %v2469
      %v2477 = vmul.f32 %v2474, %v2470
      %v2478 = vadd.f32 %v2445, %v2476
      %v2479 = vadd.f32 %v2446, %v2477
      %s2480 = scalar_lea.vmem %s3, 160
      %v2481 = vld [vmem:[%s2480] sm:$0xf]
      %2482 = vrot.lane.b32.xlu0 %v1267, 94
      %v2483 = vpop.permute.xlu0 %2482
      %2484 = vrot.lane.b32.xlu0 %v1268, 94
      %v2485 = vpop.permute.xlu0 %2484
      %vm2486 = vcmp.lt.s32.totalorder %v292, 94
      %v2487 = vsel %vm2486, %v2483, %v2485
      %v2488 = vsel %vm2486, %v2485, %v2483
      %vm2489 = vmand %vm2323, %vm1453
      %vm2490 = vmand %vm2489, %vm1455
      %v2491 = vsel %vm2490, 1, 0
      %v2492 = vlaneseq
      %v2493 = vshrl.u32 %v2492, 7
      %v2494 = vsub.s32 0, %v2493
      %v2495 = vrot.slane %v2491, %v2494
      %v2496 = vlaneseq
      %v2497 = vshrl.u32 %v2496, 7
      %v2498 = vsub.s32 1, %v2497
      %v2499 = vrot.slane %v2491, %v2498
      %vm2500 = vcmp.eq.s32.totalorder %v2495, 1
      %vm2501 = vcmp.eq.s32.totalorder %v2499, 1
      %v2502 = vsel %vm2500, %v2487, 0.0
      %v2503 = vsel %vm2501, %v2488, 0.0
      %2505 = vset.pattern.permute.xlu0 0
      %2506 = vperm.xlu0 %2505, %v2481
      %v2507 = vpop.permute.xlu0 %2506
      %v2509 = vmul.f32 %v2507, %v2502
      %v2510 = vmul.f32 %v2507, %v2503
      %v2511 = vadd.f32 %v2478, %v2509
      %v2512 = vadd.f32 %v2479, %v2510
      %s2513 = scalar_lea.vmem %s3, 164
      %v2514 = vld [vmem:[%s2513] sm:$0xf]
      %2515 = vrot.lane.b32.xlu0 %v1267, 93
      %v2516 = vpop.permute.xlu0 %2515
      %2517 = vrot.lane.b32.xlu0 %v1268, 93
      %v2518 = vpop.permute.xlu0 %2517
      %vm2519 = vcmp.lt.s32.totalorder %v292, 93
      %v2520 = vsel %vm2519, %v2516, %v2518
      %v2521 = vsel %vm2519, %v2518, %v2516
      %vm2522 = vmand %vm2323, %vm1489
      %vm2523 = vmand %vm2522, %vm1491
      %v2524 = vsel %vm2523, 1, 0
      %v2525 = vlaneseq
      %v2526 = vshrl.u32 %v2525, 7
      %v2527 = vsub.s32 0, %v2526
      %v2528 = vrot.slane %v2524, %v2527
      %v2529 = vlaneseq
      %v2530 = vshrl.u32 %v2529, 7
      %v2531 = vsub.s32 1, %v2530
      %v2532 = vrot.slane %v2524, %v2531
      %vm2533 = vcmp.eq.s32.totalorder %v2528, 1
      %vm2534 = vcmp.eq.s32.totalorder %v2532, 1
      %v2535 = vsel %vm2533, %v2520, 0.0
      %v2536 = vsel %vm2534, %v2521, 0.0
      %2538 = vset.pattern.permute.xlu0 0
      %2539 = vperm.xlu0 %2538, %v2514
      %v2540 = vpop.permute.xlu0 %2539
      %v2542 = vmul.f32 %v2540, %v2535
      %v2543 = vmul.f32 %v2540, %v2536
      %v2544 = vadd.f32 %v2511, %v2542
      %v2545 = vadd.f32 %v2512, %v2543
      %s2546 = scalar_lea.vmem %s3, 168
      %v2547 = vld [vmem:[%s2546] sm:$0xf]
      %2548 = vrot.lane.b32.xlu0 %v1267, 83
      %v2549 = vpop.permute.xlu0 %2548
      %2550 = vrot.lane.b32.xlu0 %v1268, 83
      %v2551 = vpop.permute.xlu0 %2550
      %vm2552 = vcmp.lt.s32.totalorder %v292, 83
      %v2553 = vsel %vm2552, %v2549, %v2551
      %v2554 = vsel %vm2552, %v2551, %v2549
      %v2555 = vadd.s32 %v280, 3
      %vm2556 = vcmp.ge.s32.totalorder %v2555, 0
      %vm2557 = vcmp.lt.s32.totalorder %v2555, 16
      %vm2558 = vmand %vm2556, %vm2557
      %vm2559 = vmand %vm2558, %vm1282
      %vm2560 = vmand %vm2559, %vm1284
      %v2561 = vsel %vm2560, 1, 0
      %v2562 = vlaneseq
      %v2563 = vshrl.u32 %v2562, 7
      %v2564 = vsub.s32 0, %v2563
      %v2565 = vrot.slane %v2561, %v2564
      %v2566 = vlaneseq
      %v2567 = vshrl.u32 %v2566, 7
      %v2568 = vsub.s32 1, %v2567
      %v2569 = vrot.slane %v2561, %v2568
      %vm2570 = vcmp.eq.s32.totalorder %v2565, 1
      %vm2571 = vcmp.eq.s32.totalorder %v2569, 1
      %v2572 = vsel %vm2570, %v2553, 0.0
      %v2573 = vsel %vm2571, %v2554, 0.0
      %2575 = vset.pattern.permute.xlu0 0
      %2576 = vperm.xlu0 %2575, %v2547
      %v2577 = vpop.permute.xlu0 %2576
      %v2579 = vmul.f32 %v2577, %v2572
      %v2580 = vmul.f32 %v2577, %v2573
      %v2581 = vadd.f32 %v2544, %v2579
      %v2582 = vadd.f32 %v2545, %v2580
      %s2583 = scalar_lea.vmem %s3, 172
      %v2584 = vld [vmem:[%s2583] sm:$0xf]
      %2585 = vrot.lane.b32.xlu0 %v1267, 82
      %v2586 = vpop.permute.xlu0 %2585
      %2587 = vrot.lane.b32.xlu0 %v1268, 82
      %v2588 = vpop.permute.xlu0 %2587
      %vm2589 = vcmp.lt.s32.totalorder %v292, 82
      %v2590 = vsel %vm2589, %v2586, %v2588
      %v2591 = vsel %vm2589, %v2588, %v2586
      %vm2592 = vmand %vm2558, %vm1318
      %vm2593 = vmand %vm2592, %vm1320
      %v2594 = vsel %vm2593, 1, 0
      %v2595 = vlaneseq
      %v2596 = vshrl.u32 %v2595, 7
      %v2597 = vsub.s32 0, %v2596
      %v2598 = vrot.slane %v2594, %v2597
      %v2599 = vlaneseq
      %v2600 = vshrl.u32 %v2599, 7
      %v2601 = vsub.s32 1, %v2600
      %v2602 = vrot.slane %v2594, %v2601
      %vm2603 = vcmp.eq.s32.totalorder %v2598, 1
      %vm2604 = vcmp.eq.s32.totalorder %v2602, 1
      %v2605 = vsel %vm2603, %v2590, 0.0
      %v2606 = vsel %vm2604, %v2591, 0.0
      %2608 = vset.pattern.permute.xlu0 0
      %2609 = vperm.xlu0 %2608, %v2584
      %v2610 = vpop.permute.xlu0 %2609
      %v2612 = vmul.f32 %v2610, %v2605
      %v2613 = vmul.f32 %v2610, %v2606
      %v2614 = vadd.f32 %v2581, %v2612
      %v2615 = vadd.f32 %v2582, %v2613
      %s2616 = scalar_lea.vmem %s3, 176
      %v2617 = vld [vmem:[%s2616] sm:$0xf]
      %2618 = vrot.lane.b32.xlu0 %v1267, 81
      %v2619 = vpop.permute.xlu0 %2618
      %2620 = vrot.lane.b32.xlu0 %v1268, 81
      %v2621 = vpop.permute.xlu0 %2620
      %vm2622 = vcmp.lt.s32.totalorder %v292, 81
      %v2623 = vsel %vm2622, %v2619, %v2621
      %v2624 = vsel %vm2622, %v2621, %v2619
      %vm2625 = vmand %vm2558, %vm301
      %vm2626 = vmand %vm2625, %vm303
      %v2627 = vsel %vm2626, 1, 0
      %v2628 = vlaneseq
      %v2629 = vshrl.u32 %v2628, 7
      %v2630 = vsub.s32 0, %v2629
      %v2631 = vrot.slane %v2627, %v2630
      %v2632 = vlaneseq
      %v2633 = vshrl.u32 %v2632, 7
      %v2634 = vsub.s32 1, %v2633
      %v2635 = vrot.slane %v2627, %v2634
      %vm2636 = vcmp.eq.s32.totalorder %v2631, 1
      %vm2637 = vcmp.eq.s32.totalorder %v2635, 1
      %v2638 = vsel %vm2636, %v2623, 0.0
      %v2639 = vsel %vm2637, %v2624, 0.0
      %2641 = vset.pattern.permute.xlu0 0
      %2642 = vperm.xlu0 %2641, %v2617
      %v2643 = vpop.permute.xlu0 %2642
      %v2645 = vmul.f32 %v2643, %v2638
      %v2646 = vmul.f32 %v2643, %v2639
      %v2647 = vadd.f32 %v2614, %v2645
      %v2648 = vadd.f32 %v2615, %v2646
      %s2649 = scalar_lea.vmem %s3, 180
      %v2650 = vld [vmem:[%s2649] sm:$0xf]
      %2651 = vrot.lane.b32.xlu0 %v1267, 80
      %v2652 = vpop.permute.xlu0 %2651
      %2653 = vrot.lane.b32.xlu0 %v1268, 80
      %v2654 = vpop.permute.xlu0 %2653
      %vm2655 = vcmp.lt.s32.totalorder %v292, 80
      %v2656 = vsel %vm2655, %v2652, %v2654
      %v2657 = vsel %vm2655, %v2654, %v2652
      %vm2658 = vmand %vm2558, %vm327
      %vm2659 = vmand %vm2658, %vm329
      %v2660 = vsel %vm2659, 1, 0
      %v2661 = vlaneseq
      %v2662 = vshrl.u32 %v2661, 7
      %v2663 = vsub.s32 0, %v2662
      %v2664 = vrot.slane %v2660, %v2663
      %v2665 = vlaneseq
      %v2666 = vshrl.u32 %v2665, 7
      %v2667 = vsub.s32 1, %v2666
      %v2668 = vrot.slane %v2660, %v2667
      %vm2669 = vcmp.eq.s32.totalorder %v2664, 1
      %vm2670 = vcmp.eq.s32.totalorder %v2668, 1
      %v2671 = vsel %vm2669, %v2656, 0.0
      %v2672 = vsel %vm2670, %v2657, 0.0
      %2674 = vset.pattern.permute.xlu0 0
      %2675 = vperm.xlu0 %2674, %v2650
      %v2676 = vpop.permute.xlu0 %2675
      %v2678 = vmul.f32 %v2676, %v2671
      %v2679 = vmul.f32 %v2676, %v2672
      %v2680 = vadd.f32 %v2647, %v2678
      %v2681 = vadd.f32 %v2648, %v2679
      %s2682 = scalar_lea.vmem %s3, 184
      %v2683 = vld [vmem:[%s2682] sm:$0xf]
      %2684 = vrot.lane.b32.xlu0 %v1267, 79
      %v2685 = vpop.permute.xlu0 %2684
      %2686 = vrot.lane.b32.xlu0 %v1268, 79
      %v2687 = vpop.permute.xlu0 %2686
      %vm2688 = vcmp.lt.s32.totalorder %v292, 79
      %v2689 = vsel %vm2688, %v2685, %v2687
      %v2690 = vsel %vm2688, %v2687, %v2685
      %vm2691 = vmand %vm2558, %vm516
      %vm2692 = vmand %vm2691, %vm518
      %v2693 = vsel %vm2692, 1, 0
      %v2694 = vlaneseq
      %v2695 = vshrl.u32 %v2694, 7
      %v2696 = vsub.s32 0, %v2695
      %v2697 = vrot.slane %v2693, %v2696
      %v2698 = vlaneseq
      %v2699 = vshrl.u32 %v2698, 7
      %v2700 = vsub.s32 1, %v2699
      %v2701 = vrot.slane %v2693, %v2700
      %vm2702 = vcmp.eq.s32.totalorder %v2697, 1
      %vm2703 = vcmp.eq.s32.totalorder %v2701, 1
      %v2704 = vsel %vm2702, %v2689, 0.0
      %v2705 = vsel %vm2703, %v2690, 0.0
      %2707 = vset.pattern.permute.xlu0 0
      %2708 = vperm.xlu0 %2707, %v2683
      %v2709 = vpop.permute.xlu0 %2708
      %v2711 = vmul.f32 %v2709, %v2704
      %v2712 = vmul.f32 %v2709, %v2705
      %v2713 = vadd.f32 %v2680, %v2711
      %v2714 = vadd.f32 %v2681, %v2712
      %s2715 = scalar_lea.vmem %s3, 188
      %v2716 = vld [vmem:[%s2715] sm:$0xf]
      %2717 = vrot.lane.b32.xlu0 %v1267, 78
      %v2718 = vpop.permute.xlu0 %2717
      %2719 = vrot.lane.b32.xlu0 %v1268, 78
      %v2720 = vpop.permute.xlu0 %2719
      %vm2721 = vcmp.lt.s32.totalorder %v292, 78
      %v2722 = vsel %vm2721, %v2718, %v2720
      %v2723 = vsel %vm2721, %v2720, %v2718
      %vm2724 = vmand %vm2558, %vm1453
      %vm2725 = vmand %vm2724, %vm1455
      %v2726 = vsel %vm2725, 1, 0
      %v2727 = vlaneseq
      %v2728 = vshrl.u32 %v2727, 7
      %v2729 = vsub.s32 0, %v2728
      %v2730 = vrot.slane %v2726, %v2729
      %v2731 = vlaneseq
      %v2732 = vshrl.u32 %v2731, 7
      %v2733 = vsub.s32 1, %v2732
      %v2734 = vrot.slane %v2726, %v2733
      %vm2735 = vcmp.eq.s32.totalorder %v2730, 1
      %vm2736 = vcmp.eq.s32.totalorder %v2734, 1
      %v2737 = vsel %vm2735, %v2722, 0.0
      %v2738 = vsel %vm2736, %v2723, 0.0
      %2740 = vset.pattern.permute.xlu0 0
      %2741 = vperm.xlu0 %2740, %v2716
      %v2742 = vpop.permute.xlu0 %2741
      %v2744 = vmul.f32 %v2742, %v2737
      %v2745 = vmul.f32 %v2742, %v2738
      %v2746 = vadd.f32 %v2713, %v2744
      %v2747 = vadd.f32 %v2714, %v2745
      %s2748 = scalar_lea.vmem %s3, 192
      %v2749 = vld [vmem:[%s2748] sm:$0xf]
      %2750 = vrot.lane.b32.xlu0 %v1267, 77
      %v2751 = vpop.permute.xlu0 %2750
      %2752 = vrot.lane.b32.xlu0 %v1268, 77
      %v2753 = vpop.permute.xlu0 %2752
      %vm2754 = vcmp.lt.s32.totalorder %v292, 77
      %v2755 = vsel %vm2754, %v2751, %v2753
      %v2756 = vsel %vm2754, %v2753, %v2751
      %vm2757 = vmand %vm2558, %vm1489
      %vm2758 = vmand %vm2757, %vm1491
      %v2759 = vsel %vm2758, 1, 0
      %v2760 = vlaneseq
      %v2761 = vshrl.u32 %v2760, 7
      %v2762 = vsub.s32 0, %v2761
      %v2763 = vrot.slane %v2759, %v2762
      %v2764 = vlaneseq
      %v2765 = vshrl.u32 %v2764, 7
      %v2766 = vsub.s32 1, %v2765
      %v2767 = vrot.slane %v2759, %v2766
      %vm2768 = vcmp.eq.s32.totalorder %v2763, 1
      %vm2769 = vcmp.eq.s32.totalorder %v2767, 1
      %v2770 = vsel %vm2768, %v2755, 0.0
      %v2771 = vsel %vm2769, %v2756, 0.0
      %2773 = vset.pattern.permute.xlu0 0
      %2774 = vperm.xlu0 %2773, %v2749
      %v2775 = vpop.permute.xlu0 %2774
      %v2777 = vmul.f32 %v2775, %v2770
      %v2778 = vmul.f32 %v2775, %v2771
      %v2779 = vadd.f32 %v2746, %v2777
      %v2780 = vadd.f32 %v2747, %v2778
      %s2781 = scalar_lea.vmem %s5, 4
      %v2782 = vld [vmem:[%s2781] sm:$0xf]
      %2784 = vset.pattern.permute.xlu0 0
      %2785 = vperm.xlu0 %2784, %v2782
      %v2786 = vpop.permute.xlu0 %2785
      %v2788 = vmul.f32 %v2779, %v2786
      %v2789 = vmul.f32 %v2780, %v2786
      %s2790 = scalar_lea.vmem %s6, 4
      %v2791 = vld [vmem:[%s2790] sm:$0xf]
      %2793 = vset.pattern.permute.xlu0 0
      %2794 = vperm.xlu0 %2793, %v2791
      %v2795 = vpop.permute.xlu0 %2794
      %v2797 = vadd.f32 %v2788, %v2795
      %v2798 = vadd.f32 %v2789, %v2795
      %v2799 = vmax.f32 %v2797, 0.0
      %v2800 = vmax.f32 %v2798, 0.0
      %v2801 = vadd.f32 %v2799, %v1267
      %v2802 = vadd.f32 %v2800, %v1268
      %v2803 = vld [vmem:[%s4] sm:$0xf]
      %v2805 = vsel %vm344, %v2803, 0
      %v2808 = vsel %vm348, %v2801, 0
      %v2811 = vsel %vm348, %v2802, 0
      %2813 = vmatprep.subr.mxu0 0.0
      %2814 = vmatpush1.msra.mxu0 0.0
      %2815 = vmatprep.subr.mxu0 0.0
      %2816 = vmatpush1.msra.mxu0 0.0
      %2817 = vmatprep.subr.mxu0 0.0
      %2818 = vmatpush1.msra.mxu0 0.0
      %2819 = vmatprep.subr.mxu0 0.0
      %2820 = vmatpush1.msra.mxu0 0.0
      %2821 = vmatprep.subr.mxu0 0.0
      %2822 = vmatpush1.msra.mxu0 0.0
      %2823 = vmatprep.subr.mxu0 0.0
      %2824 = vmatpush1.msra.mxu0 0.0
      %2825 = vmatprep.subr.mxu0 0.0
      %2826 = vmatpush1.msra.mxu0 0.0
      %2827 = vmatprep.subr.mxu0 0.0
      %2828 = vmatpush1.msra.mxu0 0.0
      %2829 = vmatprep.subr.mxu0 0.0
      %2830 = vmatpush1.msra.mxu0 0.0
      %2831 = vmatprep.subr.mxu0 0.0
      %2832 = vmatpush1.msra.mxu0 0.0
      %2833 = vmatprep.subr.mxu0 0.0
      %2834 = vmatpush1.msra.mxu0 0.0
      %2835 = vmatprep.subr.mxu0 0.0
      %2836 = vmatpush1.msra.mxu0 0.0
      %2837 = vmatprep.subr.mxu0 0.0
      %2838 = vmatpush1.msra.mxu0 0.0
      %2839 = vmatprep.subr.mxu0 0.0
      %2840 = vmatpush1.msra.mxu0 0.0
      %2841 = vmatprep.subr.mxu0 0.0
      %2842 = vmatpush1.msra.mxu0 0.0
      %2843 = vmatprep.subr.mxu0 %v2811
      %2844 = vmatpush1.msra.mxu0 %v2808
      %2845 = vmatprep.subr.mxu0 0.0
      %2846 = vmatpush2.msra.mxu0 0.0
      %2847 = vmatprep.subr.mxu0 0.0
      %2848 = vmatpush2.msra.mxu0 0.0
      %2849 = vmatprep.subr.mxu0 0.0
      %2850 = vmatpush2.msra.mxu0 0.0
      %2851 = vmatprep.subr.mxu0 0.0
      %2852 = vmatpush2.msra.mxu0 0.0
      %2853 = vmatprep.subr.mxu0 0.0
      %2854 = vmatpush2.msra.mxu0 0.0
      %2855 = vmatprep.subr.mxu0 0.0
      %2856 = vmatpush2.msra.mxu0 0.0
      %2857 = vmatprep.subr.mxu0 0.0
      %2858 = vmatpush2.msra.mxu0 0.0
      %2859 = vmatprep.subr.mxu0 0.0
      %2860 = vmatpush2.msra.mxu0 0.0
      %2861 = vmatprep.subr.mxu0 0.0
      %2862 = vmatpush2.msra.mxu0 0.0
      %2863 = vmatprep.subr.mxu0 0.0
      %2864 = vmatpush2.msra.mxu0 0.0
      %2865 = vmatprep.subr.mxu0 0.0
      %2866 = vmatpush2.msra.mxu0 0.0
      %2867 = vmatprep.subr.mxu0 0.0
      %2868 = vmatpush2.msra.mxu0 0.0
      %2869 = vmatprep.subr.mxu0 0.0
      %2870 = vmatpush2.msra.mxu0 0.0
      %2871 = vmatprep.subr.mxu0 0.0
      %2872 = vmatpush2.msra.mxu0 0.0
      %2873 = vmatprep.subr.mxu0 0.0
      %2874 = vmatpush2.msra.mxu0 0.0
      %2875 = vmatprep.subr.mxu0 0.0
      %2876 = vmatpush2.msra.mxu0 0.0
      %2877 = vmatprep.mubr.f32.mxu0 0.0
      %2878 = vmatmul.mubr.f32.gmra.mxu0 %v2805
      %v2879 = vpop.f32.mrf.mxu0
      %v2880 = vadd.f32 0.0, %v2879
      %v2881 = vpop.f32.mrf.mxu0
      %v2882 = vadd.f32 0.0, %v2881
      %2883 = vdwg.mxu0
      %s2884 = scalar_lea.vmem %s5, 8
      %v2885 = vld [vmem:[%s2884] sm:$0xf]
      %2887 = vset.pattern.permute.xlu0 0
      %2888 = vperm.xlu0 %2887, %v2885
      %v2889 = vpop.permute.xlu0 %2888
      %v2891 = vmul.f32 %v2880, %v2889
      %v2892 = vmul.f32 %v2882, %v2889
      %s2893 = scalar_lea.vmem %s6, 8
      %v2894 = vld [vmem:[%s2893] sm:$0xf]
      %2896 = vset.pattern.permute.xlu0 0
      %2897 = vperm.xlu0 %2896, %v2894
      %v2898 = vpop.permute.xlu0 %2897
      %v2900 = vadd.f32 %v2891, %v2898
      %v2901 = vadd.f32 %v2892, %v2898
      %v2902 = vmax.f32 %v2900, 0.0
      %v2903 = vmax.f32 %v2901, 0.0
      %v2904 = vadd.f32 %v2902, %v279
      %v2905 = vadd.f32 %v2903, %v285
      %v2908 = vcombine.low %v2904, %v2905
      %2910 = vst [vmem:[%s278] sm:$0xff] %v2908
      %p2911 = scmp.lt.s32.totalorder %s18, 1
      %s2912 = scalar_select %p2911, %s18, 1
      %s2913 = smul.addr %s2912, 2
      %s2914 = smul.addr %s2913, 4
      %s2915 = scalar_lea.vmem %s7, %s2914
      // Predicated region
      $region49: #{mixer_decoder_forward.1} parent=47 // pred_check
        %p2916 = pneg %p188
      $region50: #{mixer_decoder_forward.1} parent=47 // pred_check_branch
        %2918 = sbr.rel (%p2916) target = $region52
      $region51: #{mixer_decoder_forward.1} parent=47 // pred_region
        _
      $region52: #{mixer_decoder_forward.1} parent=47 // pred_fallthru
        _
    $region48: #{mixer_decoder_forward.1} parent=5 // pred_fallthru
      _
    %p2919 = scmp.le.s32.totalorder 2, %s13
    // Predicated region
    $region53: #{mixer_decoder_forward.1} parent=5 // pred_check
      %p2920 = pneg %p2919
    $region54: #{mixer_decoder_forward.1} parent=5 // pred_check_branch
      %2922 = sbr.rel (%p2920) target = $region56
    $region55: #{mixer_decoder_forward.1} parent=5 // pred_region
      %s2923 = ssub.s32 %s13, 2
      // Predicated region
      $region57: #{mixer_decoder_forward.1} parent=55 // pred_check
        %p2924 = pneg %p194
      $region58: #{mixer_decoder_forward.1} parent=55 // pred_check_branch
        %2926 = sbr.rel (%p2924) target = $region60
      $region59: #{mixer_decoder_forward.1} parent=55 // pred_region
        %p2927 = scmp.lt.s32.totalorder %s19, 1
        %s2928 = scalar_select %p2927, %s19, 1
        %s2929 = smul.addr %s2928, 2
        %s2930 = smul.addr %s2929, 4
        %s2931 = scalar_lea.vmem %s7, %s2930
      $region60: #{mixer_decoder_forward.1} parent=55 // pred_fallthru
        _
    $region56: #{mixer_decoder_forward.1} parent=5 // pred_fallthru
      _
  $region6: #{mixer_decoder_forward.1} parent=0 // loop_footer
    %s17 = sadd.s32 1, %s13
  $region7: #{mixer_decoder_forward.1} parent=0 // loop_footer_branch
    %12 = sbr.rel target = $region3
  $region8: #{mixer_decoder_forward.1} parent=0 // loop_exit
    _

</llo_original>
